<compile_context>
chip_gen: v7x
topology: tpu7x:2x2x1
jax: 0.10.0
libtpu: 0.0.40
codegen_flags: <defaults>
</compile_context>

<pallas_src>
import functools

import jax
import jax.numpy as jnp
from jax.experimental import pallas as pl
from jax.experimental.pallas import tpu as pltpu


def decoder_kernel(x_ref, encT_ref, encC_ref, pos_ref,
                   w_in2hid_ref, b_in2hid_ref,
                   w_conv_lin_ref, w_conv_gate_ref,
                   b_conv_lin_ref, b_conv_gate_ref,
                   w_ah2i_ref, b_ah2i_ref,
                   w_ai2h_ref, b_ai2h_ref,
                   w_hid2in_ref, b_hid2in_ref,
                   w_fc_ref, b_fc_ref,
                   *refs,
                   kernel_size, pad_rows, compute_dtype, use_slab):
    if use_slab:
        slab_ref = refs[0]
        xemb_buf, pad_buf = refs[1], refs[2]
    else:
        out_ref, attn_ref = refs[0], refs[1]
        xemb_buf, pad_buf = refs[2], refs[3]

    Bb, T, D = x_ref.shape
    H = w_in2hid_ref.shape[1]
    K = kernel_size
    S = encC_ref.shape[1]
    BT = Bb * T

    l = pl.program_id(1)
    n_l = pl.num_programs(1)

    def mm(a, b):
        return jnp.dot(a.astype(compute_dtype), b.astype(compute_dtype),
                       preferred_element_type=jnp.float32)

    def bmm(eq, a, b):
        return jnp.einsum(eq, a.astype(compute_dtype), b.astype(compute_dtype),
                          preferred_element_type=jnp.float32)

    # ---- prologue (once per batch block): embedding + in2hid -------------
    @pl.when(l == 0)
    def _():
        # pos = arange(T) -> add the first T rows of the positional table.
        x_emb0 = x_ref[...] + pos_ref[...][None]                   # [Bb,T,D]
        xemb_buf[...] = x_emb0
        conv0 = mm(x_emb0.reshape(BT, D), w_in2hid_ref[...]) + b_in2hid_ref[...]
        if pad_rows > 0:   # causal zero left-pad, sublane-aligned, written once
            pad_buf[:, pl.ds(0, pad_rows), :] = jnp.zeros(
                (Bb, pad_rows, H), jnp.float32)
        pad_buf[:, pl.ds(pad_rows, T), :] = conv0.reshape(Bb, T, H)

    x_emb = xemb_buf[...]                                          # [Bb,T,D]
    conv_input = pad_buf[:, pl.ds(pad_rows, T), :].reshape(BT, H)  # [BT,H]

    # ---- causal conv: K accumulated per-tap matmuls (no [BT,K*H] temp) ---
    tap0 = pad_buf[:, pl.ds(pad_rows - (K - 1), T), :].reshape(BT, H)
    lin = mm(tap0, w_conv_lin_ref[0, 0])
    gate = mm(tap0, w_conv_gate_ref[0, 0])
    for k in range(1, K):
        tap = pad_buf[:, pl.ds(pad_rows - (K - 1) + k, T), :].reshape(BT, H)
        lin = lin + mm(tap, w_conv_lin_ref[0, k])
        gate = gate + mm(tap, w_conv_gate_ref[0, k])
    lin = lin + b_conv_lin_ref[0]
    gate = gate + b_conv_gate_ref[0]
    glu = lin * jax.nn.sigmoid(gate)                               # [BT,H]

    # ---- attention -------------------------------------------------------
    conved_emb = mm(glu, w_ah2i_ref[...]) + b_ah2i_ref[...]        # [BT,D]
    combined = (conved_emb.reshape(Bb, T, D) + x_emb) * 0.5        # [Bb,T,D]
    # TODO(synk): measure direct 'btd,bsd->bts' contraction against the raw
    # en_conved block (would drop the wrapper-side transpose HBM pass).
    energy = bmm('btd,bds->bts', combined, encT_ref[...])          # [Bb,T,S]
    m = jnp.max(energy, axis=-1, keepdims=True)
    e = jnp.exp(energy - m)
    denom = jnp.sum(e, axis=-1, keepdims=True)
    inv = pl.reciprocal(denom, approx=True)          # EUP slot, not VALU
    inv = inv * (2.0 - denom * inv)                  # one Newton step -> ~f32 exact
    attention = e * inv                                            # [Bb,T,S]
    attended = bmm('bts,bsd->btd', attention, encC_ref[...])       # [Bb,T,D]
    attended = mm(attended.reshape(BT, D), w_ai2h_ref[...]) + b_ai2h_ref[...]
    conved_attn = (glu + attended) * 0.5                           # [BT,H]

    # ---- residual; persist for the next layer (grid step) ----------------
    new_conv = (conved_attn + conv_input) * 0.5                    # [BT,H]
    pad_buf[:, pl.ds(pad_rows, T), :] = new_conv.reshape(Bb, T, H)

    # ---- epilogue (last layer only): hid2in -> fc_out -> outputs ---------
    @pl.when(l == n_l - 1)
    def _():
        hid2in = mm(new_conv, w_hid2in_ref[...]) + b_hid2in_ref[...]   # [BT,D]
        output = mm(hid2in, w_fc_ref[...]) + b_fc_ref[...]             # [BT,D]
        if use_slab:
            P = slab_ref.shape[-1]
            parts = [output, attention.reshape(BT, S)]
            if P > D + S:
                parts.append(jnp.zeros((BT, P - D - S), jnp.float32))
            slab_ref[...] = jnp.concatenate(parts, axis=-1).reshape(Bb, T, P)
        else:
            out_ref[...] = output.reshape(Bb, T, D).astype(out_ref.dtype)
            attn_ref[...] = attention.astype(attn_ref.dtype)


def decoder_forward(input_data, en_conved, en_combined, params, *,
                    n_layers, kernel_size, batch_block=None,
                    compute_dtype=jnp.bfloat16):
    assert n_layers >= 1
    B, T, D = input_data.shape
    S = en_conved.shape[1]
    H = params["w_in2hid"].shape[1]
    L, K = n_layers, kernel_size
    pad_rows = ((K - 1 + 7) // 8) * 8        # sublane-aligned causal left pad

    # lane-aligned D/S -> two direct outputs; otherwise one lane-dense slab.
    use_slab = not (D % 128 == 0 and S % 128 == 0)
    P = ((D + S + 127) // 128) * 128 if use_slab else 0

    # ---- generation-aware sizing (v7x: 64 MiB VMEM, 2 TCs; v5e/v6e: 128 MiB)
    try:
        vmem_cap = int(getattr(pltpu.get_tpu_info(), "vmem_capacity_bytes",
                               128 * 1024 * 1024))
    except Exception:
        vmem_cap = 128 * 1024 * 1024
    small_vmem = vmem_cap <= 64 * 1024 * 1024
    vmem_budget = (vmem_cap * 3) // 4
    vmem_limit = min(vmem_budget, 100 * 1024 * 1024)

    def vmem_estimate(bb):
        f = 4
        enc = 2 * bb * S * D * f * 2                       # encT+encC, 2-buffered
        xin = bb * T * D * f * 2                           # input, 2-buffered
        out = bb * T * (P if use_slab else (D + S)) * f * 2
        scr = bb * T * D * f + bb * (pad_rows + T) * H * f
        wconv = 2 * (K * H * H + H) * f * 2                # one layer, 2-buffered
        wfix = (4 * D * H + D * D + 3 * H + 3 * D + T * D) * f
        return enc + xin + out + scr + wconv + wfix

    if batch_block is not None:
        Bb = batch_block
    else:
        Bb = 1
        for d in range(1, B + 1):
            if B % d:
                continue
            if small_vmem and B > 1 and B // d < 2:
                continue                         # keep both v7x TCs busy
            if vmem_estimate(d) > vmem_budget:
                continue
            Bb = d
            if d * T >= 512:                     # enough M to amortize MXU pushes
                break
    assert B % Bb == 0, "batch must be divisible by the batch block"
    grid = (B // Bb, L)

    # repack conv weights [L,K,H,2H] -> per-tap [L,K,H,H] linear/gate halves
    conv_w = params["conv_w"]
    w_conv_lin, w_conv_gate = conv_w[..., :H], conv_w[..., H:]
    conv_b = params["conv_b"]                              # [L,1,2H]
    b_conv_lin, b_conv_gate = conv_b[..., :H], conv_b[..., H:]

    # pre-transpose encoder "conved" so the energy matmul is NN-form in-kernel
    encT = jnp.swapaxes(en_conved, 1, 2)                   # [B, D, S]

    kernel = functools.partial(decoder_kernel, kernel_size=K, pad_rows=pad_rows,
                               compute_dtype=compute_dtype, use_slab=use_slab)

    def _const_spec(shape, single_buffer):
        idx = (lambda b, l, _n=len(shape): (0,) * _n)
        if single_buffer:
            # grid-invariant block: the second pipeline buffer is pure waste
            return pl.BlockSpec(shape, idx,
                                pipeline_mode=pl.Buffered(buffer_count=1))
        return pl.BlockSpec(shape, idx)

    def _run(single_buffer_weights):
        cs = lambda shape: _const_spec(shape, single_buffer_weights)
        in_specs = [
            pl.BlockSpec((Bb, T, D), lambda b, l: (b, 0, 0)),       # input_data
            pl.BlockSpec((Bb, D, S), lambda b, l: (b, 0, 0)),       # en_conved^T
            pl.BlockSpec((Bb, S, D), lambda b, l: (b, 0, 0)),       # en_combined
            cs((T, D)),                                             # pos rows 0..T-1
            cs((D, H)), cs((1, H)),                                 # in2hid
            pl.BlockSpec((1, K, H, H), lambda b, l: (l, 0, 0, 0)),  # conv lin taps
            pl.BlockSpec((1, K, H, H), lambda b, l: (l, 0, 0, 0)),  # conv gate taps
            pl.BlockSpec((1, 1, H), lambda b, l: (l, 0, 0)),        # conv lin bias
            pl.BlockSpec((1, 1, H), lambda b, l: (l, 0, 0)),        # conv gate bias
            cs((H, D)), cs((1, D)),                                 # attn_hid2in
            cs((D, H)), cs((1, H)),                                 # attn_in2hid
            cs((H, D)), cs((1, D)),                                 # hid2in
            cs((D, D)), cs((1, D)),                                 # fc_out
        ]
        if use_slab:
            out_specs = pl.BlockSpec((Bb, T, P), lambda b, l: (b, 0, 0))
            out_shape = jax.ShapeDtypeStruct((B, T, P), jnp.float32)
        else:
            out_specs = (pl.BlockSpec((Bb, T, D), lambda b, l: (b, 0, 0)),
                         pl.BlockSpec((Bb, T, S), lambda b, l: (b, 0, 0)))
            out_shape = (jax.ShapeDtypeStruct((B, T, D), jnp.float32),
                         jax.ShapeDtypeStruct((B, T, S), jnp.float32))
        return pl.pallas_call(
            kernel,
            out_shape=out_shape,
            grid=grid,
            in_specs=in_specs,
            out_specs=out_specs,
            scratch_shapes=[pltpu.VMEM((Bb, T, D), jnp.float32),            # x_emb
                            pltpu.VMEM((Bb, pad_rows + T, H), jnp.float32)],  # pad
            compiler_params=pltpu.CompilerParams(
                dimension_semantics=("parallel", "arbitrary"),
                vmem_limit_bytes=vmem_limit),
        )(input_data, encT, en_combined, params["pos"],
          params["w_in2hid"], params["b_in2hid"],
          w_conv_lin, w_conv_gate, b_conv_lin, b_conv_gate,
          params["w_attn_hid2in"], params["b_attn_hid2in"],
          params["w_attn_in2hid"], params["b_attn_in2hid"],
          params["w_hid2in"], params["b_hid2in"],
          params["w_fc"], params["b_fc"])

    try:
        result = _run(True)
    except Exception:
        # Fallback for jax builds without single-buffered BlockSpec support.
        result = _run(False)

    if use_slab:
        return result[:, :, :D], result[:, :, D:D + S]
    out, attn = result
    return out, attn


def decoder_reference(input_data, en_conved, en_combined, params,
                      *, n_layers, kernel_size):
    """Pure-JAX reference mirroring the PyTorch forward (channel-last layout)."""
    B, T, D = input_data.shape
    H = params["w_in2hid"].shape[1]
    K = kernel_size

    x_emb = input_data + params["pos"][:T][None]
    conv_input = x_emb @ params["w_in2hid"] + params["b_in2hid"]
    attention = None
    for l in range(n_layers):
        xp = jnp.pad(conv_input, ((0, 0), (K - 1, 0), (0, 0)))
        conv_out = sum(jnp.einsum("btH,Hc->btc", xp[:, k:k + T, :],
                                  params["conv_w"][l, k]) for k in range(K))
        conv_out = conv_out + params["conv_b"][l]
        glu = conv_out[..., :H] * jax.nn.sigmoid(conv_out[..., H:])
        conved_emb = glu @ params["w_attn_hid2in"] + params["b_attn_hid2in"]
        combined = (conved_emb + x_emb) * 0.5
        energy = jnp.einsum("btd,bsd->bts", combined, en_conved)
        attention = jax.nn.softmax(energy, axis=-1)
        attended = jnp.einsum("bts,bsd->btd", attention, en_combined)
        attended = attended @ params["w_attn_in2hid"] + params["b_attn_in2hid"]
        conved_attn = (glu + attended) * 0.5
        conv_input = (conved_attn + conv_input) * 0.5
    hid2in = conv_input @ params["w_hid2in"] + params["b_hid2in"]
    output = hid2in @ params["w_fc"] + params["b_fc"]
    return output, attention


def init_params(key, *, input_dim, hid_dim, n_layers, kernel_size, seq_len):
    keys = jax.random.split(key, 16)
    D, H, L, K = input_dim, hid_dim, n_layers, kernel_size
    s = 0.1
    return {
        "pos":            s * jax.random.normal(keys[0], (seq_len, D), jnp.float32),
        "w_in2hid":       s * jax.random.normal(keys[1], (D, H), jnp.float32),
        "b_in2hid":       s * jax.random.normal(keys[2], (1, H), jnp.float32),
        "conv_w":         s * jax.random.normal(keys[3], (L, K, H, 2 * H), jnp.float32),
        "conv_b":         s * jax.random.normal(keys[4], (L, 1, 2 * H), jnp.float32),
        "w_attn_hid2in":  s * jax.random.normal(keys[5], (H, D), jnp.float32),
        "b_attn_hid2in":  s * jax.random.normal(keys[6], (1, D), jnp.float32),
        "w_attn_in2hid":  s * jax.random.normal(keys[7], (D, H), jnp.float32),
        "b_attn_in2hid":  s * jax.random.normal(keys[8], (1, H), jnp.float32),
        "w_hid2in":       s * jax.random.normal(keys[9], (H, D), jnp.float32),
        "b_hid2in":       s * jax.random.normal(keys[10], (1, D), jnp.float32),
        "w_fc":           s * jax.random.normal(keys[11], (D, D), jnp.float32),
        "b_fc":           s * jax.random.normal(keys[12], (1, D), jnp.float32),
    }


if __name__ == "__main__":
    key = jax.random.PRNGKey(0)

    # ---- config 1: small, lane-unaligned D/S -> exercises the slab path ----
    B, T, S = 2, 8, 8          # batch, target len, source len
    D, H = 16, 32              # input_dim, hid_dim
    n_layers, kernel_size = 2, 3

    k_in, k_ec, k_eb, k_par, k2 = jax.random.split(key, 5)
    input_data = jax.random.normal(k_in, (B, T, D), jnp.float32)
    en_conved = jax.random.normal(k_ec, (B, S, D), jnp.float32)
    en_combined = jax.random.normal(k_eb, (B, S, D), jnp.float32)
    params = init_params(k_par, input_dim=D, hid_dim=H,
                         n_layers=n_layers, kernel_size=kernel_size, seq_len=T)
    ref_out, ref_attn = decoder_reference(input_data, en_conved, en_combined,
                                          params, n_layers=n_layers,
                                          kernel_size=kernel_size)

    # f32 matmul operands: tight check against the f32 reference.
    out, attn = decoder_forward(input_data, en_conved, en_combined, params,
                                n_layers=n_layers, kernel_size=kernel_size,
                                compute_dtype=jnp.float32)
    out = jax.block_until_ready(out)
    attn = jax.block_until_ready(attn)
    assert out.shape == (B, T, D) and attn.shape == (B, T, S)
    assert jnp.allclose(out, ref_out, atol=1e-3, rtol=1e-3)
    assert jnp.allclose(attn, ref_attn, atol=1e-3, rtol=1e-3)

    # bf16 matmul operands (production default): loose-tolerance check.
    out_bf, attn_bf = decoder_forward(input_data, en_conved, en_combined, params,
                                      n_layers=n_layers, kernel_size=kernel_size)
    out_bf = jax.block_until_ready(out_bf)
    attn_bf = jax.block_until_ready(attn_bf)
    assert jnp.allclose(out_bf, ref_out, atol=5e-2, rtol=5e-2)
    assert jnp.allclose(attn_bf, ref_attn, atol=5e-2, rtol=5e-2)

    # ---- config 2: lane-aligned D/S -> exercises the dual-output path ----
    B2, T2, S2, D2, H2, L2, K2 = 2, 8, 128, 128, 64, 1, 3
    k_in2, k_ec2, k_eb2, k_par2 = jax.random.split(k2, 4)
    x2 = jax.random.normal(k_in2, (B2, T2, D2), jnp.float32)
    ec2 = 0.3 * jax.random.normal(k_ec2, (B2, S2, D2), jnp.float32)
    eb2 = 0.3 * jax.random.normal(k_eb2, (B2, S2, D2), jnp.float32)
    p2 = init_params(k_par2, input_dim=D2, hid_dim=H2, n_layers=L2,
                     kernel_size=K2, seq_len=T2)
    ro2, ra2 = decoder_reference(x2, ec2, eb2, p2, n_layers=L2, kernel_size=K2)
    o2, a2 = decoder_forward(x2, ec2, eb2, p2, n_layers=L2, kernel_size=K2,
                             compute_dtype=jnp.float32)
    o2 = jax.block_until_ready(o2)
    a2 = jax.block_until_ready(a2)
    assert o2.shape == (B2, T2, D2) and a2.shape == (B2, T2, S2)
    assert jnp.allclose(o2, ro2, atol=2e-2, rtol=2e-2)
    assert jnp.allclose(a2, ra2, atol=2e-2, rtol=2e-2)

    print("KERNEL_OK")
</pallas_src>

<mosaic_0001>
module attributes {stable_mosaic.version = 11 : i64} {
  func.func @decoder_kernel(%arg0: i32, %arg1: i32, %arg2: memref<2x8x16xf32, #tpu.memory_space<vmem>>, %arg3: memref<2x16x8xf32, #tpu.memory_space<vmem>>, %arg4: memref<2x8x16xf32, #tpu.memory_space<vmem>>, %arg5: memref<8x16xf32, #tpu.memory_space<vmem>>, %arg6: memref<16x32xf32, #tpu.memory_space<vmem>>, %arg7: memref<1x32xf32, #tpu.memory_space<vmem>>, %arg8: memref<1x3x32x32xf32, #tpu.memory_space<vmem>>, %arg9: memref<1x3x32x32xf32, #tpu.memory_space<vmem>>, %arg10: memref<1x1x32xf32, #tpu.memory_space<vmem>>, %arg11: memref<1x1x32xf32, #tpu.memory_space<vmem>>, %arg12: memref<32x16xf32, #tpu.memory_space<vmem>>, %arg13: memref<1x16xf32, #tpu.memory_space<vmem>>, %arg14: memref<16x32xf32, #tpu.memory_space<vmem>>, %arg15: memref<1x32xf32, #tpu.memory_space<vmem>>, %arg16: memref<32x16xf32, #tpu.memory_space<vmem>>, %arg17: memref<1x16xf32, #tpu.memory_space<vmem>>, %arg18: memref<16x16xf32, #tpu.memory_space<vmem>>, %arg19: memref<1x16xf32, #tpu.memory_space<vmem>>, %arg20: memref<2x8x128xf32, #tpu.memory_space<vmem>>, %arg21: memref<2x8x16xf32, #tpu.memory_space<vmem>>, %arg22: memref<2x16x32xf32, #tpu.memory_space<vmem>>) attributes {dimension_semantics = [#tpu.dimension_semantics<parallel>, #tpu.dimension_semantics<arbitrary>], iteration_bounds = array<i64: 1, 2>, scalar_prefetch = 0 : i64, scratch_operands = 2 : i64, tpu.core_type = #tpu.core_type<tc>, window_params = [{transform_indices = @transform_0, window_bounds = array<i64: 2, 8, 16>}, {transform_indices = @transform_1, window_bounds = array<i64: 2, 16, 8>}, {transform_indices = @transform_2, window_bounds = array<i64: 2, 8, 16>}, {pipeline_mode = #tpu.pipeline_mode<synchronous>, transform_indices = @transform_3, window_bounds = array<i64: 8, 16>}, {pipeline_mode = #tpu.pipeline_mode<synchronous>, transform_indices = @transform_4, window_bounds = array<i64: 16, 32>}, {pipeline_mode = #tpu.pipeline_mode<synchronous>, transform_indices = @transform_5, window_bounds = array<i64: 1, 32>}, {transform_indices = @transform_6, window_bounds = array<i64: 1, 3, 32, 32>}, {transform_indices = @transform_7, window_bounds = array<i64: 1, 3, 32, 32>}, {transform_indices = @transform_8, window_bounds = array<i64: 1, 1, 32>}, {transform_indices = @transform_9, window_bounds = array<i64: 1, 1, 32>}, {pipeline_mode = #tpu.pipeline_mode<synchronous>, transform_indices = @transform_10, window_bounds = array<i64: 32, 16>}, {pipeline_mode = #tpu.pipeline_mode<synchronous>, transform_indices = @transform_11, window_bounds = array<i64: 1, 16>}, {pipeline_mode = #tpu.pipeline_mode<synchronous>, transform_indices = @transform_12, window_bounds = array<i64: 16, 32>}, {pipeline_mode = #tpu.pipeline_mode<synchronous>, transform_indices = @transform_13, window_bounds = array<i64: 1, 32>}, {pipeline_mode = #tpu.pipeline_mode<synchronous>, transform_indices = @transform_14, window_bounds = array<i64: 32, 16>}, {pipeline_mode = #tpu.pipeline_mode<synchronous>, transform_indices = @transform_15, window_bounds = array<i64: 1, 16>}, {pipeline_mode = #tpu.pipeline_mode<synchronous>, transform_indices = @transform_16, window_bounds = array<i64: 16, 16>}, {pipeline_mode = #tpu.pipeline_mode<synchronous>, transform_indices = @transform_17, window_bounds = array<i64: 1, 16>}, {transform_indices = @transform_18, window_bounds = array<i64: 2, 8, 128>}]} {
    %c0_i32 = arith.constant 0 : i32
    %0 = arith.cmpi eq, %arg1, %c0_i32 : i32
    %1 = arith.extui %0 : i1 to i32
    %c0_i32_0 = arith.constant 0 : i32
    %2 = arith.cmpi ne, %1, %c0_i32_0 : i32
    scf.if %2 {
      %c0_74 = arith.constant 0 : index
      %c0_75 = arith.constant 0 : index
      %c0_76 = arith.constant 0 : index
      %92 = vector.load %arg2[%c0_74, %c0_75, %c0_76] : memref<2x8x16xf32, #tpu.memory_space<vmem>>, vector<2x8x16xf32>
      %c0_77 = arith.constant 0 : index
      %c0_78 = arith.constant 0 : index
      %93 = vector.load %arg5[%c0_77, %c0_78] : memref<8x16xf32, #tpu.memory_space<vmem>>, vector<8x16xf32>
      %94 = vector.shape_cast %93 : vector<8x16xf32> to vector<1x8x16xf32>
      %95 = vector.broadcast %94 : vector<1x8x16xf32> to vector<2x8x16xf32>
      %96 = arith.addf %92, %95 : vector<2x8x16xf32>
      %c0_79 = arith.constant 0 : index
      %c0_80 = arith.constant 0 : index
      %c0_81 = arith.constant 0 : index
      %97 = vector.load %arg21[%c0_79, %c0_80, %c0_81] : memref<2x8x16xf32, #tpu.memory_space<vmem>>, vector<2x8x16xf32>
      tpu.vector_store %arg21[%c0_79, %c0_80, %c0_81], %96 {strides = array<i32>} : memref<2x8x16xf32, #tpu.memory_space<vmem>>, vector<2x8x16xf32>,
      %98 = vector.shape_cast %96 : vector<2x8x16xf32> to vector<16x16xf32>
      %c0_82 = arith.constant 0 : index
      %c0_83 = arith.constant 0 : index
      %99 = vector.load %arg6[%c0_82, %c0_83] : memref<16x32xf32, #tpu.memory_space<vmem>>, vector<16x32xf32>
      %cst_84 = arith.constant dense<0.000000e+00> : vector<16x32xf32>
      %100 = tpu.matmul %98, %99, %cst_84 {dimension_numbers = #tpu.dot_dimension_numbers<[1], [0], [0], [1], [0, 0, 1, 1], [], []>} : vector<16x16xf32>, vector<16x32xf32>, vector<16x32xf32> -> vector<16x32xf32>
      %c0_85 = arith.constant 0 : index
      %c0_86 = arith.constant 0 : index
      %101 = vector.load %arg7[%c0_85, %c0_86] : memref<1x32xf32, #tpu.memory_space<vmem>>, vector<1x32xf32>
      %102 = vector.broadcast %101 : vector<1x32xf32> to vector<16x32xf32>
      %103 = arith.addf %100, %102 : vector<16x32xf32>
      %cst_87 = arith.constant 0.000000e+00 : f32
      %104 = vector.broadcast %cst_87 : f32 to vector<2x8x32xf32>
      %c0_88 = arith.constant 0 : index
      %c0_89 = arith.constant 0 : index
      %c0_90 = arith.constant 0 : index
      %105 = vector.load %arg22[%c0_88, %c0_89, %c0_90] : memref<2x16x32xf32, #tpu.memory_space<vmem>>, vector<2x8x32xf32>
      tpu.vector_store %arg22[%c0_88, %c0_89, %c0_90], %104 {strides = array<i32>} : memref<2x16x32xf32, #tpu.memory_space<vmem>>, vector<2x8x32xf32>,
      %106 = vector.shape_cast %103 : vector<16x32xf32> to vector<2x8x32xf32>
      %c0_91 = arith.constant 0 : index
      %c8_92 = arith.constant 8 : index
      %c0_93 = arith.constant 0 : index
      %107 = vector.load %arg22[%c0_91, %c8_92, %c0_93] : memref<2x16x32xf32, #tpu.memory_space<vmem>>, vector<2x8x32xf32>
      tpu.vector_store %arg22[%c0_91, %c8_92, %c0_93], %106 {strides = array<i32>} : memref<2x16x32xf32, #tpu.memory_space<vmem>>, vector<2x8x32xf32>,
    } else {
    }
    %c0 = arith.constant 0 : index
    %c0_1 = arith.constant 0 : index
    %c0_2 = arith.constant 0 : index
    %3 = vector.load %arg21[%c0, %c0_1, %c0_2] : memref<2x8x16xf32, #tpu.memory_space<vmem>>, vector<2x8x16xf32>
    %c0_3 = arith.constant 0 : index
    %c8 = arith.constant 8 : index
    %c0_4 = arith.constant 0 : index
    %4 = vector.load %arg22[%c0_3, %c8, %c0_4] : memref<2x16x32xf32, #tpu.memory_space<vmem>>, vector<2x8x32xf32>
    %5 = vector.shape_cast %4 : vector<2x8x32xf32> to vector<16x32xf32>
    %c0_5 = arith.constant 0 : index
    %c6 = arith.constant 6 : index
    %c0_6 = arith.constant 0 : index
    %6 = vector.load %arg22[%c0_5, %c6, %c0_6] : memref<2x16x32xf32, #tpu.memory_space<vmem>>, vector<2x8x32xf32>
    %7 = vector.shape_cast %6 : vector<2x8x32xf32> to vector<16x32xf32>
    %c0_7 = arith.constant 0 : index
    %c0_8 = arith.constant 0 : index
    %c0_9 = arith.constant 0 : index
    %c0_10 = arith.constant 0 : index
    %8 = vector.load %arg8[%c0_7, %c0_8, %c0_9, %c0_10] : memref<1x3x32x32xf32, #tpu.memory_space<vmem>>, vector<1x1x32x32xf32>
    %9 = vector.shape_cast %8 : vector<1x1x32x32xf32> to vector<32x32xf32>
    %cst = arith.constant dense<0.000000e+00> : vector<16x32xf32>
    %10 = tpu.matmul %7, %9, %cst {dimension_numbers = #tpu.dot_dimension_numbers<[1], [0], [0], [1], [0, 0, 1, 1], [], []>} : vector<16x32xf32>, vector<32x32xf32>, vector<16x32xf32> -> vector<16x32xf32>
    %c0_11 = arith.constant 0 : index
    %c0_12 = arith.constant 0 : index
    %c0_13 = arith.constant 0 : index
    %c0_14 = arith.constant 0 : index
    %11 = vector.load %arg9[%c0_11, %c0_12, %c0_13, %c0_14] : memref<1x3x32x32xf32, #tpu.memory_space<vmem>>, vector<1x1x32x32xf32>
    %12 = vector.shape_cast %11 : vector<1x1x32x32xf32> to vector<32x32xf32>
    %cst_15 = arith.constant dense<0.000000e+00> : vector<16x32xf32>
    %13 = tpu.matmul %7, %12, %cst_15 {dimension_numbers = #tpu.dot_dimension_numbers<[1], [0], [0], [1], [0, 0, 1, 1], [], []>} : vector<16x32xf32>, vector<32x32xf32>, vector<16x32xf32> -> vector<16x32xf32>
    %c0_16 = arith.constant 0 : index
    %c7 = arith.constant 7 : index
    %c0_17 = arith.constant 0 : index
    %14 = vector.load %arg22[%c0_16, %c7, %c0_17] : memref<2x16x32xf32, #tpu.memory_space<vmem>>, vector<2x8x32xf32>
    %15 = vector.shape_cast %14 : vector<2x8x32xf32> to vector<16x32xf32>
    %c0_18 = arith.constant 0 : index
    %c1 = arith.constant 1 : index
    %c0_19 = arith.constant 0 : index
    %c0_20 = arith.constant 0 : index
    %16 = vector.load %arg8[%c0_18, %c1, %c0_19, %c0_20] : memref<1x3x32x32xf32, #tpu.memory_space<vmem>>, vector<1x1x32x32xf32>
    %17 = vector.shape_cast %16 : vector<1x1x32x32xf32> to vector<32x32xf32>
    %cst_21 = arith.constant dense<0.000000e+00> : vector<16x32xf32>
    %18 = tpu.matmul %15, %17, %cst_21 {dimension_numbers = #tpu.dot_dimension_numbers<[1], [0], [0], [1], [0, 0, 1, 1], [], []>} : vector<16x32xf32>, vector<32x32xf32>, vector<16x32xf32> -> vector<16x32xf32>
    %19 = arith.addf %10, %18 : vector<16x32xf32>
    %c0_22 = arith.constant 0 : index
    %c1_23 = arith.constant 1 : index
    %c0_24 = arith.constant 0 : index
    %c0_25 = arith.constant 0 : index
    %20 = vector.load %arg9[%c0_22, %c1_23, %c0_24, %c0_25] : memref<1x3x32x32xf32, #tpu.memory_space<vmem>>, vector<1x1x32x32xf32>
    %21 = vector.shape_cast %20 : vector<1x1x32x32xf32> to vector<32x32xf32>
    %cst_26 = arith.constant dense<0.000000e+00> : vector<16x32xf32>
    %22 = tpu.matmul %15, %21, %cst_26 {dimension_numbers = #tpu.dot_dimension_numbers<[1], [0], [0], [1], [0, 0, 1, 1], [], []>} : vector<16x32xf32>, vector<32x32xf32>, vector<16x32xf32> -> vector<16x32xf32>
    %23 = arith.addf %13, %22 : vector<16x32xf32>
    %c0_27 = arith.constant 0 : index
    %c8_28 = arith.constant 8 : index
    %c0_29 = arith.constant 0 : index
    %24 = vector.load %arg22[%c0_27, %c8_28, %c0_29] : memref<2x16x32xf32, #tpu.memory_space<vmem>>, vector<2x8x32xf32>
    %25 = vector.shape_cast %24 : vector<2x8x32xf32> to vector<16x32xf32>
    %c0_30 = arith.constant 0 : index
    %c2 = arith.constant 2 : index
    %c0_31 = arith.constant 0 : index
    %c0_32 = arith.constant 0 : index
    %26 = vector.load %arg8[%c0_30, %c2, %c0_31, %c0_32] : memref<1x3x32x32xf32, #tpu.memory_space<vmem>>, vector<1x1x32x32xf32>
    %27 = vector.shape_cast %26 : vector<1x1x32x32xf32> to vector<32x32xf32>
    %cst_33 = arith.constant dense<0.000000e+00> : vector<16x32xf32>
    %28 = tpu.matmul %25, %27, %cst_33 {dimension_numbers = #tpu.dot_dimension_numbers<[1], [0], [0], [1], [0, 0, 1, 1], [], []>} : vector<16x32xf32>, vector<32x32xf32>, vector<16x32xf32> -> vector<16x32xf32>
    %29 = arith.addf %19, %28 : vector<16x32xf32>
    %c0_34 = arith.constant 0 : index
    %c2_35 = arith.constant 2 : index
    %c0_36 = arith.constant 0 : index
    %c0_37 = arith.constant 0 : index
    %30 = vector.load %arg9[%c0_34, %c2_35, %c0_36, %c0_37] : memref<1x3x32x32xf32, #tpu.memory_space<vmem>>, vector<1x1x32x32xf32>
    %31 = vector.shape_cast %30 : vector<1x1x32x32xf32> to vector<32x32xf32>
    %cst_38 = arith.constant dense<0.000000e+00> : vector<16x32xf32>
    %32 = tpu.matmul %25, %31, %cst_38 {dimension_numbers = #tpu.dot_dimension_numbers<[1], [0], [0], [1], [0, 0, 1, 1], [], []>} : vector<16x32xf32>, vector<32x32xf32>, vector<16x32xf32> -> vector<16x32xf32>
    %33 = arith.addf %23, %32 : vector<16x32xf32>
    %c0_39 = arith.constant 0 : index
    %c0_40 = arith.constant 0 : index
    %c0_41 = arith.constant 0 : index
    %34 = vector.load %arg10[%c0_39, %c0_40, %c0_41] : memref<1x1x32xf32, #tpu.memory_space<vmem>>, vector<1x1x32xf32>
    %35 = vector.shape_cast %34 : vector<1x1x32xf32> to vector<1x32xf32>
    %36 = vector.broadcast %35 : vector<1x32xf32> to vector<16x32xf32>
    %37 = arith.addf %29, %36 : vector<16x32xf32>
    %c0_42 = arith.constant 0 : index
    %c0_43 = arith.constant 0 : index
    %c0_44 = arith.constant 0 : index
    %38 = vector.load %arg11[%c0_42, %c0_43, %c0_44] : memref<1x1x32xf32, #tpu.memory_space<vmem>>, vector<1x1x32xf32>
    %39 = vector.shape_cast %38 : vector<1x1x32xf32> to vector<1x32xf32>
    %40 = vector.broadcast %39 : vector<1x32xf32> to vector<16x32xf32>
    %41 = arith.addf %33, %40 : vector<16x32xf32>
    %42 = arith.negf %41 : vector<16x32xf32>
    %43 = math.exp %42 : vector<16x32xf32>
    %cst_45 = arith.constant 1.000000e+00 : f32
    %44 = vector.broadcast %cst_45 : f32 to vector<16x32xf32>
    %45 = arith.addf %44, %43 : vector<16x32xf32>
    %46 = arith.divf %44, %45 : vector<16x32xf32>
    %47 = arith.mulf %37, %46 : vector<16x32xf32>
    %c0_46 = arith.constant 0 : index
    %c0_47 = arith.constant 0 : index
    %48 = vector.load %arg12[%c0_46, %c0_47] : memref<32x16xf32, #tpu.memory_space<vmem>>, vector<32x16xf32>
    %cst_48 = arith.constant dense<0.000000e+00> : vector<16x16xf32>
    %49 = tpu.matmul %47, %48, %cst_48 {dimension_numbers = #tpu.dot_dimension_numbers<[1], [0], [0], [1], [0, 0, 1, 1], [], []>} : vector<16x32xf32>, vector<32x16xf32>, vector<16x16xf32> -> vector<16x16xf32>
    %c0_49 = arith.constant 0 : index
    %c0_50 = arith.constant 0 : index
    %50 = vector.load %arg13[%c0_49, %c0_50] : memref<1x16xf32, #tpu.memory_space<vmem>>, vector<1x16xf32>
    %51 = vector.broadcast %50 : vector<1x16xf32> to vector<16x16xf32>
    %52 = arith.addf %49, %51 : vector<16x16xf32>
    %53 = vector.shape_cast %52 : vector<16x16xf32> to vector<2x8x16xf32>
    %54 = arith.addf %53, %3 : vector<2x8x16xf32>
    %cst_51 = arith.constant 5.000000e-01 : f32
    %55 = vector.broadcast %cst_51 : f32 to vector<2x8x16xf32>
    %56 = arith.mulf %54, %55 : vector<2x8x16xf32>
    %c0_52 = arith.constant 0 : index
    %c0_53 = arith.constant 0 : index
    %c0_54 = arith.constant 0 : index
    %57 = vector.load %arg3[%c0_52, %c0_53, %c0_54] : memref<2x16x8xf32, #tpu.memory_space<vmem>>, vector<2x16x8xf32>
    "tpu.trace_start"() <{level = 10 : i32, message = "btd,bds->bts"}> : () -> ()
    %cst_55 = arith.constant dense<0.000000e+00> : vector<2x8x8xf32>
    %58 = tpu.matmul %56, %57, %cst_55 {dimension_numbers = #tpu.dot_dimension_numbers<[2], [1], [1], [2], [0, 0, 0, 1, 1, 2], [0], [0]>} : vector<2x8x16xf32>, vector<2x16x8xf32>, vector<2x8x8xf32> -> vector<2x8x8xf32>
    "tpu.trace_stop"() : () -> ()
    %cst_56 = arith.constant dense<0xFF800000> : vector<2x8xf32>
    %59 = vector.multi_reduction <maximumf>, %58, %cst_56 [2] : vector<2x8x8xf32> to vector<2x8xf32>
    %60 = vector.shape_cast %59 : vector<2x8xf32> to vector<2x8x1xf32>
    %61 = vector.broadcast %60 : vector<2x8x1xf32> to vector<2x8x8xf32>
    %62 = arith.subf %58, %61 : vector<2x8x8xf32>
    %63 = math.exp %62 : vector<2x8x8xf32>
    %cst_57 = arith.constant dense<0.000000e+00> : vector<2x8xf32>
    %64 = vector.multi_reduction <add>, %63, %cst_57 [2] : vector<2x8x8xf32> to vector<2x8xf32>
    %65 = vector.shape_cast %64 : vector<2x8xf32> to vector<2x8x1xf32>
    %66 = tpu.reciprocal %65 {approx = true} : vector<2x8x1xf32> -> vector<2x8x1xf32>
    %67 = arith.mulf %65, %66 : vector<2x8x1xf32>
    %cst_58 = arith.constant 2.000000e+00 : f32
    %68 = vector.broadcast %cst_58 : f32 to vector<2x8x1xf32>
    %69 = arith.subf %68, %67 : vector<2x8x1xf32>
    %70 = arith.mulf %66, %69 : vector<2x8x1xf32>
    %71 = vector.broadcast %70 : vector<2x8x1xf32> to vector<2x8x8xf32>
    %72 = arith.mulf %63, %71 : vector<2x8x8xf32>
    %c0_59 = arith.constant 0 : index
    %c0_60 = arith.constant 0 : index
    %c0_61 = arith.constant 0 : index
    %73 = vector.load %arg4[%c0_59, %c0_60, %c0_61] : memref<2x8x16xf32, #tpu.memory_space<vmem>>, vector<2x8x16xf32>
    "tpu.trace_start"() <{level = 10 : i32, message = "bts,bsd->btd"}> : () -> ()
    %cst_62 = arith.constant dense<0.000000e+00> : vector<2x8x16xf32>
    %74 = tpu.matmul %72, %73, %cst_62 {dimension_numbers = #tpu.dot_dimension_numbers<[2], [1], [1], [2], [0, 0, 0, 1, 1, 2], [0], [0]>} : vector<2x8x8xf32>, vector<2x8x16xf32>, vector<2x8x16xf32> -> vector<2x8x16xf32>
    "tpu.trace_stop"() : () -> ()
    %75 = vector.shape_cast %74 : vector<2x8x16xf32> to vector<16x16xf32>
    %c0_63 = arith.constant 0 : index
    %c0_64 = arith.constant 0 : index
    %76 = vector.load %arg14[%c0_63, %c0_64] : memref<16x32xf32, #tpu.memory_space<vmem>>, vector<16x32xf32>
    %cst_65 = arith.constant dense<0.000000e+00> : vector<16x32xf32>
    %77 = tpu.matmul %75, %76, %cst_65 {dimension_numbers = #tpu.dot_dimension_numbers<[1], [0], [0], [1], [0, 0, 1, 1], [], []>} : vector<16x16xf32>, vector<16x32xf32>, vector<16x32xf32> -> vector<16x32xf32>
    %c0_66 = arith.constant 0 : index
    %c0_67 = arith.constant 0 : index
    %78 = vector.load %arg15[%c0_66, %c0_67] : memref<1x32xf32, #tpu.memory_space<vmem>>, vector<1x32xf32>
    %79 = vector.broadcast %78 : vector<1x32xf32> to vector<16x32xf32>
    %80 = arith.addf %77, %79 : vector<16x32xf32>
    %81 = arith.addf %47, %80 : vector<16x32xf32>
    %cst_68 = arith.constant 5.000000e-01 : f32
    %82 = vector.broadcast %cst_68 : f32 to vector<16x32xf32>
    %83 = arith.mulf %81, %82 : vector<16x32xf32>
    %84 = arith.addf %83, %5 : vector<16x32xf32>
    %cst_69 = arith.constant 5.000000e-01 : f32
    %85 = vector.broadcast %cst_69 : f32 to vector<16x32xf32>
    %86 = arith.mulf %84, %85 : vector<16x32xf32>
    %87 = vector.shape_cast %86 : vector<16x32xf32> to vector<2x8x32xf32>
    %c0_70 = arith.constant 0 : index
    %c8_71 = arith.constant 8 : index
    %c0_72 = arith.constant 0 : index
    %88 = vector.load %arg22[%c0_70, %c8_71, %c0_72] : memref<2x16x32xf32, #tpu.memory_space<vmem>>, vector<2x8x32xf32>
    tpu.vector_store %arg22[%c0_70, %c8_71, %c0_72], %87 {strides = array<i32>} : memref<2x16x32xf32, #tpu.memory_space<vmem>>, vector<2x8x32xf32>,
    %c1_i32 = arith.constant 1 : i32
    %89 = arith.cmpi eq, %arg1, %c1_i32 : i32
    %90 = arith.extui %89 : i1 to i32
    %c0_i32_73 = arith.constant 0 : i32
    %91 = arith.cmpi ne, %90, %c0_i32_73 : i32
    scf.if %91 {
      %c0_74 = arith.constant 0 : index
      %c0_75 = arith.constant 0 : index
      %92 = vector.load %arg16[%c0_74, %c0_75] : memref<32x16xf32, #tpu.memory_space<vmem>>, vector<32x16xf32>
      %cst_76 = arith.constant dense<0.000000e+00> : vector<16x16xf32>
      %93 = tpu.matmul %86, %92, %cst_76 {dimension_numbers = #tpu.dot_dimension_numbers<[1], [0], [0], [1], [0, 0, 1, 1], [], []>} : vector<16x32xf32>, vector<32x16xf32>, vector<16x16xf32> -> vector<16x16xf32>
      %c0_77 = arith.constant 0 : index
      %c0_78 = arith.constant 0 : index
      %94 = vector.load %arg17[%c0_77, %c0_78] : memref<1x16xf32, #tpu.memory_space<vmem>>, vector<1x16xf32>
      %95 = vector.broadcast %94 : vector<1x16xf32> to vector<16x16xf32>
      %96 = arith.addf %93, %95 : vector<16x16xf32>
      %c0_79 = arith.constant 0 : index
      %c0_80 = arith.constant 0 : index
      %97 = vector.load %arg18[%c0_79, %c0_80] : memref<16x16xf32, #tpu.memory_space<vmem>>, vector<16x16xf32>
      %cst_81 = arith.constant dense<0.000000e+00> : vector<16x16xf32>
      %98 = tpu.matmul %96, %97, %cst_81 {dimension_numbers = #tpu.dot_dimension_numbers<[1], [0], [0], [1], [0, 0, 1, 1], [], []>} : vector<16x16xf32>, vector<16x16xf32>, vector<16x16xf32> -> vector<16x16xf32>
      %c0_82 = arith.constant 0 : index
      %c0_83 = arith.constant 0 : index
      %99 = vector.load %arg19[%c0_82, %c0_83] : memref<1x16xf32, #tpu.memory_space<vmem>>, vector<1x16xf32>
      %100 = vector.broadcast %99 : vector<1x16xf32> to vector<16x16xf32>
      %101 = arith.addf %98, %100 : vector<16x16xf32>
      %102 = vector.shape_cast %72 : vector<2x8x8xf32> to vector<16x8xf32>
      %cst_84 = arith.constant 0.000000e+00 : f32
      %103 = vector.broadcast %cst_84 : f32 to vector<16x104xf32>
      %104 = tpu.concatenate %101, %102, %103 in 1 : vector<16x16xf32>, vector<16x8xf32>, vector<16x104xf32> -> vector<16x128xf32>
      %105 = vector.shape_cast %104 : vector<16x128xf32> to vector<2x8x128xf32>
      %c0_85 = arith.constant 0 : index
      %c0_86 = arith.constant 0 : index
      %c0_87 = arith.constant 0 : index
      %106 = vector.load %arg20[%c0_85, %c0_86, %c0_87] : memref<2x8x128xf32, #tpu.memory_space<vmem>>, vector<2x8x128xf32>
      tpu.vector_store %arg20[%c0_85, %c0_86, %c0_87], %105 {strides = array<i32>} : memref<2x8x128xf32, #tpu.memory_space<vmem>>, vector<2x8x128xf32>,
    } else {
    }
    return
  }
  func.func @transform_0(%arg0: i32, %arg1: i32) -> (i32, i32, i32) {
    %c0_i32 = arith.constant 0 : i32
    %c0_i32_0 = arith.constant 0 : i32
    %c0_i32_1 = arith.constant 0 : i32
    return %arg0, %c0_i32, %c0_i32_0 : i32, i32, i32
  }
  func.func @transform_1(%arg0: i32, %arg1: i32) -> (i32, i32, i32) {
    %c0_i32 = arith.constant 0 : i32
    %c0_i32_0 = arith.constant 0 : i32
    %c0_i32_1 = arith.constant 0 : i32
    return %arg0, %c0_i32, %c0_i32_0 : i32, i32, i32
  }
  func.func @transform_2(%arg0: i32, %arg1: i32) -> (i32, i32, i32) {
    %c0_i32 = arith.constant 0 : i32
    %c0_i32_0 = arith.constant 0 : i32
    %c0_i32_1 = arith.constant 0 : i32
    return %arg0, %c0_i32, %c0_i32_0 : i32, i32, i32
  }
  func.func @transform_3(%arg0: i32, %arg1: i32) -> (i32, i32) {
    %c0_i32 = arith.constant 0 : i32
    %c0_i32_0 = arith.constant 0 : i32
    %c0_i32_1 = arith.constant 0 : i32
    return %c0_i32, %c0_i32_0 : i32, i32
  }
  func.func @transform_4(%arg0: i32, %arg1: i32) -> (i32, i32) {
    %c0_i32 = arith.constant 0 : i32
    %c0_i32_0 = arith.constant 0 : i32
    %c0_i32_1 = arith.constant 0 : i32
    return %c0_i32, %c0_i32_0 : i32, i32
  }
  func.func @transform_5(%arg0: i32, %arg1: i32) -> (i32, i32) {
    %c0_i32 = arith.constant 0 : i32
    %c0_i32_0 = arith.constant 0 : i32
    %c0_i32_1 = arith.constant 0 : i32
    return %c0_i32, %c0_i32_0 : i32, i32
  }
  func.func @transform_6(%arg0: i32, %arg1: i32) -> (i32, i32, i32, i32) {
    %c0_i32 = arith.constant 0 : i32
    %c0_i32_0 = arith.constant 0 : i32
    %c0_i32_1 = arith.constant 0 : i32
    %c0_i32_2 = arith.constant 0 : i32
    return %arg1, %c0_i32, %c0_i32_0, %c0_i32_1 : i32, i32, i32, i32
  }
  func.func @transform_7(%arg0: i32, %arg1: i32) -> (i32, i32, i32, i32) {
    %c0_i32 = arith.constant 0 : i32
    %c0_i32_0 = arith.constant 0 : i32
    %c0_i32_1 = arith.constant 0 : i32
    %c0_i32_2 = arith.constant 0 : i32
    return %arg1, %c0_i32, %c0_i32_0, %c0_i32_1 : i32, i32, i32, i32
  }
  func.func @transform_8(%arg0: i32, %arg1: i32) -> (i32, i32, i32) {
    %c0_i32 = arith.constant 0 : i32
    %c0_i32_0 = arith.constant 0 : i32
    %c0_i32_1 = arith.constant 0 : i32
    return %arg1, %c0_i32, %c0_i32_0 : i32, i32, i32
  }
  func.func @transform_9(%arg0: i32, %arg1: i32) -> (i32, i32, i32) {
    %c0_i32 = arith.constant 0 : i32
    %c0_i32_0 = arith.constant 0 : i32
    %c0_i32_1 = arith.constant 0 : i32
    return %arg1, %c0_i32, %c0_i32_0 : i32, i32, i32
  }
  func.func @transform_10(%arg0: i32, %arg1: i32) -> (i32, i32) {
    %c0_i32 = arith.constant 0 : i32
    %c0_i32_0 = arith.constant 0 : i32
    %c0_i32_1 = arith.constant 0 : i32
    return %c0_i32, %c0_i32_0 : i32, i32
  }
  func.func @transform_11(%arg0: i32, %arg1: i32) -> (i32, i32) {
    %c0_i32 = arith.constant 0 : i32
    %c0_i32_0 = arith.constant 0 : i32
    %c0_i32_1 = arith.constant 0 : i32
    return %c0_i32, %c0_i32_0 : i32, i32
  }
  func.func @transform_12(%arg0: i32, %arg1: i32) -> (i32, i32) {
    %c0_i32 = arith.constant 0 : i32
    %c0_i32_0 = arith.constant 0 : i32
    %c0_i32_1 = arith.constant 0 : i32
    return %c0_i32, %c0_i32_0 : i32, i32
  }
  func.func @transform_13(%arg0: i32, %arg1: i32) -> (i32, i32) {
    %c0_i32 = arith.constant 0 : i32
    %c0_i32_0 = arith.constant 0 : i32
    %c0_i32_1 = arith.constant 0 : i32
    return %c0_i32, %c0_i32_0 : i32, i32
  }
  func.func @transform_14(%arg0: i32, %arg1: i32) -> (i32, i32) {
    %c0_i32 = arith.constant 0 : i32
    %c0_i32_0 = arith.constant 0 : i32
    %c0_i32_1 = arith.constant 0 : i32
    return %c0_i32, %c0_i32_0 : i32, i32
  }
  func.func @transform_15(%arg0: i32, %arg1: i32) -> (i32, i32) {
    %c0_i32 = arith.constant 0 : i32
    %c0_i32_0 = arith.constant 0 : i32
    %c0_i32_1 = arith.constant 0 : i32
    return %c0_i32, %c0_i32_0 : i32, i32
  }
  func.func @transform_16(%arg0: i32, %arg1: i32) -> (i32, i32) {
    %c0_i32 = arith.constant 0 : i32
    %c0_i32_0 = arith.constant 0 : i32
    %c0_i32_1 = arith.constant 0 : i32
    return %c0_i32, %c0_i32_0 : i32, i32
  }
  func.func @transform_17(%arg0: i32, %arg1: i32) -> (i32, i32) {
    %c0_i32 = arith.constant 0 : i32
    %c0_i32_0 = arith.constant 0 : i32
    %c0_i32_1 = arith.constant 0 : i32
    return %c0_i32, %c0_i32_0 : i32, i32
  }
  func.func @transform_18(%arg0: i32, %arg1: i32) -> (i32, i32, i32) {
    %c0_i32 = arith.constant 0 : i32
    %c0_i32_0 = arith.constant 0 : i32
    %c0_i32_1 = arith.constant 0 : i32
    return %arg0, %c0_i32, %c0_i32_0 : i32, i32, i32
  }
}

module attributes {stable_mosaic.version = 11 : i64} {
  func.func @decoder_kernel(%arg0: i32, %arg1: i32, %arg2: memref<2x8x16xf32, #tpu.memory_space<vmem>>, %arg3: memref<2x16x8xf32, #tpu.memory_space<vmem>>, %arg4: memref<2x8x16xf32, #tpu.memory_space<vmem>>, %arg5: memref<8x16xf32, #tpu.memory_space<vmem>>, %arg6: memref<16x32xf32, #tpu.memory_space<vmem>>, %arg7: memref<1x32xf32, #tpu.memory_space<vmem>>, %arg8: memref<1x3x32x32xf32, #tpu.memory_space<vmem>>, %arg9: memref<1x3x32x32xf32, #tpu.memory_space<vmem>>, %arg10: memref<1x1x32xf32, #tpu.memory_space<vmem>>, %arg11: memref<1x1x32xf32, #tpu.memory_space<vmem>>, %arg12: memref<32x16xf32, #tpu.memory_space<vmem>>, %arg13: memref<1x16xf32, #tpu.memory_space<vmem>>, %arg14: memref<16x32xf32, #tpu.memory_space<vmem>>, %arg15: memref<1x32xf32, #tpu.memory_space<vmem>>, %arg16: memref<32x16xf32, #tpu.memory_space<vmem>>, %arg17: memref<1x16xf32, #tpu.memory_space<vmem>>, %arg18: memref<16x16xf32, #tpu.memory_space<vmem>>, %arg19: memref<1x16xf32, #tpu.memory_space<vmem>>, %arg20: memref<2x8x128xf32, #tpu.memory_space<vmem>>, %arg21: memref<2x8x16xf32, #tpu.memory_space<vmem>>, %arg22: memref<2x16x32xf32, #tpu.memory_space<vmem>>) attributes {dimension_semantics = [#tpu.dimension_semantics<parallel>, #tpu.dimension_semantics<arbitrary>], iteration_bounds = array<i64: 1, 2>, scalar_prefetch = 0 : i64, scratch_operands = 2 : i64, tpu.core_type = #tpu.core_type<tc>, window_params = [{transform_indices = @transform_0, window_bounds = array<i64: 2, 8, 16>}, {transform_indices = @transform_1, window_bounds = array<i64: 2, 16, 8>}, {transform_indices = @transform_2, window_bounds = array<i64: 2, 8, 16>}, {pipeline_mode = #tpu.pipeline_mode<synchronous>, transform_indices = @transform_3, window_bounds = array<i64: 8, 16>}, {pipeline_mode = #tpu.pipeline_mode<synchronous>, transform_indices = @transform_4, window_bounds = array<i64: 16, 32>}, {pipeline_mode = #tpu.pipeline_mode<synchronous>, transform_indices = @transform_5, window_bounds = array<i64: 1, 32>}, {transform_indices = @transform_6, window_bounds = array<i64: 1, 3, 32, 32>}, {transform_indices = @transform_7, window_bounds = array<i64: 1, 3, 32, 32>}, {transform_indices = @transform_8, window_bounds = array<i64: 1, 1, 32>}, {transform_indices = @transform_9, window_bounds = array<i64: 1, 1, 32>}, {pipeline_mode = #tpu.pipeline_mode<synchronous>, transform_indices = @transform_10, window_bounds = array<i64: 32, 16>}, {pipeline_mode = #tpu.pipeline_mode<synchronous>, transform_indices = @transform_11, window_bounds = array<i64: 1, 16>}, {pipeline_mode = #tpu.pipeline_mode<synchronous>, transform_indices = @transform_12, window_bounds = array<i64: 16, 32>}, {pipeline_mode = #tpu.pipeline_mode<synchronous>, transform_indices = @transform_13, window_bounds = array<i64: 1, 32>}, {pipeline_mode = #tpu.pipeline_mode<synchronous>, transform_indices = @transform_14, window_bounds = array<i64: 32, 16>}, {pipeline_mode = #tpu.pipeline_mode<synchronous>, transform_indices = @transform_15, window_bounds = array<i64: 1, 16>}, {pipeline_mode = #tpu.pipeline_mode<synchronous>, transform_indices = @transform_16, window_bounds = array<i64: 16, 16>}, {pipeline_mode = #tpu.pipeline_mode<synchronous>, transform_indices = @transform_17, window_bounds = array<i64: 1, 16>}, {transform_indices = @transform_18, window_bounds = array<i64: 2, 8, 128>}]} {
    %c0_i32 = arith.constant 0 : i32
    %0 = arith.cmpi eq, %arg1, %c0_i32 : i32
    %1 = arith.extui %0 : i1 to i32
    %c0_i32_0 = arith.constant 0 : i32
    %2 = arith.cmpi ne, %1, %c0_i32_0 : i32
    scf.if %2 {
      %c0_74 = arith.constant 0 : index
      %c0_75 = arith.constant 0 : index
      %c0_76 = arith.constant 0 : index
      %92 = vector.load %arg2[%c0_74, %c0_75, %c0_76] : memref<2x8x16xf32, #tpu.memory_space<vmem>>, vector<2x8x16xf32>
      %c0_77 = arith.constant 0 : index
      %c0_78 = arith.constant 0 : index
      %93 = vector.load %arg5[%c0_77, %c0_78] : memref<8x16xf32, #tpu.memory_space<vmem>>, vector<8x16xf32>
      %94 = vector.shape_cast %93 : vector<8x16xf32> to vector<1x8x16xf32>
      %95 = vector.broadcast %94 : vector<1x8x16xf32> to vector<2x8x16xf32>
      %96 = arith.addf %92, %95 : vector<2x8x16xf32>
      %c0_79 = arith.constant 0 : index
      %c0_80 = arith.constant 0 : index
      %c0_81 = arith.constant 0 : index
      %97 = vector.load %arg21[%c0_79, %c0_80, %c0_81] : memref<2x8x16xf32, #tpu.memory_space<vmem>>, vector<2x8x16xf32>
      tpu.vector_store %arg21[%c0_79, %c0_80, %c0_81], %96 {strides = array<i32>} : memref<2x8x16xf32, #tpu.memory_space<vmem>>, vector<2x8x16xf32>,
      %98 = vector.shape_cast %96 : vector<2x8x16xf32> to vector<16x16xf32>
      %c0_82 = arith.constant 0 : index
      %c0_83 = arith.constant 0 : index
      %99 = vector.load %arg6[%c0_82, %c0_83] : memref<16x32xf32, #tpu.memory_space<vmem>>, vector<16x32xf32>
      %cst_84 = arith.constant dense<0.000000e+00> : vector<16x32xf32>
      %100 = tpu.matmul %98, %99, %cst_84 {dimension_numbers = #tpu.dot_dimension_numbers<[1], [0], [0], [1], [0, 0, 1, 1], [], []>} : vector<16x16xf32>, vector<16x32xf32>, vector<16x32xf32> -> vector<16x32xf32>
      %c0_85 = arith.constant 0 : index
      %c0_86 = arith.constant 0 : index
      %101 = vector.load %arg7[%c0_85, %c0_86] : memref<1x32xf32, #tpu.memory_space<vmem>>, vector<1x32xf32>
      %102 = vector.broadcast %101 : vector<1x32xf32> to vector<16x32xf32>
      %103 = arith.addf %100, %102 : vector<16x32xf32>
      %cst_87 = arith.constant 0.000000e+00 : f32
      %104 = vector.broadcast %cst_87 : f32 to vector<2x8x32xf32>
      %c0_88 = arith.constant 0 : index
      %c0_89 = arith.constant 0 : index
      %c0_90 = arith.constant 0 : index
      %105 = vector.load %arg22[%c0_88, %c0_89, %c0_90] : memref<2x16x32xf32, #tpu.memory_space<vmem>>, vector<2x8x32xf32>
      tpu.vector_store %arg22[%c0_88, %c0_89, %c0_90], %104 {strides = array<i32>} : memref<2x16x32xf32, #tpu.memory_space<vmem>>, vector<2x8x32xf32>,
      %106 = vector.shape_cast %103 : vector<16x32xf32> to vector<2x8x32xf32>
      %c0_91 = arith.constant 0 : index
      %c8_92 = arith.constant 8 : index
      %c0_93 = arith.constant 0 : index
      %107 = vector.load %arg22[%c0_91, %c8_92, %c0_93] : memref<2x16x32xf32, #tpu.memory_space<vmem>>, vector<2x8x32xf32>
      tpu.vector_store %arg22[%c0_91, %c8_92, %c0_93], %106 {strides = array<i32>} : memref<2x16x32xf32, #tpu.memory_space<vmem>>, vector<2x8x32xf32>,
    } else {
    }
    %c0 = arith.constant 0 : index
    %c0_1 = arith.constant 0 : index
    %c0_2 = arith.constant 0 : index
    %3 = vector.load %arg21[%c0, %c0_1, %c0_2] : memref<2x8x16xf32, #tpu.memory_space<vmem>>, vector<2x8x16xf32>
    %c0_3 = arith.constant 0 : index
    %c8 = arith.constant 8 : index
    %c0_4 = arith.constant 0 : index
    %4 = vector.load %arg22[%c0_3, %c8, %c0_4] : memref<2x16x32xf32, #tpu.memory_space<vmem>>, vector<2x8x32xf32>
    %5 = vector.shape_cast %4 : vector<2x8x32xf32> to vector<16x32xf32>
    %c0_5 = arith.constant 0 : index
    %c6 = arith.constant 6 : index
    %c0_6 = arith.constant 0 : index
    %6 = vector.load %arg22[%c0_5, %c6, %c0_6] : memref<2x16x32xf32, #tpu.memory_space<vmem>>, vector<2x8x32xf32>
    %7 = vector.shape_cast %6 : vector<2x8x32xf32> to vector<16x32xf32>
    %c0_7 = arith.constant 0 : index
    %c0_8 = arith.constant 0 : index
    %c0_9 = arith.constant 0 : index
    %c0_10 = arith.constant 0 : index
    %8 = vector.load %arg8[%c0_7, %c0_8, %c0_9, %c0_10] : memref<1x3x32x32xf32, #tpu.memory_space<vmem>>, vector<1x1x32x32xf32>
    %9 = vector.shape_cast %8 : vector<1x1x32x32xf32> to vector<32x32xf32>
    %cst = arith.constant dense<0.000000e+00> : vector<16x32xf32>
    %10 = tpu.matmul %7, %9, %cst {dimension_numbers = #tpu.dot_dimension_numbers<[1], [0], [0], [1], [0, 0, 1, 1], [], []>} : vector<16x32xf32>, vector<32x32xf32>, vector<16x32xf32> -> vector<16x32xf32>
    %c0_11 = arith.constant 0 : index
    %c0_12 = arith.constant 0 : index
    %c0_13 = arith.constant 0 : index
    %c0_14 = arith.constant 0 : index
    %11 = vector.load %arg9[%c0_11, %c0_12, %c0_13, %c0_14] : memref<1x3x32x32xf32, #tpu.memory_space<vmem>>, vector<1x1x32x32xf32>
    %12 = vector.shape_cast %11 : vector<1x1x32x32xf32> to vector<32x32xf32>
    %cst_15 = arith.constant dense<0.000000e+00> : vector<16x32xf32>
    %13 = tpu.matmul %7, %12, %cst_15 {dimension_numbers = #tpu.dot_dimension_numbers<[1], [0], [0], [1], [0, 0, 1, 1], [], []>} : vector<16x32xf32>, vector<32x32xf32>, vector<16x32xf32> -> vector<16x32xf32>
    %c0_16 = arith.constant 0 : index
    %c7 = arith.constant 7 : index
    %c0_17 = arith.constant 0 : index
    %14 = vector.load %arg22[%c0_16, %c7, %c0_17] : memref<2x16x32xf32, #tpu.memory_space<vmem>>, vector<2x8x32xf32>
    %15 = vector.shape_cast %14 : vector<2x8x32xf32> to vector<16x32xf32>
    %c0_18 = arith.constant 0 : index
    %c1 = arith.constant 1 : index
    %c0_19 = arith.constant 0 : index
    %c0_20 = arith.constant 0 : index
    %16 = vector.load %arg8[%c0_18, %c1, %c0_19, %c0_20] : memref<1x3x32x32xf32, #tpu.memory_space<vmem>>, vector<1x1x32x32xf32>
    %17 = vector.shape_cast %16 : vector<1x1x32x32xf32> to vector<32x32xf32>
    %cst_21 = arith.constant dense<0.000000e+00> : vector<16x32xf32>
    %18 = tpu.matmul %15, %17, %cst_21 {dimension_numbers = #tpu.dot_dimension_numbers<[1], [0], [0], [1], [0, 0, 1, 1], [], []>} : vector<16x32xf32>, vector<32x32xf32>, vector<16x32xf32> -> vector<16x32xf32>
    %19 = arith.addf %10, %18 : vector<16x32xf32>
    %c0_22 = arith.constant 0 : index
    %c1_23 = arith.constant 1 : index
    %c0_24 = arith.constant 0 : index
    %c0_25 = arith.constant 0 : index
    %20 = vector.load %arg9[%c0_22, %c1_23, %c0_24, %c0_25] : memref<1x3x32x32xf32, #tpu.memory_space<vmem>>, vector<1x1x32x32xf32>
    %21 = vector.shape_cast %20 : vector<1x1x32x32xf32> to vector<32x32xf32>
    %cst_26 = arith.constant dense<0.000000e+00> : vector<16x32xf32>
    %22 = tpu.matmul %15, %21, %cst_26 {dimension_numbers = #tpu.dot_dimension_numbers<[1], [0], [0], [1], [0, 0, 1, 1], [], []>} : vector<16x32xf32>, vector<32x32xf32>, vector<16x32xf32> -> vector<16x32xf32>
    %23 = arith.addf %13, %22 : vector<16x32xf32>
    %c0_27 = arith.constant 0 : index
    %c8_28 = arith.constant 8 : index
    %c0_29 = arith.constant 0 : index
    %24 = vector.load %arg22[%c0_27, %c8_28, %c0_29] : memref<2x16x32xf32, #tpu.memory_space<vmem>>, vector<2x8x32xf32>
    %25 = vector.shape_cast %24 : vector<2x8x32xf32> to vector<16x32xf32>
    %c0_30 = arith.constant 0 : index
    %c2 = arith.constant 2 : index
    %c0_31 = arith.constant 0 : index
    %c0_32 = arith.constant 0 : index
    %26 = vector.load %arg8[%c0_30, %c2, %c0_31, %c0_32] : memref<1x3x32x32xf32, #tpu.memory_space<vmem>>, vector<1x1x32x32xf32>
    %27 = vector.shape_cast %26 : vector<1x1x32x32xf32> to vector<32x32xf32>
    %cst_33 = arith.constant dense<0.000000e+00> : vector<16x32xf32>
    %28 = tpu.matmul %25, %27, %cst_33 {dimension_numbers = #tpu.dot_dimension_numbers<[1], [0], [0], [1], [0, 0, 1, 1], [], []>} : vector<16x32xf32>, vector<32x32xf32>, vector<16x32xf32> -> vector<16x32xf32>
    %29 = arith.addf %19, %28 : vector<16x32xf32>
    %c0_34 = arith.constant 0 : index
    %c2_35 = arith.constant 2 : index
    %c0_36 = arith.constant 0 : index
    %c0_37 = arith.constant 0 : index
    %30 = vector.load %arg9[%c0_34, %c2_35, %c0_36, %c0_37] : memref<1x3x32x32xf32, #tpu.memory_space<vmem>>, vector<1x1x32x32xf32>
    %31 = vector.shape_cast %30 : vector<1x1x32x32xf32> to vector<32x32xf32>
    %cst_38 = arith.constant dense<0.000000e+00> : vector<16x32xf32>
    %32 = tpu.matmul %25, %31, %cst_38 {dimension_numbers = #tpu.dot_dimension_numbers<[1], [0], [0], [1], [0, 0, 1, 1], [], []>} : vector<16x32xf32>, vector<32x32xf32>, vector<16x32xf32> -> vector<16x32xf32>
    %33 = arith.addf %23, %32 : vector<16x32xf32>
    %c0_39 = arith.constant 0 : index
    %c0_40 = arith.constant 0 : index
    %c0_41 = arith.constant 0 : index
    %34 = vector.load %arg10[%c0_39, %c0_40, %c0_41] : memref<1x1x32xf32, #tpu.memory_space<vmem>>, vector<1x1x32xf32>
    %35 = vector.shape_cast %34 : vector<1x1x32xf32> to vector<1x32xf32>
    %36 = vector.broadcast %35 : vector<1x32xf32> to vector<16x32xf32>
    %37 = arith.addf %29, %36 : vector<16x32xf32>
    %c0_42 = arith.constant 0 : index
    %c0_43 = arith.constant 0 : index
    %c0_44 = arith.constant 0 : index
    %38 = vector.load %arg11[%c0_42, %c0_43, %c0_44] : memref<1x1x32xf32, #tpu.memory_space<vmem>>, vector<1x1x32xf32>
    %39 = vector.shape_cast %38 : vector<1x1x32xf32> to vector<1x32xf32>
    %40 = vector.broadcast %39 : vector<1x32xf32> to vector<16x32xf32>
    %41 = arith.addf %33, %40 : vector<16x32xf32>
    %42 = arith.negf %41 : vector<16x32xf32>
    %43 = math.exp %42 : vector<16x32xf32>
    %cst_45 = arith.constant 1.000000e+00 : f32
    %44 = vector.broadcast %cst_45 : f32 to vector<16x32xf32>
    %45 = arith.addf %44, %43 : vector<16x32xf32>
    %46 = arith.divf %44, %45 : vector<16x32xf32>
    %47 = arith.mulf %37, %46 : vector<16x32xf32>
    %c0_46 = arith.constant 0 : index
    %c0_47 = arith.constant 0 : index
    %48 = vector.load %arg12[%c0_46, %c0_47] : memref<32x16xf32, #tpu.memory_space<vmem>>, vector<32x16xf32>
    %cst_48 = arith.constant dense<0.000000e+00> : vector<16x16xf32>
    %49 = tpu.matmul %47, %48, %cst_48 {dimension_numbers = #tpu.dot_dimension_numbers<[1], [0], [0], [1], [0, 0, 1, 1], [], []>} : vector<16x32xf32>, vector<32x16xf32>, vector<16x16xf32> -> vector<16x16xf32>
    %c0_49 = arith.constant 0 : index
    %c0_50 = arith.constant 0 : index
    %50 = vector.load %arg13[%c0_49, %c0_50] : memref<1x16xf32, #tpu.memory_space<vmem>>, vector<1x16xf32>
    %51 = vector.broadcast %50 : vector<1x16xf32> to vector<16x16xf32>
    %52 = arith.addf %49, %51 : vector<16x16xf32>
    %53 = vector.shape_cast %52 : vector<16x16xf32> to vector<2x8x16xf32>
    %54 = arith.addf %53, %3 : vector<2x8x16xf32>
    %cst_51 = arith.constant 5.000000e-01 : f32
    %55 = vector.broadcast %cst_51 : f32 to vector<2x8x16xf32>
    %56 = arith.mulf %54, %55 : vector<2x8x16xf32>
    %c0_52 = arith.constant 0 : index
    %c0_53 = arith.constant 0 : index
    %c0_54 = arith.constant 0 : index
    %57 = vector.load %arg3[%c0_52, %c0_53, %c0_54] : memref<2x16x8xf32, #tpu.memory_space<vmem>>, vector<2x16x8xf32>
    "tpu.trace_start"() <{level = 10 : i32, message = "btd,bds->bts"}> : () -> ()
    %cst_55 = arith.constant dense<0.000000e+00> : vector<2x8x8xf32>
    %58 = tpu.matmul %56, %57, %cst_55 {dimension_numbers = #tpu.dot_dimension_numbers<[2], [1], [1], [2], [0, 0, 0, 1, 1, 2], [0], [0]>} : vector<2x8x16xf32>, vector<2x16x8xf32>, vector<2x8x8xf32> -> vector<2x8x8xf32>
    "tpu.trace_stop"() : () -> ()
    %cst_56 = arith.constant dense<0xFF800000> : vector<2x8xf32>
    %59 = vector.multi_reduction <maximumf>, %58, %cst_56 [2] : vector<2x8x8xf32> to vector<2x8xf32>
    %60 = vector.shape_cast %59 : vector<2x8xf32> to vector<2x8x1xf32>
    %61 = vector.broadcast %60 : vector<2x8x1xf32> to vector<2x8x8xf32>
    %62 = arith.subf %58, %61 : vector<2x8x8xf32>
    %63 = math.exp %62 : vector<2x8x8xf32>
    %cst_57 = arith.constant dense<0.000000e+00> : vector<2x8xf32>
    %64 = vector.multi_reduction <add>, %63, %cst_57 [2] : vector<2x8x8xf32> to vector<2x8xf32>
    %65 = vector.shape_cast %64 : vector<2x8xf32> to vector<2x8x1xf32>
    %66 = tpu.reciprocal %65 {approx = true} : vector<2x8x1xf32> -> vector<2x8x1xf32>
    %67 = arith.mulf %65, %66 : vector<2x8x1xf32>
    %cst_58 = arith.constant 2.000000e+00 : f32
    %68 = vector.broadcast %cst_58 : f32 to vector<2x8x1xf32>
    %69 = arith.subf %68, %67 : vector<2x8x1xf32>
    %70 = arith.mulf %66, %69 : vector<2x8x1xf32>
    %71 = vector.broadcast %70 : vector<2x8x1xf32> to vector<2x8x8xf32>
    %72 = arith.mulf %63, %71 : vector<2x8x8xf32>
    %c0_59 = arith.constant 0 : index
    %c0_60 = arith.constant 0 : index
    %c0_61 = arith.constant 0 : index
    %73 = vector.load %arg4[%c0_59, %c0_60, %c0_61] : memref<2x8x16xf32, #tpu.memory_space<vmem>>, vector<2x8x16xf32>
    "tpu.trace_start"() <{level = 10 : i32, message = "bts,bsd->btd"}> : () -> ()
    %cst_62 = arith.constant dense<0.000000e+00> : vector<2x8x16xf32>
    %74 = tpu.matmul %72, %73, %cst_62 {dimension_numbers = #tpu.dot_dimension_numbers<[2], [1], [1], [2], [0, 0, 0, 1, 1, 2], [0], [0]>} : vector<2x8x8xf32>, vector<2x8x16xf32>, vector<2x8x16xf32> -> vector<2x8x16xf32>
    "tpu.trace_stop"() : () -> ()
    %75 = vector.shape_cast %74 : vector<2x8x16xf32> to vector<16x16xf32>
    %c0_63 = arith.constant 0 : index
    %c0_64 = arith.constant 0 : index
    %76 = vector.load %arg14[%c0_63, %c0_64] : memref<16x32xf32, #tpu.memory_space<vmem>>, vector<16x32xf32>
    %cst_65 = arith.constant dense<0.000000e+00> : vector<16x32xf32>
    %77 = tpu.matmul %75, %76, %cst_65 {dimension_numbers = #tpu.dot_dimension_numbers<[1], [0], [0], [1], [0, 0, 1, 1], [], []>} : vector<16x16xf32>, vector<16x32xf32>, vector<16x32xf32> -> vector<16x32xf32>
    %c0_66 = arith.constant 0 : index
    %c0_67 = arith.constant 0 : index
    %78 = vector.load %arg15[%c0_66, %c0_67] : memref<1x32xf32, #tpu.memory_space<vmem>>, vector<1x32xf32>
    %79 = vector.broadcast %78 : vector<1x32xf32> to vector<16x32xf32>
    %80 = arith.addf %77, %79 : vector<16x32xf32>
    %81 = arith.addf %47, %80 : vector<16x32xf32>
    %cst_68 = arith.constant 5.000000e-01 : f32
    %82 = vector.broadcast %cst_68 : f32 to vector<16x32xf32>
    %83 = arith.mulf %81, %82 : vector<16x32xf32>
    %84 = arith.addf %83, %5 : vector<16x32xf32>
    %cst_69 = arith.constant 5.000000e-01 : f32
    %85 = vector.broadcast %cst_69 : f32 to vector<16x32xf32>
    %86 = arith.mulf %84, %85 : vector<16x32xf32>
    %87 = vector.shape_cast %86 : vector<16x32xf32> to vector<2x8x32xf32>
    %c0_70 = arith.constant 0 : index
    %c8_71 = arith.constant 8 : index
    %c0_72 = arith.constant 0 : index
    %88 = vector.load %arg22[%c0_70, %c8_71, %c0_72] : memref<2x16x32xf32, #tpu.memory_space<vmem>>, vector<2x8x32xf32>
    tpu.vector_store %arg22[%c0_70, %c8_71, %c0_72], %87 {strides = array<i32>} : memref<2x16x32xf32, #tpu.memory_space<vmem>>, vector<2x8x32xf32>,
    %c1_i32 = arith.constant 1 : i32
    %89 = arith.cmpi eq, %arg1, %c1_i32 : i32
    %90 = arith.extui %89 : i1 to i32
    %c0_i32_73 = arith.constant 0 : i32
    %91 = arith.cmpi ne, %90, %c0_i32_73 : i32
    scf.if %91 {
      %c0_74 = arith.constant 0 : index
      %c0_75 = arith.constant 0 : index
      %92 = vector.load %arg16[%c0_74, %c0_75] : memref<32x16xf32, #tpu.memory_space<vmem>>, vector<32x16xf32>
      %cst_76 = arith.constant dense<0.000000e+00> : vector<16x16xf32>
      %93 = tpu.matmul %86, %92, %cst_76 {dimension_numbers = #tpu.dot_dimension_numbers<[1], [0], [0], [1], [0, 0, 1, 1], [], []>} : vector<16x32xf32>, vector<32x16xf32>, vector<16x16xf32> -> vector<16x16xf32>
      %c0_77 = arith.constant 0 : index
      %c0_78 = arith.constant 0 : index
      %94 = vector.load %arg17[%c0_77, %c0_78] : memref<1x16xf32, #tpu.memory_space<vmem>>, vector<1x16xf32>
      %95 = vector.broadcast %94 : vector<1x16xf32> to vector<16x16xf32>
      %96 = arith.addf %93, %95 : vector<16x16xf32>
      %c0_79 = arith.constant 0 : index
      %c0_80 = arith.constant 0 : index
      %97 = vector.load %arg18[%c0_79, %c0_80] : memref<16x16xf32, #tpu.memory_space<vmem>>, vector<16x16xf32>
      %cst_81 = arith.constant dense<0.000000e+00> : vector<16x16xf32>
      %98 = tpu.matmul %96, %97, %cst_81 {dimension_numbers = #tpu.dot_dimension_numbers<[1], [0], [0], [1], [0, 0, 1, 1], [], []>} : vector<16x16xf32>, vector<16x16xf32>, vector<16x16xf32> -> vector<16x16xf32>
      %c0_82 = arith.constant 0 : index
      %c0_83 = arith.constant 0 : index
      %99 = vector.load %arg19[%c0_82, %c0_83] : memref<1x16xf32, #tpu.memory_space<vmem>>, vector<1x16xf32>
      %100 = vector.broadcast %99 : vector<1x16xf32> to vector<16x16xf32>
      %101 = arith.addf %98, %100 : vector<16x16xf32>
      %102 = vector.shape_cast %72 : vector<2x8x8xf32> to vector<16x8xf32>
      %cst_84 = arith.constant 0.000000e+00 : f32
      %103 = vector.broadcast %cst_84 : f32 to vector<16x104xf32>
      %104 = tpu.concatenate %101, %102, %103 in 1 : vector<16x16xf32>, vector<16x8xf32>, vector<16x104xf32> -> vector<16x128xf32>
      %105 = vector.shape_cast %104 : vector<16x128xf32> to vector<2x8x128xf32>
      %c0_85 = arith.constant 0 : index
      %c0_86 = arith.constant 0 : index
      %c0_87 = arith.constant 0 : index
      %106 = vector.load %arg20[%c0_85, %c0_86, %c0_87] : memref<2x8x128xf32, #tpu.memory_space<vmem>>, vector<2x8x128xf32>
      tpu.vector_store %arg20[%c0_85, %c0_86, %c0_87], %105 {strides = array<i32>} : memref<2x8x128xf32, #tpu.memory_space<vmem>>, vector<2x8x128xf32>,
    } else {
    }
    return
  }
  func.func @transform_0(%arg0: i32, %arg1: i32) -> (i32, i32, i32) {
    %c0_i32 = arith.constant 0 : i32
    %c0_i32_0 = arith.constant 0 : i32
    %c0_i32_1 = arith.constant 0 : i32
    return %arg0, %c0_i32, %c0_i32_0 : i32, i32, i32
  }
  func.func @transform_1(%arg0: i32, %arg1: i32) -> (i32, i32, i32) {
    %c0_i32 = arith.constant 0 : i32
    %c0_i32_0 = arith.constant 0 : i32
    %c0_i32_1 = arith.constant 0 : i32
    return %arg0, %c0_i32, %c0_i32_0 : i32, i32, i32
  }
  func.func @transform_2(%arg0: i32, %arg1: i32) -> (i32, i32, i32) {
    %c0_i32 = arith.constant 0 : i32
    %c0_i32_0 = arith.constant 0 : i32
    %c0_i32_1 = arith.constant 0 : i32
    return %arg0, %c0_i32, %c0_i32_0 : i32, i32, i32
  }
  func.func @transform_3(%arg0: i32, %arg1: i32) -> (i32, i32) {
    %c0_i32 = arith.constant 0 : i32
    %c0_i32_0 = arith.constant 0 : i32
    %c0_i32_1 = arith.constant 0 : i32
    return %c0_i32, %c0_i32_0 : i32, i32
  }
  func.func @transform_4(%arg0: i32, %arg1: i32) -> (i32, i32) {
    %c0_i32 = arith.constant 0 : i32
    %c0_i32_0 = arith.constant 0 : i32
    %c0_i32_1 = arith.constant 0 : i32
    return %c0_i32, %c0_i32_0 : i32, i32
  }
  func.func @transform_5(%arg0: i32, %arg1: i32) -> (i32, i32) {
    %c0_i32 = arith.constant 0 : i32
    %c0_i32_0 = arith.constant 0 : i32
    %c0_i32_1 = arith.constant 0 : i32
    return %c0_i32, %c0_i32_0 : i32, i32
  }
  func.func @transform_6(%arg0: i32, %arg1: i32) -> (i32, i32, i32, i32) {
    %c0_i32 = arith.constant 0 : i32
    %c0_i32_0 = arith.constant 0 : i32
    %c0_i32_1 = arith.constant 0 : i32
    %c0_i32_2 = arith.constant 0 : i32
    return %arg1, %c0_i32, %c0_i32_0, %c0_i32_1 : i32, i32, i32, i32
  }
  func.func @transform_7(%arg0: i32, %arg1: i32) -> (i32, i32, i32, i32) {
    %c0_i32 = arith.constant 0 : i32
    %c0_i32_0 = arith.constant 0 : i32
    %c0_i32_1 = arith.constant 0 : i32
    %c0_i32_2 = arith.constant 0 : i32
    return %arg1, %c0_i32, %c0_i32_0, %c0_i32_1 : i32, i32, i32, i32
  }
  func.func @transform_8(%arg0: i32, %arg1: i32) -> (i32, i32, i32) {
    %c0_i32 = arith.constant 0 : i32
    %c0_i32_0 = arith.constant 0 : i32
    %c0_i32_1 = arith.constant 0 : i32
    return %arg1, %c0_i32, %c0_i32_0 : i32, i32, i32
  }
  func.func @transform_9(%arg0: i32, %arg1: i32) -> (i32, i32, i32) {
    %c0_i32 = arith.constant 0 : i32
    %c0_i32_0 = arith.constant 0 : i32
    %c0_i32_1 = arith.constant 0 : i32
    return %arg1, %c0_i32, %c0_i32_0 : i32, i32, i32
  }
  func.func @transform_10(%arg0: i32, %arg1: i32) -> (i32, i32) {
    %c0_i32 = arith.constant 0 : i32
    %c0_i32_0 = arith.constant 0 : i32
    %c0_i32_1 = arith.constant 0 : i32
    return %c0_i32, %c0_i32_0 : i32, i32
  }
  func.func @transform_11(%arg0: i32, %arg1: i32) -> (i32, i32) {
    %c0_i32 = arith.constant 0 : i32
    %c0_i32_0 = arith.constant 0 : i32
    %c0_i32_1 = arith.constant 0 : i32
    return %c0_i32, %c0_i32_0 : i32, i32
  }
  func.func @transform_12(%arg0: i32, %arg1: i32) -> (i32, i32) {
    %c0_i32 = arith.constant 0 : i32
    %c0_i32_0 = arith.constant 0 : i32
    %c0_i32_1 = arith.constant 0 : i32
    return %c0_i32, %c0_i32_0 : i32, i32
  }
  func.func @transform_13(%arg0: i32, %arg1: i32) -> (i32, i32) {
    %c0_i32 = arith.constant 0 : i32
    %c0_i32_0 = arith.constant 0 : i32
    %c0_i32_1 = arith.constant 0 : i32
    return %c0_i32, %c0_i32_0 : i32, i32
  }
  func.func @transform_14(%arg0: i32, %arg1: i32) -> (i32, i32) {
    %c0_i32 = arith.constant 0 : i32
    %c0_i32_0 = arith.constant 0 : i32
    %c0_i32_1 = arith.constant 0 : i32
    return %c0_i32, %c0_i32_0 : i32, i32
  }
  func.func @transform_15(%arg0: i32, %arg1: i32) -> (i32, i32) {
    %c0_i32 = arith.constant 0 : i32
    %c0_i32_0 = arith.constant 0 : i32
    %c0_i32_1 = arith.constant 0 : i32
    return %c0_i32, %c0_i32_0 : i32, i32
  }
  func.func @transform_16(%arg0: i32, %arg1: i32) -> (i32, i32) {
    %c0_i32 = arith.constant 0 : i32
    %c0_i32_0 = arith.constant 0 : i32
    %c0_i32_1 = arith.constant 0 : i32
    return %c0_i32, %c0_i32_0 : i32, i32
  }
  func.func @transform_17(%arg0: i32, %arg1: i32) -> (i32, i32) {
    %c0_i32 = arith.constant 0 : i32
    %c0_i32_0 = arith.constant 0 : i32
    %c0_i32_1 = arith.constant 0 : i32
    return %c0_i32, %c0_i32_0 : i32, i32
  }
  func.func @transform_18(%arg0: i32, %arg1: i32) -> (i32, i32, i32) {
    %c0_i32 = arith.constant 0 : i32
    %c0_i32_0 = arith.constant 0 : i32
    %c0_i32_1 = arith.constant 0 : i32
    return %arg0, %c0_i32, %c0_i32_0 : i32, i32, i32
  }
}

</mosaic_0001>

<llo_original>
// kernel: tpu_custom_call.1
$region0: #{tpu_custom_call.1}
  #allocation0 [shape = 'u32[]', space=smem, size = 0x4, offset = 0x4, fixed_abs, tag = 'smem constant byte address 0x4 - core index']
  #allocation1 [shape = 'u32[144,128]{1,0:T(1,128)}', space=vmem, size = 0x12000, scoped, tag = 'internal scratch']
  #allocation2 [shape = 'f32[2,8,16]{2,1,0:T(8,128)}', space=vmem, size = 0x2000, scoped, tag = 'scratch operand']
  #allocation3 [shape = 'f32[2,16,32]{2,1,0:T(8,128)}', space=vmem, size = 0x4000, scoped, tag = 'scratch operand']
  %s0 = inlined_call_operand.hbm [shape: f32[2,8,16], index: 0, kind: input, shape index: {}]
  %s1 = inlined_call_operand.hbm [shape: f32[2,16,8], index: 1, kind: input, shape index: {}]
  %s2 = inlined_call_operand.hbm [shape: f32[2,8,16], index: 2, kind: input, shape index: {}]
  %s3 = inlined_call_operand.hbm [shape: f32[8,16], index: 3, kind: input, shape index: {}]
  %s4 = inlined_call_operand.hbm [shape: f32[16,32], index: 4, kind: input, shape index: {}]
  %s5 = inlined_call_operand.hbm [shape: f32[1,32], index: 5, kind: input, shape index: {}]
  %s6 = inlined_call_operand.hbm [shape: f32[2,3,32,32], index: 6, kind: input, shape index: {}]
  %s7 = inlined_call_operand.hbm [shape: f32[2,3,32,32], index: 7, kind: input, shape index: {}]
  %s8 = inlined_call_operand.hbm [shape: f32[2,1,32], index: 8, kind: input, shape index: {}]
  %s9 = inlined_call_operand.hbm [shape: f32[2,1,32], index: 9, kind: input, shape index: {}]
  %s10 = inlined_call_operand.hbm [shape: f32[32,16], index: 10, kind: input, shape index: {}]
  %s11 = inlined_call_operand.hbm [shape: f32[1,16], index: 11, kind: input, shape index: {}]
  %s12 = inlined_call_operand.hbm [shape: f32[16,32], index: 12, kind: input, shape index: {}]
  %s13 = inlined_call_operand.hbm [shape: f32[1,32], index: 13, kind: input, shape index: {}]
  %s14 = inlined_call_operand.hbm [shape: f32[32,16], index: 14, kind: input, shape index: {}]
  %s15 = inlined_call_operand.hbm [shape: f32[1,16], index: 15, kind: input, shape index: {}]
  %s16 = inlined_call_operand.hbm [shape: f32[16,16], index: 16, kind: input, shape index: {}]
  %s17 = inlined_call_operand.hbm [shape: f32[1,16], index: 17, kind: input, shape index: {}]
  %s18 = inlined_call_operand.hbm [shape: f32[2,8,128], index: 18, kind: output, shape index: {}]
  %s19 = sld [smem:[#allocation0]]
  $region185: #{tpu_custom_call.1} parent=0
    _
  %s21 = ssub.s32 1, %s19
  %s22 = scalar_select 0, %s21, %s19
  $region1: #{tpu_custom_call.1} parent=0
    #allocation4 [shape = 'u8[8192]{0}', space=vmem, size = 0x2000, scoped, tag = 'input window, operand 0, single buffered']
    #allocation5 [shape = 's32[2]{0}', space=sflag, size = 0x8, scoped, tag = 'scoped memory for tpu_custom_call.1']
    #allocation6 [shape = 's32[2]{0}', space=sflag, size = 0x8, scoped, tag = 'scoped memory for tpu_custom_call.1']
    #allocation7 [shape = 'u8[16384]{0}', space=vmem, size = 0x4000, scoped, tag = 'input window, operand 1, single buffered']
    #allocation8 [shape = 's32[1]{0}', space=sflag, size = 0x4, scoped, tag = 'scoped memory for tpu_custom_call.1']
    #allocation9 [shape = 'u8[8192]{0}', space=vmem, size = 0x2000, scoped, tag = 'input window, operand 2, single buffered']
    #allocation10 [shape = 'u8[4096]{0}', space=vmem, size = 0x1000, scoped, tag = 'input window, operand 3, single buffered']
    #allocation11 [shape = 's32[1]{0}', space=sflag, size = 0x4, scoped, tag = 'scoped memory for tpu_custom_call.1']
    #allocation12 [shape = 'u8[8192]{0}', space=vmem, size = 0x2000, scoped, tag = 'input window, operand 4, single buffered']
    #allocation13 [shape = 'u8[512]{0}', space=vmem, size = 0x400, scoped, tag = 'input window, operand 5, single buffered']
    #allocation14 [shape = 's32[1]{0}', space=sflag, size = 0x4, scoped, tag = 'scoped memory for tpu_custom_call.1']
    #allocation15 [shape = 'u8[98304]{0}', space=vmem, size = 0x18000, scoped, tag = 'input window, operand 6']
    #allocation16 [shape = 'u8[98304]{0}', space=vmem, size = 0x18000, scoped, tag = 'input window, operand 7']
    #allocation17 [shape = 'u8[1024]{0}', space=vmem, size = 0x400, scoped, tag = 'input window, operand 8']
    #allocation18 [shape = 'u8[1024]{0}', space=vmem, size = 0x400, scoped, tag = 'input window, operand 9']
    #allocation19 [shape = 'u8[16384]{0}', space=vmem, size = 0x4000, scoped, tag = 'input window, operand 10, single buffered']
    #allocation20 [shape = 'u8[512]{0}', space=vmem, size = 0x400, scoped, tag = 'input window, operand 11, single buffered']
    #allocation21 [shape = 'u8[8192]{0}', space=vmem, size = 0x2000, scoped, tag = 'input window, operand 12, single buffered']
    #allocation22 [shape = 'u8[512]{0}', space=vmem, size = 0x400, scoped, tag = 'input window, operand 13, single buffered']
    #allocation23 [shape = 's32[1]{0}', space=sflag, size = 0x4, scoped, tag = 'scoped memory for tpu_custom_call.1']
    #allocation24 [shape = 'u8[16384]{0}', space=vmem, size = 0x4000, scoped, tag = 'input window, operand 14, single buffered']
    #allocation25 [shape = 'u8[512]{0}', space=vmem, size = 0x400, scoped, tag = 'input window, operand 15, single buffered']
    #allocation26 [shape = 's32[1]{0}', space=sflag, size = 0x4, scoped, tag = 'scoped memory for tpu_custom_call.1']
    #allocation27 [shape = 'u8[8192]{0}', space=vmem, size = 0x2000, scoped, tag = 'input window, operand 16, single buffered']
    #allocation28 [shape = 'u8[512]{0}', space=vmem, size = 0x400, scoped, tag = 'input window, operand 17, single buffered']
    #allocation29 [shape = 's32[1]{0}', space=sflag, size = 0x4, scoped, tag = 'scoped memory for tpu_custom_call.1']
    #allocation30 [shape = 'u8[8192]{0}', space=vmem, size = 0x2000, scoped, tag = 'output window, operand 0, single buffered']
    %23 = vsyncpa [#allocation5], 0
    %24 = vsyncpa [#allocation8], 0
    %25 = vsyncpa [#allocation11], 0
    %26 = vsyncpa [#allocation14], 0
    %27 = vsyncpa [#allocation23], 0
    %28 = vsyncpa [#allocation26], 0
    %29 = vsyncpa [#allocation29], 0
    %30 = vsyncpa [#allocation6], 0
    loop: start=0, step=1, limit=4
    $region2: #{tpu_custom_call.1} parent=1 // loop_pre_header
      _
    $region3: #{tpu_custom_call.1} parent=1 // loop_header
      %s32 = sphi 0, %s36
      %p33 = scmp.ge.s32.totalorder %s32, 4
      %s39 = sphi 0, %s51
      %s40 = sphi 0, %s47
      %s41 = sphi 0, %s39
      %s42 = sphi 0, %s40
      %s43 = sphi 0, %s41
      %s44 = sphi 0, %s42
      %s54 = sphi 0, %s56
      %s57 = sphi 0, %s54
      %s58 = sphi 0, %s57
      %s74 = sphi 0, %s58
      %s80 = sphi 0, %s82
      %s83 = sphi 0, %s80
      %s84 = sphi 0, %s83
      %s100 = sphi 0, %s84
      %s106 = sphi 0, %s108
      %s109 = sphi 0, %s106
      %s110 = sphi 0, %s109
      %s126 = sphi 0, %s110
      %s130 = sphi 0, %s130
      %s132 = sphi 0, %s130
      %s133 = sphi 0, %s132
      %s147 = sphi 0, %s133
      %s151 = sphi 0, %s151
      %s153 = sphi 0, %s151
      %s154 = sphi 0, %s153
      %s168 = sphi 0, %s154
      %s172 = sphi 0, %s172
      %s174 = sphi 0, %s172
      %s175 = sphi 0, %s174
      %s189 = sphi 0, %s175
      %s195 = sphi 0, %s197
      %s198 = sphi 0, %s195
      %s199 = sphi 0, %s198
      %s215 = sphi 0, %s199
      %s221 = sphi 0, %s223
      %s224 = sphi 0, %s221
      %s225 = sphi 0, %s224
      %s241 = sphi 0, %s225
      %s247 = sphi 0, %s249
      %s250 = sphi 0, %s247
      %s251 = sphi 0, %s250
      %s267 = sphi 0, %s251
      %s273 = sphi 0, %s275
      %s276 = sphi 0, %s273
      %s277 = sphi 0, %s276
      %s293 = sphi 0, %s277
      %s297 = sphi 0, %s297
      %s299 = sphi 0, %s297
      %s300 = sphi 0, %s299
      %s314 = sphi 0, %s300
      %s318 = sphi 0, %s318
      %s320 = sphi 0, %s318
      %s321 = sphi 0, %s320
      %s335 = sphi 0, %s321
      %s339 = sphi 0, %s339
      %s341 = sphi 0, %s339
      %s342 = sphi 0, %s341
      %s356 = sphi 0, %s342
      %s360 = sphi 0, %s360
      %s362 = sphi 0, %s360
      %s363 = sphi 0, %s362
      %s377 = sphi 0, %s363
      %s381 = sphi 0, %s381
      %s383 = sphi 0, %s381
      %s384 = sphi 0, %s383
      %s398 = sphi 0, %s384
      %s402 = sphi 0, %s402
      %s404 = sphi 0, %s402
      %s405 = sphi 0, %s404
      %s419 = sphi 0, %s405
      %s423 = sphi 0, %s423
      %s425 = sphi 0, %s423
      %s426 = sphi 0, %s425
      %s440 = sphi 0, %s426
      %s444 = sphi 0, %s444
      %s446 = sphi 0, %s444
      %s447 = sphi 0, %s446
      %s461 = sphi 0, %s447
      %s467 = sphi 0, %s469
      %s470 = sphi 0, %s467
      %s471 = sphi 0, %s470
      %s487 = sphi 0, %s471
    $region4: #{tpu_custom_call.1} parent=1 // loop_header_branch
      %35 = sbr.rel (%p33) target = $region8
    $region5: #{tpu_custom_call.1} parent=1 // loop_body
      %s37 = ssub.s32 %s32, 1
      %s38 = ssub.s32 %s32, 2
      %s45 = sadd.s32 1, %s40
      %p46 = scmp.ge.s32.totalorder %s45, 2
      %s47 = scalar_select %p46, 0, %s45
      %s48 = sadd.s32 1, %s39
      %s49 = scalar_select %p46, %s48, %s39
      %p50 = scmp.ge.s32.totalorder %s49, 1
      %s51 = scalar_select %p50, 0, %s49
      %s52 = ssub.s32 %s39, %s51
      %p53 = scmp.eq.s32.totalorder %s52, 0
      %s55 = sadd.s32 %s54, 1
      %s56 = scalar_select %p53, %s54, %s55
      %p59 = pneg %p53
      %p60 = scmp.eq.s32.totalorder %s32, 1
      %p61 = por %p59, %p60
      %p62 = scmp.ne.s32.totalorder %s54, %s57
      %p63 = scmp.eq.s32.totalorder %s32, 0
      %p64 = por %p62, %p63
      %p65 = scmp.ne.s32.totalorder %s54, %s57
      %p66 = scmp.eq.s32.totalorder %s37, 1
      %p67 = por %p65, %p66
      %p68 = scmp.ne.s32.totalorder %s57, %s58
      %p69 = scmp.eq.s32.totalorder %s37, 0
      %p70 = por %p68, %p69
      %p71 = scmp.ne.s32.totalorder %s57, %s58
      %p72 = scmp.eq.s32.totalorder %s38, 1
      %p73 = por %p71, %p72
      %p75 = scmp.ne.s32.totalorder %s58, %s74
      %p76 = scmp.eq.s32.totalorder %s38, 0
      %p77 = por %p75, %p76
      %s78 = ssub.s32 %s39, %s51
      %p79 = scmp.eq.s32.totalorder %s78, 0
      %s81 = sadd.s32 %s80, 1
      %s82 = scalar_select %p79, %s80, %s81
      %p85 = pneg %p79
      %p86 = scmp.eq.s32.totalorder %s32, 1
      %p87 = por %p85, %p86
      %p88 = scmp.ne.s32.totalorder %s80, %s83
      %p89 = scmp.eq.s32.totalorder %s32, 0
      %p90 = por %p88, %p89
      %p91 = scmp.ne.s32.totalorder %s80, %s83
      %p92 = scmp.eq.s32.totalorder %s37, 1
      %p93 = por %p91, %p92
      %p94 = scmp.ne.s32.totalorder %s83, %s84
      %p95 = scmp.eq.s32.totalorder %s37, 0
      %p96 = por %p94, %p95
      %p97 = scmp.ne.s32.totalorder %s83, %s84
      %p98 = scmp.eq.s32.totalorder %s38, 1
      %p99 = por %p97, %p98
      %p101 = scmp.ne.s32.totalorder %s84, %s100
      %p102 = scmp.eq.s32.totalorder %s38, 0
      %p103 = por %p101, %p102
      %s104 = ssub.s32 %s39, %s51
      %p105 = scmp.eq.s32.totalorder %s104, 0
      %s107 = sadd.s32 %s106, 1
      %s108 = scalar_select %p105, %s106, %s107
      %p111 = pneg %p105
      %p112 = scmp.eq.s32.totalorder %s32, 1
      %p113 = por %p111, %p112
      %p114 = scmp.ne.s32.totalorder %s106, %s109
      %p115 = scmp.eq.s32.totalorder %s32, 0
      %p116 = por %p114, %p115
      %p117 = scmp.ne.s32.totalorder %s106, %s109
      %p118 = scmp.eq.s32.totalorder %s37, 1
      %p119 = por %p117, %p118
      %p120 = scmp.ne.s32.totalorder %s109, %s110
      %p121 = scmp.eq.s32.totalorder %s37, 0
      %p122 = por %p120, %p121
      %p123 = scmp.ne.s32.totalorder %s109, %s110
      %p124 = scmp.eq.s32.totalorder %s38, 1
      %p125 = por %p123, %p124
      %p127 = scmp.ne.s32.totalorder %s110, %s126
      %p128 = scmp.eq.s32.totalorder %s38, 0
      %p129 = por %p127, %p128
      %s131 = sadd.s32 %s130, 1
      %p134 = scmp.eq.s32.totalorder %s32, 1
      %p135 = scmp.ne.s32.totalorder %s130, %s132
      %p136 = scmp.eq.s32.totalorder %s32, 0
      %p137 = por %p135, %p136
      %p138 = scmp.ne.s32.totalorder %s130, %s132
      %p139 = scmp.eq.s32.totalorder %s37, 1
      %p140 = por %p138, %p139
      %p141 = scmp.ne.s32.totalorder %s132, %s133
      %p142 = scmp.eq.s32.totalorder %s37, 0
      %p143 = por %p141, %p142
      %p144 = scmp.ne.s32.totalorder %s132, %s133
      %p145 = scmp.eq.s32.totalorder %s38, 1
      %p146 = por %p144, %p145
      %p148 = scmp.ne.s32.totalorder %s133, %s147
      %p149 = scmp.eq.s32.totalorder %s38, 0
      %p150 = por %p148, %p149
      %s152 = sadd.s32 %s151, 1
      %p155 = scmp.eq.s32.totalorder %s32, 1
      %p156 = scmp.ne.s32.totalorder %s151, %s153
      %p157 = scmp.eq.s32.totalorder %s32, 0
      %p158 = por %p156, %p157
      %p159 = scmp.ne.s32.totalorder %s151, %s153
      %p160 = scmp.eq.s32.totalorder %s37, 1
      %p161 = por %p159, %p160
      %p162 = scmp.ne.s32.totalorder %s153, %s154
      %p163 = scmp.eq.s32.totalorder %s37, 0
      %p164 = por %p162, %p163
      %p165 = scmp.ne.s32.totalorder %s153, %s154
      %p166 = scmp.eq.s32.totalorder %s38, 1
      %p167 = por %p165, %p166
      %p169 = scmp.ne.s32.totalorder %s154, %s168
      %p170 = scmp.eq.s32.totalorder %s38, 0
      %p171 = por %p169, %p170
      %s173 = sadd.s32 %s172, 1
      %p176 = scmp.eq.s32.totalorder %s32, 1
      %p177 = scmp.ne.s32.totalorder %s172, %s174
      %p178 = scmp.eq.s32.totalorder %s32, 0
      %p179 = por %p177, %p178
      %p180 = scmp.ne.s32.totalorder %s172, %s174
      %p181 = scmp.eq.s32.totalorder %s37, 1
      %p182 = por %p180, %p181
      %p183 = scmp.ne.s32.totalorder %s174, %s175
      %p184 = scmp.eq.s32.totalorder %s37, 0
      %p185 = por %p183, %p184
      %p186 = scmp.ne.s32.totalorder %s174, %s175
      %p187 = scmp.eq.s32.totalorder %s38, 1
      %p188 = por %p186, %p187
      %p190 = scmp.ne.s32.totalorder %s175, %s189
      %p191 = scmp.eq.s32.totalorder %s38, 0
      %p192 = por %p190, %p191
      %s193 = ssub.s32 %s40, %s47
      %p194 = scmp.eq.s32.totalorder %s193, 0
      %s196 = sadd.s32 %s195, 1
      %s197 = scalar_select %p194, %s195, %s196
      %p200 = pneg %p194
      %p201 = scmp.eq.s32.totalorder %s32, 1
      %p202 = por %p200, %p201
      %p203 = scmp.ne.s32.totalorder %s195, %s198
      %p204 = scmp.eq.s32.totalorder %s32, 0
      %p205 = por %p203, %p204
      %p206 = scmp.ne.s32.totalorder %s195, %s198
      %p207 = scmp.eq.s32.totalorder %s37, 1
      %p208 = por %p206, %p207
      %p209 = scmp.ne.s32.totalorder %s198, %s199
      %p210 = scmp.eq.s32.totalorder %s37, 0
      %p211 = por %p209, %p210
      %p212 = scmp.ne.s32.totalorder %s198, %s199
      %p213 = scmp.eq.s32.totalorder %s38, 1
      %p214 = por %p212, %p213
      %p216 = scmp.ne.s32.totalorder %s199, %s215
      %p217 = scmp.eq.s32.totalorder %s38, 0
      %p218 = por %p216, %p217
      %s219 = ssub.s32 %s40, %s47
      %p220 = scmp.eq.s32.totalorder %s219, 0
      %s222 = sadd.s32 %s221, 1
      %s223 = scalar_select %p220, %s221, %s222
      %p226 = pneg %p220
      %p227 = scmp.eq.s32.totalorder %s32, 1
      %p228 = por %p226, %p227
      %p229 = scmp.ne.s32.totalorder %s221, %s224
      %p230 = scmp.eq.s32.totalorder %s32, 0
      %p231 = por %p229, %p230
      %p232 = scmp.ne.s32.totalorder %s221, %s224
      %p233 = scmp.eq.s32.totalorder %s37, 1
      %p234 = por %p232, %p233
      %p235 = scmp.ne.s32.totalorder %s224, %s225
      %p236 = scmp.eq.s32.totalorder %s37, 0
      %p237 = por %p235, %p236
      %p238 = scmp.ne.s32.totalorder %s224, %s225
      %p239 = scmp.eq.s32.totalorder %s38, 1
      %p240 = por %p238, %p239
      %p242 = scmp.ne.s32.totalorder %s225, %s241
      %p243 = scmp.eq.s32.totalorder %s38, 0
      %p244 = por %p242, %p243
      %s245 = ssub.s32 %s40, %s47
      %p246 = scmp.eq.s32.totalorder %s245, 0
      %s248 = sadd.s32 %s247, 1
      %s249 = scalar_select %p246, %s247, %s248
      %p252 = pneg %p246
      %p253 = scmp.eq.s32.totalorder %s32, 1
      %p254 = por %p252, %p253
      %p255 = scmp.ne.s32.totalorder %s247, %s250
      %p256 = scmp.eq.s32.totalorder %s32, 0
      %p257 = por %p255, %p256
      %p258 = scmp.ne.s32.totalorder %s247, %s250
      %p259 = scmp.eq.s32.totalorder %s37, 1
      %p260 = por %p258, %p259
      %p261 = scmp.ne.s32.totalorder %s250, %s251
      %p262 = scmp.eq.s32.totalorder %s37, 0
      %p263 = por %p261, %p262
      %p264 = scmp.ne.s32.totalorder %s250, %s251
      %p265 = scmp.eq.s32.totalorder %s38, 1
      %p266 = por %p264, %p265
      %p268 = scmp.ne.s32.totalorder %s251, %s267
      %p269 = scmp.eq.s32.totalorder %s38, 0
      %p270 = por %p268, %p269
      %s271 = ssub.s32 %s40, %s47
      %p272 = scmp.eq.s32.totalorder %s271, 0
      %s274 = sadd.s32 %s273, 1
      %s275 = scalar_select %p272, %s273, %s274
      %p278 = pneg %p272
      %p279 = scmp.eq.s32.totalorder %s32, 1
      %p280 = por %p278, %p279
      %p281 = scmp.ne.s32.totalorder %s273, %s276
      %p282 = scmp.eq.s32.totalorder %s32, 0
      %p283 = por %p281, %p282
      %p284 = scmp.ne.s32.totalorder %s273, %s276
      %p285 = scmp.eq.s32.totalorder %s37, 1
      %p286 = por %p284, %p285
      %p287 = scmp.ne.s32.totalorder %s276, %s277
      %p288 = scmp.eq.s32.totalorder %s37, 0
      %p289 = por %p287, %p288
      %p290 = scmp.ne.s32.totalorder %s276, %s277
      %p291 = scmp.eq.s32.totalorder %s38, 1
      %p292 = por %p290, %p291
      %p294 = scmp.ne.s32.totalorder %s277, %s293
      %p295 = scmp.eq.s32.totalorder %s38, 0
      %p296 = por %p294, %p295
      %s298 = sadd.s32 %s297, 1
      %p301 = scmp.eq.s32.totalorder %s32, 1
      %p302 = scmp.ne.s32.totalorder %s297, %s299
      %p303 = scmp.eq.s32.totalorder %s32, 0
      %p304 = por %p302, %p303
      %p305 = scmp.ne.s32.totalorder %s297, %s299
      %p306 = scmp.eq.s32.totalorder %s37, 1
      %p307 = por %p305, %p306
      %p308 = scmp.ne.s32.totalorder %s299, %s300
      %p309 = scmp.eq.s32.totalorder %s37, 0
      %p310 = por %p308, %p309
      %p311 = scmp.ne.s32.totalorder %s299, %s300
      %p312 = scmp.eq.s32.totalorder %s38, 1
      %p313 = por %p311, %p312
      %p315 = scmp.ne.s32.totalorder %s300, %s314
      %p316 = scmp.eq.s32.totalorder %s38, 0
      %p317 = por %p315, %p316
      %s319 = sadd.s32 %s318, 1
      %p322 = scmp.eq.s32.totalorder %s32, 1
      %p323 = scmp.ne.s32.totalorder %s318, %s320
      %p324 = scmp.eq.s32.totalorder %s32, 0
      %p325 = por %p323, %p324
      %p326 = scmp.ne.s32.totalorder %s318, %s320
      %p327 = scmp.eq.s32.totalorder %s37, 1
      %p328 = por %p326, %p327
      %p329 = scmp.ne.s32.totalorder %s320, %s321
      %p330 = scmp.eq.s32.totalorder %s37, 0
      %p331 = por %p329, %p330
      %p332 = scmp.ne.s32.totalorder %s320, %s321
      %p333 = scmp.eq.s32.totalorder %s38, 1
      %p334 = por %p332, %p333
      %p336 = scmp.ne.s32.totalorder %s321, %s335
      %p337 = scmp.eq.s32.totalorder %s38, 0
      %p338 = por %p336, %p337
      %s340 = sadd.s32 %s339, 1
      %p343 = scmp.eq.s32.totalorder %s32, 1
      %p344 = scmp.ne.s32.totalorder %s339, %s341
      %p345 = scmp.eq.s32.totalorder %s32, 0
      %p346 = por %p344, %p345
      %p347 = scmp.ne.s32.totalorder %s339, %s341
      %p348 = scmp.eq.s32.totalorder %s37, 1
      %p349 = por %p347, %p348
      %p350 = scmp.ne.s32.totalorder %s341, %s342
      %p351 = scmp.eq.s32.totalorder %s37, 0
      %p352 = por %p350, %p351
      %p353 = scmp.ne.s32.totalorder %s341, %s342
      %p354 = scmp.eq.s32.totalorder %s38, 1
      %p355 = por %p353, %p354
      %p357 = scmp.ne.s32.totalorder %s342, %s356
      %p358 = scmp.eq.s32.totalorder %s38, 0
      %p359 = por %p357, %p358
      %s361 = sadd.s32 %s360, 1
      %p364 = scmp.eq.s32.totalorder %s32, 1
      %p365 = scmp.ne.s32.totalorder %s360, %s362
      %p366 = scmp.eq.s32.totalorder %s32, 0
      %p367 = por %p365, %p366
      %p368 = scmp.ne.s32.totalorder %s360, %s362
      %p369 = scmp.eq.s32.totalorder %s37, 1
      %p370 = por %p368, %p369
      %p371 = scmp.ne.s32.totalorder %s362, %s363
      %p372 = scmp.eq.s32.totalorder %s37, 0
      %p373 = por %p371, %p372
      %p374 = scmp.ne.s32.totalorder %s362, %s363
      %p375 = scmp.eq.s32.totalorder %s38, 1
      %p376 = por %p374, %p375
      %p378 = scmp.ne.s32.totalorder %s363, %s377
      %p379 = scmp.eq.s32.totalorder %s38, 0
      %p380 = por %p378, %p379
      %s382 = sadd.s32 %s381, 1
      %p385 = scmp.eq.s32.totalorder %s32, 1
      %p386 = scmp.ne.s32.totalorder %s381, %s383
      %p387 = scmp.eq.s32.totalorder %s32, 0
      %p388 = por %p386, %p387
      %p389 = scmp.ne.s32.totalorder %s381, %s383
      %p390 = scmp.eq.s32.totalorder %s37, 1
      %p391 = por %p389, %p390
      %p392 = scmp.ne.s32.totalorder %s383, %s384
      %p393 = scmp.eq.s32.totalorder %s37, 0
      %p394 = por %p392, %p393
      %p395 = scmp.ne.s32.totalorder %s383, %s384
      %p396 = scmp.eq.s32.totalorder %s38, 1
      %p397 = por %p395, %p396
      %p399 = scmp.ne.s32.totalorder %s384, %s398
      %p400 = scmp.eq.s32.totalorder %s38, 0
      %p401 = por %p399, %p400
      %s403 = sadd.s32 %s402, 1
      %p406 = scmp.eq.s32.totalorder %s32, 1
      %p407 = scmp.ne.s32.totalorder %s402, %s404
      %p408 = scmp.eq.s32.totalorder %s32, 0
      %p409 = por %p407, %p408
      %p410 = scmp.ne.s32.totalorder %s402, %s404
      %p411 = scmp.eq.s32.totalorder %s37, 1
      %p412 = por %p410, %p411
      %p413 = scmp.ne.s32.totalorder %s404, %s405
      %p414 = scmp.eq.s32.totalorder %s37, 0
      %p415 = por %p413, %p414
      %p416 = scmp.ne.s32.totalorder %s404, %s405
      %p417 = scmp.eq.s32.totalorder %s38, 1
      %p418 = por %p416, %p417
      %p420 = scmp.ne.s32.totalorder %s405, %s419
      %p421 = scmp.eq.s32.totalorder %s38, 0
      %p422 = por %p420, %p421
      %s424 = sadd.s32 %s423, 1
      %p427 = scmp.eq.s32.totalorder %s32, 1
      %p428 = scmp.ne.s32.totalorder %s423, %s425
      %p429 = scmp.eq.s32.totalorder %s32, 0
      %p430 = por %p428, %p429
      %p431 = scmp.ne.s32.totalorder %s423, %s425
      %p432 = scmp.eq.s32.totalorder %s37, 1
      %p433 = por %p431, %p432
      %p434 = scmp.ne.s32.totalorder %s425, %s426
      %p435 = scmp.eq.s32.totalorder %s37, 0
      %p436 = por %p434, %p435
      %p437 = scmp.ne.s32.totalorder %s425, %s426
      %p438 = scmp.eq.s32.totalorder %s38, 1
      %p439 = por %p437, %p438
      %p441 = scmp.ne.s32.totalorder %s426, %s440
      %p442 = scmp.eq.s32.totalorder %s38, 0
      %p443 = por %p441, %p442
      %s445 = sadd.s32 %s444, 1
      %p448 = scmp.eq.s32.totalorder %s32, 1
      %p449 = scmp.ne.s32.totalorder %s444, %s446
      %p450 = scmp.eq.s32.totalorder %s32, 0
      %p451 = por %p449, %p450
      %p452 = scmp.ne.s32.totalorder %s444, %s446
      %p453 = scmp.eq.s32.totalorder %s37, 1
      %p454 = por %p452, %p453
      %p455 = scmp.ne.s32.totalorder %s446, %s447
      %p456 = scmp.eq.s32.totalorder %s37, 0
      %p457 = por %p455, %p456
      %p458 = scmp.ne.s32.totalorder %s446, %s447
      %p459 = scmp.eq.s32.totalorder %s38, 1
      %p460 = por %p458, %p459
      %p462 = scmp.ne.s32.totalorder %s447, %s461
      %p463 = scmp.eq.s32.totalorder %s38, 0
      %p464 = por %p462, %p463
      %s465 = ssub.s32 %s39, %s51
      %p466 = scmp.eq.s32.totalorder %s465, 0
      %s468 = sadd.s32 %s467, 1
      %s469 = scalar_select %p466, %s467, %s468
      %p472 = pneg %p466
      %p473 = scmp.eq.s32.totalorder %s32, 1
      %p474 = por %p472, %p473
      %p475 = scmp.ne.s32.totalorder %s467, %s470
      %p476 = scmp.eq.s32.totalorder %s32, 0
      %p477 = por %p475, %p476
      %p478 = scmp.ne.s32.totalorder %s467, %s470
      %p479 = scmp.eq.s32.totalorder %s37, 1
      %p480 = por %p478, %p479
      %p481 = scmp.ne.s32.totalorder %s470, %s471
      %p482 = scmp.eq.s32.totalorder %s37, 0
      %p483 = por %p481, %p482
      %p484 = scmp.ne.s32.totalorder %s470, %s471
      %p485 = scmp.eq.s32.totalorder %s38, 1
      %p486 = por %p484, %p485
      %p488 = scmp.ne.s32.totalorder %s471, %s487
      %p489 = scmp.eq.s32.totalorder %s38, 0
      %p490 = por %p488, %p489
      %p491 = scmp.le.s32.totalorder 1, %s32
      %p492 = scmp.lt.s32.totalorder %s32, 3
      %p493 = pnand %p491, %p492
      %p494 = pneg %p493
      // Predicated region
      $region9: #{tpu_custom_call.1} parent=5 // pred_check
        _
      $region10: #{tpu_custom_call.1} parent=5 // pred_check_branch
        %496 = sbr.rel (%p493) target = $region12
      $region11: #{tpu_custom_call.1} parent=5 // pred_region
        %s497 = ssub.s32 %s32, 1
        // Predicated region
        $region13: #{tpu_custom_call.1} parent=11 // pred_check
          %p498 = pneg %p70
        $region14: #{tpu_custom_call.1} parent=11 // pred_check_branch
          %500 = sbr.rel (%p498) target = $region16
        $region15: #{tpu_custom_call.1} parent=11 // pred_region
          %s501 = smul.u32 2, %s41
          %s503 = ssub.s32 256, 256
          %504 = vsyncadd [#allocation5], %s503
          %s505 = smul.addr %s501, 128
          %s506 = scalar_lea.hbm %s0, %s505
          %s507 = sshll.u32 [#allocation4], 4
          %s508 = int_to_ptr.vmem [resolvable:$true] %s507
          %513 = dma.hbm_to_vmem [thread:$0]  %s506, 256, %s508, [#allocation5], 128, 128, 8
        $region16: #{tpu_custom_call.1} parent=11 // pred_fallthru
          _
        // Predicated region
        $region17: #{tpu_custom_call.1} parent=11 // pred_check
          %p514 = pneg %p96
        $region18: #{tpu_custom_call.1} parent=11 // pred_check_branch
          %516 = sbr.rel (%p514) target = $region20
        $region19: #{tpu_custom_call.1} parent=11 // pred_region
          %s517 = smul.u32 2, %s41
          %s519 = ssub.s32 512, 512
          %520 = vsyncadd [#allocation8], %s519
          %s521 = smul.addr %s517, 2
          %s522 = smul.addr %s521, 128
          %s523 = scalar_lea.hbm %s1, %s522
          %s524 = sshll.u32 [#allocation7], 4
          %s525 = int_to_ptr.vmem [resolvable:$true] %s524
          %530 = dma.hbm_to_vmem [thread:$0]  %s523, 512, %s525, [#allocation8], 128, 128, 8
        $region20: #{tpu_custom_call.1} parent=11 // pred_fallthru
          _
        // Predicated region
        $region21: #{tpu_custom_call.1} parent=11 // pred_check
          %p531 = pneg %p122
        $region22: #{tpu_custom_call.1} parent=11 // pred_check_branch
          %533 = sbr.rel (%p531) target = $region24
        $region23: #{tpu_custom_call.1} parent=11 // pred_region
          %s534 = smul.u32 2, %s41
          %s536 = ssub.s32 256, 256
          %537 = vsyncadd [#allocation8], %s536
          %s538 = smul.addr %s534, 128
          %s539 = scalar_lea.hbm %s2, %s538
          %s540 = sshll.u32 [#allocation9], 4
          %s541 = int_to_ptr.vmem [resolvable:$true] %s540
          %546 = dma.hbm_to_vmem [thread:$0]  %s539, 256, %s541, [#allocation8], 128, 128, 8
        $region24: #{tpu_custom_call.1} parent=11 // pred_fallthru
          _
        // Predicated region
        $region25: #{tpu_custom_call.1} parent=11 // pred_check
          %p547 = pneg %p143
        $region26: #{tpu_custom_call.1} parent=11 // pred_check_branch
          %549 = sbr.rel (%p547) target = $region28
        $region27: #{tpu_custom_call.1} parent=11 // pred_region
          %s551 = ssub.s32 128, 128
          %552 = vsyncadd [#allocation11], %s551
          %s554 = sshll.u32 [#allocation10], 4
          %s555 = int_to_ptr.vmem [resolvable:$true] %s554
          %557 = dma.hbm_to_vmem [thread:$0]  %s3, 128, %s555, [#allocation11]
        $region28: #{tpu_custom_call.1} parent=11 // pred_fallthru
          _
        // Predicated region
        $region29: #{tpu_custom_call.1} parent=11 // pred_check
          %p558 = pneg %p164
        $region30: #{tpu_custom_call.1} parent=11 // pred_check_branch
          %560 = sbr.rel (%p558) target = $region32
        $region31: #{tpu_custom_call.1} parent=11 // pred_region
          %s562 = ssub.s32 256, 256
          %563 = vsyncadd [#allocation11], %s562
          %s564 = sshll.u32 [#allocation12], 4
          %s565 = int_to_ptr.vmem [resolvable:$true] %s564
          %570 = dma.hbm_to_vmem [thread:$0]  %s4, 256, %s565, [#allocation11], 128, 128, 8
        $region32: #{tpu_custom_call.1} parent=11 // pred_fallthru
          _
        // Predicated region
        $region33: #{tpu_custom_call.1} parent=11 // pred_check
          %p571 = pneg %p185
        $region34: #{tpu_custom_call.1} parent=11 // pred_check_branch
          %573 = sbr.rel (%p571) target = $region36
        $region35: #{tpu_custom_call.1} parent=11 // pred_region
          %s575 = ssub.s32 16, 16
          %576 = vsyncadd [#allocation14], %s575
          %s578 = sshll.u32 [#allocation13], 4
          %s579 = int_to_ptr.vmem [resolvable:$true] %s578
          %581 = dma.hbm_to_vmem [thread:$0]  %s5, 16, %s579, [#allocation14]
        $region36: #{tpu_custom_call.1} parent=11 // pred_fallthru
          _
        // Predicated region
        $region37: #{tpu_custom_call.1} parent=11 // pred_check
          %p582 = pneg %p310
        $region38: #{tpu_custom_call.1} parent=11 // pred_check_branch
          %584 = sbr.rel (%p582) target = $region40
        $region39: #{tpu_custom_call.1} parent=11 // pred_region
          %s586 = ssub.s32 512, 512
          %587 = vsyncadd [#allocation8], %s586
          %s588 = sshll.u32 [#allocation19], 4
          %s589 = int_to_ptr.vmem [resolvable:$true] %s588
          %594 = dma.hbm_to_vmem [thread:$0]  %s10, 512, %s589, [#allocation8], 128, 128, 8
        $region40: #{tpu_custom_call.1} parent=11 // pred_fallthru
          _
        // Predicated region
        $region41: #{tpu_custom_call.1} parent=11 // pred_check
          %p595 = pneg %p331
        $region42: #{tpu_custom_call.1} parent=11 // pred_check_branch
          %597 = sbr.rel (%p595) target = $region44
        $region43: #{tpu_custom_call.1} parent=11 // pred_region
          %s599 = ssub.s32 16, 16
          %600 = vsyncadd [#allocation11], %s599
          %s602 = sshll.u32 [#allocation20], 4
          %s603 = int_to_ptr.vmem [resolvable:$true] %s602
          %605 = dma.hbm_to_vmem [thread:$0]  %s11, 16, %s603, [#allocation11]
        $region44: #{tpu_custom_call.1} parent=11 // pred_fallthru
          _
        // Predicated region
        $region45: #{tpu_custom_call.1} parent=11 // pred_check
          %p606 = pneg %p352
        $region46: #{tpu_custom_call.1} parent=11 // pred_check_branch
          %608 = sbr.rel (%p606) target = $region48
        $region47: #{tpu_custom_call.1} parent=11 // pred_region
          %s610 = ssub.s32 256, 256
          %611 = vsyncadd [#allocation14], %s610
          %s612 = sshll.u32 [#allocation21], 4
          %s613 = int_to_ptr.vmem [resolvable:$true] %s612
          %618 = dma.hbm_to_vmem [thread:$0]  %s12, 256, %s613, [#allocation14], 128, 128, 8
        $region48: #{tpu_custom_call.1} parent=11 // pred_fallthru
          _
        // Predicated region
        $region49: #{tpu_custom_call.1} parent=11 // pred_check
          %p619 = pneg %p373
        $region50: #{tpu_custom_call.1} parent=11 // pred_check_branch
          %621 = sbr.rel (%p619) target = $region52
        $region51: #{tpu_custom_call.1} parent=11 // pred_region
          %s623 = ssub.s32 16, 16
          %624 = vsyncadd [#allocation23], %s623
          %s626 = sshll.u32 [#allocation22], 4
          %s627 = int_to_ptr.vmem [resolvable:$true] %s626
          %629 = dma.hbm_to_vmem [thread:$0]  %s13, 16, %s627, [#allocation23]
        $region52: #{tpu_custom_call.1} parent=11 // pred_fallthru
          _
        // Predicated region
        $region53: #{tpu_custom_call.1} parent=11 // pred_check
          %p630 = pneg %p394
        $region54: #{tpu_custom_call.1} parent=11 // pred_check_branch
          %632 = sbr.rel (%p630) target = $region56
        $region55: #{tpu_custom_call.1} parent=11 // pred_region
          %s634 = ssub.s32 512, 512
          %635 = vsyncadd [#allocation23], %s634
          %s636 = sshll.u32 [#allocation24], 4
          %s637 = int_to_ptr.vmem [resolvable:$true] %s636
          %642 = dma.hbm_to_vmem [thread:$0]  %s14, 512, %s637, [#allocation23], 128, 128, 8
        $region56: #{tpu_custom_call.1} parent=11 // pred_fallthru
          _
        // Predicated region
        $region57: #{tpu_custom_call.1} parent=11 // pred_check
          %p643 = pneg %p415
        $region58: #{tpu_custom_call.1} parent=11 // pred_check_branch
          %645 = sbr.rel (%p643) target = $region60
        $region59: #{tpu_custom_call.1} parent=11 // pred_region
          %s647 = ssub.s32 16, 16
          %648 = vsyncadd [#allocation26], %s647
          %s650 = sshll.u32 [#allocation25], 4
          %s651 = int_to_ptr.vmem [resolvable:$true] %s650
          %653 = dma.hbm_to_vmem [thread:$0]  %s15, 16, %s651, [#allocation26]
        $region60: #{tpu_custom_call.1} parent=11 // pred_fallthru
          _
        // Predicated region
        $region61: #{tpu_custom_call.1} parent=11 // pred_check
          %p654 = pneg %p436
        $region62: #{tpu_custom_call.1} parent=11 // pred_check_branch
          %656 = sbr.rel (%p654) target = $region64
        $region63: #{tpu_custom_call.1} parent=11 // pred_region
          %s658 = ssub.s32 256, 256
          %659 = vsyncadd [#allocation26], %s658
          %s660 = sshll.u32 [#allocation27], 4
          %s661 = int_to_ptr.vmem [resolvable:$true] %s660
          %666 = dma.hbm_to_vmem [thread:$0]  %s16, 256, %s661, [#allocation26], 128, 128, 8
        $region64: #{tpu_custom_call.1} parent=11 // pred_fallthru
          _
        // Predicated region
        $region65: #{tpu_custom_call.1} parent=11 // pred_check
          %p667 = pneg %p457
        $region66: #{tpu_custom_call.1} parent=11 // pred_check_branch
          %669 = sbr.rel (%p667) target = $region68
        $region67: #{tpu_custom_call.1} parent=11 // pred_region
          %s671 = ssub.s32 16, 16
          %672 = vsyncadd [#allocation29], %s671
          %s674 = sshll.u32 [#allocation28], 4
          %s675 = int_to_ptr.vmem [resolvable:$true] %s674
          %677 = dma.hbm_to_vmem [thread:$0]  %s17, 16, %s675, [#allocation29]
        $region68: #{tpu_custom_call.1} parent=11 // pred_fallthru
          _
      $region12: #{tpu_custom_call.1} parent=5 // pred_fallthru
        _
      %p678 = scmp.lt.s32.totalorder %s32, 2
      // Predicated region
      $region69: #{tpu_custom_call.1} parent=5 // pred_check
        %p679 = pneg %p678
      $region70: #{tpu_custom_call.1} parent=5 // pred_check_branch
        %681 = sbr.rel (%p679) target = $region72
      $region71: #{tpu_custom_call.1} parent=5 // pred_region
        // Predicated region
        $region73: #{tpu_custom_call.1} parent=71 // pred_check
          %p682 = pneg %p205
        $region74: #{tpu_custom_call.1} parent=71 // pred_check_branch
          %684 = sbr.rel (%p682) target = $region76
        $region75: #{tpu_custom_call.1} parent=71 // pred_region
          %s685 = sand.u32 %s32, 1
          %s686 = scalar_lea.sflag [#allocation5], %s685
          %s687 = sand.u32 %s195, 1
          %s688 = smul.addr %s687, 96
          %s689 = scalar_lea.vmem [#allocation15], %s688
          %s691 = ssub.s32 1536, 1536
          %692 = vsyncadd %s686, %s691
          %s693 = smul.addr %s40, 12
          %s694 = smul.addr %s693, 128
          %s695 = scalar_lea.hbm %s6, %s694
          %s696 = sshll.u32 %s689, 4
          %s697 = int_to_ptr.vmem [resolvable:$true] %s696
          %702 = dma.hbm_to_vmem [thread:$0]  %s695, 1536, %s697, %s686, 128, 128, 8
        $region76: #{tpu_custom_call.1} parent=71 // pred_fallthru
          _
        // Predicated region
        $region77: #{tpu_custom_call.1} parent=71 // pred_check
          %p703 = pneg %p231
        $region78: #{tpu_custom_call.1} parent=71 // pred_check_branch
          %705 = sbr.rel (%p703) target = $region80
        $region79: #{tpu_custom_call.1} parent=71 // pred_region
          %s706 = sand.u32 %s32, 1
          %s707 = scalar_lea.sflag [#allocation5], %s706
          %s708 = sand.u32 %s221, 1
          %s709 = smul.addr %s708, 96
          %s710 = scalar_lea.vmem [#allocation16], %s709
          %s712 = ssub.s32 1536, 1536
          %713 = vsyncadd %s707, %s712
          %s714 = smul.addr %s40, 12
          %s715 = smul.addr %s714, 128
          %s716 = scalar_lea.hbm %s7, %s715
          %s717 = sshll.u32 %s710, 4
          %s718 = int_to_ptr.vmem [resolvable:$true] %s717
          %723 = dma.hbm_to_vmem [thread:$0]  %s716, 1536, %s718, %s707, 128, 128, 8
        $region80: #{tpu_custom_call.1} parent=71 // pred_fallthru
          _
        // Predicated region
        $region81: #{tpu_custom_call.1} parent=71 // pred_check
          %p724 = pneg %p257
        $region82: #{tpu_custom_call.1} parent=71 // pred_check_branch
          %726 = sbr.rel (%p724) target = $region84
        $region83: #{tpu_custom_call.1} parent=71 // pred_region
          %s727 = sand.u32 %s32, 1
          %s728 = scalar_lea.sflag [#allocation5], %s727
          %s729 = sand.u32 %s247, 1
          %s730 = scalar_lea.vmem [#allocation17], %s729
          %s732 = ssub.s32 16, 16
          %733 = vsyncadd %s728, %s732
          %s734 = smul.addr %s40, 16
          %s735 = scalar_lea.hbm %s8, %s734
          %s737 = sshll.u32 %s730, 4
          %s738 = int_to_ptr.vmem [resolvable:$true] %s737
          %740 = dma.hbm_to_vmem [thread:$0]  %s735, 16, %s738, %s728
        $region84: #{tpu_custom_call.1} parent=71 // pred_fallthru
          _
        // Predicated region
        $region85: #{tpu_custom_call.1} parent=71 // pred_check
          %p741 = pneg %p283
        $region86: #{tpu_custom_call.1} parent=71 // pred_check_branch
          %743 = sbr.rel (%p741) target = $region88
        $region87: #{tpu_custom_call.1} parent=71 // pred_region
          %s744 = sand.u32 %s32, 1
          %s745 = scalar_lea.sflag [#allocation5], %s744
          %s746 = sand.u32 %s273, 1
          %s747 = scalar_lea.vmem [#allocation18], %s746
          %s749 = ssub.s32 16, 16
          %750 = vsyncadd %s745, %s749
          %s751 = smul.addr %s40, 16
          %s752 = scalar_lea.hbm %s9, %s751
          %s754 = sshll.u32 %s747, 4
          %s755 = int_to_ptr.vmem [resolvable:$true] %s754
          %757 = dma.hbm_to_vmem [thread:$0]  %s752, 16, %s755, %s745
        $region88: #{tpu_custom_call.1} parent=71 // pred_fallthru
          _
      $region72: #{tpu_custom_call.1} parent=5 // pred_fallthru
        _
      %p758 = scmp.le.s32.totalorder 1, %s32
      %p759 = scmp.lt.s32.totalorder %s32, 3
      %p760 = pnand %p758, %p759
      %p761 = pneg %p760
      // Predicated region
      $region89: #{tpu_custom_call.1} parent=5 // pred_check
        _
      $region90: #{tpu_custom_call.1} parent=5 // pred_check_branch
        %763 = sbr.rel (%p760) target = $region92
      $region91: #{tpu_custom_call.1} parent=5 // pred_region
        %s764 = ssub.s32 %s32, 1
        // Predicated region
        $region93: #{tpu_custom_call.1} parent=91 // pred_check
          %p765 = pneg %p70
        $region94: #{tpu_custom_call.1} parent=91 // pred_check_branch
          %767 = sbr.rel (%p765) target = $region96
        $region95: #{tpu_custom_call.1} parent=91 // pred_region
          %768 = dma.done [#allocation5], 256
        $region96: #{tpu_custom_call.1} parent=91 // pred_fallthru
          _
        // Predicated region
        $region97: #{tpu_custom_call.1} parent=91 // pred_check
          %p769 = pneg %p96
        $region98: #{tpu_custom_call.1} parent=91 // pred_check_branch
          %771 = sbr.rel (%p769) target = $region100
        $region99: #{tpu_custom_call.1} parent=91 // pred_region
          %772 = dma.done [#allocation8], 512
        $region100: #{tpu_custom_call.1} parent=91 // pred_fallthru
          _
        // Predicated region
        $region101: #{tpu_custom_call.1} parent=91 // pred_check
          %p773 = pneg %p122
        $region102: #{tpu_custom_call.1} parent=91 // pred_check_branch
          %775 = sbr.rel (%p773) target = $region104
        $region103: #{tpu_custom_call.1} parent=91 // pred_region
          %776 = dma.done [#allocation8], 256
        $region104: #{tpu_custom_call.1} parent=91 // pred_fallthru
          _
        // Predicated region
        $region105: #{tpu_custom_call.1} parent=91 // pred_check
          %p777 = pneg %p143
        $region106: #{tpu_custom_call.1} parent=91 // pred_check_branch
          %779 = sbr.rel (%p777) target = $region108
        $region107: #{tpu_custom_call.1} parent=91 // pred_region
          %780 = dma.done [#allocation11], 128
        $region108: #{tpu_custom_call.1} parent=91 // pred_fallthru
          _
        // Predicated region
        $region109: #{tpu_custom_call.1} parent=91 // pred_check
          %p781 = pneg %p164
        $region110: #{tpu_custom_call.1} parent=91 // pred_check_branch
          %783 = sbr.rel (%p781) target = $region112
        $region111: #{tpu_custom_call.1} parent=91 // pred_region
          %784 = dma.done [#allocation11], 256
        $region112: #{tpu_custom_call.1} parent=91 // pred_fallthru
          _
        // Predicated region
        $region113: #{tpu_custom_call.1} parent=91 // pred_check
          %p785 = pneg %p185
        $region114: #{tpu_custom_call.1} parent=91 // pred_check_branch
          %787 = sbr.rel (%p785) target = $region116
        $region115: #{tpu_custom_call.1} parent=91 // pred_region
          %788 = dma.done [#allocation14], 16
        $region116: #{tpu_custom_call.1} parent=91 // pred_fallthru
          _
        %s789 = sand.u32 %s37, 1
        %s790 = scalar_lea.sflag [#allocation5], %s789
        %s791 = sand.u32 %s198, 1
        %s792 = smul.addr %s791, 96
        %s793 = scalar_lea.vmem [#allocation15], %s792
        // Predicated region
        $region117: #{tpu_custom_call.1} parent=91 // pred_check
          %p794 = pneg %p211
        $region118: #{tpu_custom_call.1} parent=91 // pred_check_branch
          %796 = sbr.rel (%p794) target = $region120
        $region119: #{tpu_custom_call.1} parent=91 // pred_region
          %797 = dma.done %s790, 1536
        $region120: #{tpu_custom_call.1} parent=91 // pred_fallthru
          _
        %s798 = sand.u32 %s37, 1
        %s799 = scalar_lea.sflag [#allocation5], %s798
        %s800 = sand.u32 %s224, 1
        %s801 = smul.addr %s800, 96
        %s802 = scalar_lea.vmem [#allocation16], %s801
        // Predicated region
        $region121: #{tpu_custom_call.1} parent=91 // pred_check
          %p803 = pneg %p237
        $region122: #{tpu_custom_call.1} parent=91 // pred_check_branch
          %805 = sbr.rel (%p803) target = $region124
        $region123: #{tpu_custom_call.1} parent=91 // pred_region
          %806 = dma.done %s799, 1536
        $region124: #{tpu_custom_call.1} parent=91 // pred_fallthru
          _
        %s807 = sand.u32 %s37, 1
        %s808 = scalar_lea.sflag [#allocation5], %s807
        %s809 = sand.u32 %s250, 1
        %s810 = scalar_lea.vmem [#allocation17], %s809
        // Predicated region
        $region125: #{tpu_custom_call.1} parent=91 // pred_check
          %p811 = pneg %p263
        $region126: #{tpu_custom_call.1} parent=91 // pred_check_branch
          %813 = sbr.rel (%p811) target = $region128
        $region127: #{tpu_custom_call.1} parent=91 // pred_region
          %814 = dma.done %s808, 16
        $region128: #{tpu_custom_call.1} parent=91 // pred_fallthru
          _
        %s815 = sand.u32 %s37, 1
        %s816 = scalar_lea.sflag [#allocation5], %s815
        %s817 = sand.u32 %s276, 1
        %s818 = scalar_lea.vmem [#allocation18], %s817
        // Predicated region
        $region129: #{tpu_custom_call.1} parent=91 // pred_check
          %p819 = pneg %p289
        $region130: #{tpu_custom_call.1} parent=91 // pred_check_branch
          %821 = sbr.rel (%p819) target = $region132
        $region131: #{tpu_custom_call.1} parent=91 // pred_region
          %822 = dma.done %s816, 16
        $region132: #{tpu_custom_call.1} parent=91 // pred_fallthru
          _
        // Predicated region
        $region133: #{tpu_custom_call.1} parent=91 // pred_check
          %p823 = pneg %p310
        $region134: #{tpu_custom_call.1} parent=91 // pred_check_branch
          %825 = sbr.rel (%p823) target = $region136
        $region135: #{tpu_custom_call.1} parent=91 // pred_region
          %826 = dma.done [#allocation8], 512
        $region136: #{tpu_custom_call.1} parent=91 // pred_fallthru
          _
        // Predicated region
        $region137: #{tpu_custom_call.1} parent=91 // pred_check
          %p827 = pneg %p331
        $region138: #{tpu_custom_call.1} parent=91 // pred_check_branch
          %829 = sbr.rel (%p827) target = $region140
        $region139: #{tpu_custom_call.1} parent=91 // pred_region
          %830 = dma.done [#allocation11], 16
        $region140: #{tpu_custom_call.1} parent=91 // pred_fallthru
          _
        // Predicated region
        $region141: #{tpu_custom_call.1} parent=91 // pred_check
          %p831 = pneg %p352
        $region142: #{tpu_custom_call.1} parent=91 // pred_check_branch
          %833 = sbr.rel (%p831) target = $region144
        $region143: #{tpu_custom_call.1} parent=91 // pred_region
          %834 = dma.done [#allocation14], 256
        $region144: #{tpu_custom_call.1} parent=91 // pred_fallthru
          _
        // Predicated region
        $region145: #{tpu_custom_call.1} parent=91 // pred_check
          %p835 = pneg %p373
        $region146: #{tpu_custom_call.1} parent=91 // pred_check_branch
          %837 = sbr.rel (%p835) target = $region148
        $region147: #{tpu_custom_call.1} parent=91 // pred_region
          %838 = dma.done [#allocation23], 16
        $region148: #{tpu_custom_call.1} parent=91 // pred_fallthru
          _
        // Predicated region
        $region149: #{tpu_custom_call.1} parent=91 // pred_check
          %p839 = pneg %p394
        $region150: #{tpu_custom_call.1} parent=91 // pred_check_branch
          %841 = sbr.rel (%p839) target = $region152
        $region151: #{tpu_custom_call.1} parent=91 // pred_region
          %842 = dma.done [#allocation23], 512
        $region152: #{tpu_custom_call.1} parent=91 // pred_fallthru
          _
        // Predicated region
        $region153: #{tpu_custom_call.1} parent=91 // pred_check
          %p843 = pneg %p415
        $region154: #{tpu_custom_call.1} parent=91 // pred_check_branch
          %845 = sbr.rel (%p843) target = $region156
        $region155: #{tpu_custom_call.1} parent=91 // pred_region
          %846 = dma.done [#allocation26], 16
        $region156: #{tpu_custom_call.1} parent=91 // pred_fallthru
          _
        // Predicated region
        $region157: #{tpu_custom_call.1} parent=91 // pred_check
          %p847 = pneg %p436
        $region158: #{tpu_custom_call.1} parent=91 // pred_check_branch
          %849 = sbr.rel (%p847) target = $region160
        $region159: #{tpu_custom_call.1} parent=91 // pred_region
          %850 = dma.done [#allocation26], 256
        $region160: #{tpu_custom_call.1} parent=91 // pred_fallthru
          _
        // Predicated region
        $region161: #{tpu_custom_call.1} parent=91 // pred_check
          %p851 = pneg %p457
        $region162: #{tpu_custom_call.1} parent=91 // pred_check_branch
          %853 = sbr.rel (%p851) target = $region164
        $region163: #{tpu_custom_call.1} parent=91 // pred_region
          %854 = dma.done [#allocation29], 16
        $region164: #{tpu_custom_call.1} parent=91 // pred_fallthru
          _
        %p855 = pneg %p70
        %p856 = pneg %p67
        %p857 = pneg %p96
        %p858 = pneg %p93
        %p859 = pneg %p122
        %p860 = pneg %p119
        %p861 = pneg %p143
        %p862 = pneg %p140
        %p863 = pneg %p164
        %p864 = pneg %p161
        %p865 = pneg %p185
        %p866 = pneg %p182
        %s867 = sand.u32 %s37, 1
        %s868 = scalar_lea.sflag [#allocation5], %s867
        %s869 = sand.u32 %s198, 1
        %s870 = smul.addr %s869, 96
        %s871 = scalar_lea.vmem [#allocation15], %s870
        %p872 = pneg %p211
        %p873 = pneg %p208
        %s874 = sand.u32 %s37, 1
        %s875 = scalar_lea.sflag [#allocation5], %s874
        %s876 = sand.u32 %s224, 1
        %s877 = smul.addr %s876, 96
        %s878 = scalar_lea.vmem [#allocation16], %s877
        %p879 = pneg %p237
        %p880 = pneg %p234
        %s881 = sand.u32 %s37, 1
        %s882 = scalar_lea.sflag [#allocation5], %s881
        %s883 = sand.u32 %s250, 1
        %s884 = scalar_lea.vmem [#allocation17], %s883
        %p885 = pneg %p263
        %p886 = pneg %p260
        %s887 = sand.u32 %s37, 1
        %s888 = scalar_lea.sflag [#allocation5], %s887
        %s889 = sand.u32 %s276, 1
        %s890 = scalar_lea.vmem [#allocation18], %s889
        %p891 = pneg %p289
        %p892 = pneg %p286
        %p893 = pneg %p310
        %p894 = pneg %p307
        %p895 = pneg %p331
        %p896 = pneg %p328
        %p897 = pneg %p352
        %p898 = pneg %p349
        %p899 = pneg %p373
        %p900 = pneg %p370
        %p901 = pneg %p394
        %p902 = pneg %p391
        %p903 = pneg %p415
        %p904 = pneg %p412
        %p905 = pneg %p436
        %p906 = pneg %p433
        %p907 = pneg %p457
        %p908 = pneg %p454
        %p909 = pneg %p483
        %p910 = pneg %p480
        %s911 = smul.u32 2, %s41
        %s912 = smul.u32 2, %s41
        %s913 = smul.u32 2, %s41
        %s914 = smul.u32 2, %s41
        %p915 = scmp.eq.s32.totalorder %s42, 0
        // Predicated region
        $region165: #{tpu_custom_call.1} parent=91 // pred_check
          %p916 = pneg %p915
        $region166: #{tpu_custom_call.1} parent=91 // pred_check_branch
          %918 = sbr.rel (%p916) target = $region168
        $region167: #{tpu_custom_call.1} parent=91 // pred_region
          %v919 = vld [vmem:[#allocation4] sm:$0xff]
          %v920 = vld [vmem:[#allocation4 + $0x8] sm:$0xff]
          %v921 = vld [vmem:[#allocation10] sm:$0xff]
          %v922 = vadd.f32 %v919, %v921
          %v923 = vadd.f32 %v920, %v921
          %vm924 = vcmask 130048
          %925 = vst.msk [vmem:[#allocation2] sm:$0xff] %vm924, %v922
          %926 = vst.msk [vmem:[#allocation2 + $0x8] sm:$0xff] %vm924, %v923
          %v927 = vld [vmem:[#allocation12] sm:$0xff]
          %v928 = vld [vmem:[#allocation12 + $0x8] sm:$0xff]
          %v929 = vld [vmem:[#allocation13] sm:$0x1]
          %v931 = vlaneseq
          %v932 = vshrl.u32 %v931, 7
          %v933 = vsub.s32 0, %v932
          %v934 = vrot.slane %v929, %v933
          %v937 = vsel %vm924, %v922, 0
          %v940 = vsel %vm924, %v923, 0
          %942 = vmatprep.subr.mxu0 0.0
          %943 = vmatpush1.msra.mxu0 %v927
          %944 = vmatprep.subr.mxu0 0.0
          %945 = vmatpush1.msra.mxu0 %v928
          %946 = vmatprep.subr.mxu0 0.0
          %947 = vmatpush1.msra.mxu0 0.0
          %948 = vmatprep.subr.mxu0 0.0
          %949 = vmatpush1.msra.mxu0 0.0
          %950 = vmatprep.subr.mxu0 0.0
          %951 = vmatpush1.msra.mxu0 0.0
          %952 = vmatprep.subr.mxu0 0.0
          %953 = vmatpush1.msra.mxu0 0.0
          %954 = vmatprep.subr.mxu0 0.0
          %955 = vmatpush1.msra.mxu0 0.0
          %956 = vmatprep.subr.mxu0 0.0
          %957 = vmatpush1.msra.mxu0 0.0
          %958 = vmatprep.subr.mxu0 0.0
          %959 = vmatpush1.msra.mxu0 0.0
          %960 = vmatprep.subr.mxu0 0.0
          %961 = vmatpush1.msra.mxu0 0.0
          %962 = vmatprep.subr.mxu0 0.0
          %963 = vmatpush1.msra.mxu0 0.0
          %964 = vmatprep.subr.mxu0 0.0
          %965 = vmatpush1.msra.mxu0 0.0
          %966 = vmatprep.subr.mxu0 0.0
          %967 = vmatpush1.msra.mxu0 0.0
          %968 = vmatprep.subr.mxu0 0.0
          %969 = vmatpush1.msra.mxu0 0.0
          %970 = vmatprep.subr.mxu0 0.0
          %971 = vmatpush1.msra.mxu0 0.0
          %972 = vmatprep.subr.mxu0 0.0
          %973 = vmatpush1.msra.mxu0 0.0
          %974 = vmatprep.subr.mxu0 0.0
          %975 = vmatpush1.msra.mxu0 0.0
          %976 = vmatprep.subr.mxu0 0.0
          %977 = vmatpush1.msra.mxu0 0.0
          %978 = vmatprep.subr.mxu0 0.0
          %979 = vmatpush1.msra.mxu0 0.0
          %980 = vmatprep.subr.mxu0 0.0
          %981 = vmatpush1.msra.mxu0 0.0
          %982 = vmatprep.subr.mxu0 0.0
          %983 = vmatpush1.msra.mxu0 0.0
          %984 = vmatprep.subr.mxu0 0.0
          %985 = vmatpush1.msra.mxu0 0.0
          %986 = vmatprep.subr.mxu0 0.0
          %987 = vmatpush1.msra.mxu0 0.0
          %988 = vmatprep.subr.mxu0 0.0
          %989 = vmatpush1.msra.mxu0 0.0
          %990 = vmatprep.subr.mxu0 0.0
          %991 = vmatpush1.msra.mxu0 0.0
          %992 = vmatprep.subr.mxu0 0.0
          %993 = vmatpush1.msra.mxu0 0.0
          %994 = vmatprep.subr.mxu0 0.0
          %995 = vmatpush1.msra.mxu0 0.0
          %996 = vmatprep.subr.mxu0 0.0
          %997 = vmatpush1.msra.mxu0 0.0
          %998 = vmatprep.subr.mxu0 0.0
          %999 = vmatpush1.msra.mxu0 0.0
          %1000 = vmatprep.subr.mxu0 0.0
          %1001 = vmatpush1.msra.mxu0 0.0
          %1002 = vmatprep.subr.mxu0 0.0
          %1003 = vmatpush1.msra.mxu0 0.0
          %1004 = vmatprep.subr.mxu0 0.0
          %1005 = vmatpush1.msra.mxu0 0.0
          %1006 = vmatprep.mubr.f32.mxu0 0.0
          %1007 = vmatmul.mubr.f32.gmra.mrb[0].mxu0 %v937
          %v1008 = vpop.f32.mrb[0].mxu0
          %v1009 = vadd.f32 %v934, %v1008
          %v1010 = vpop.f32.mrb[0].mxu0
          %1011 = vmatprep.mubr.f32.mxu0 0.0
          %1012 = vmatmul.mubr.f32.gmra.mrb[0].mxu0 %v940
          %v1013 = vpop.f32.mrb[0].mxu0
          %v1014 = vadd.f32 %v934, %v1013
          %v1015 = vpop.f32.mrb[0].mxu0
          %1016 = vdwg.mxu0
          %vm1017 = vcmask 261120
          %1018 = vst.msk [vmem:[#allocation3] sm:$0xff] %vm1017, 0.0
          %1019 = vst.msk [vmem:[#allocation3 + $0x10] sm:$0xff] %vm1017, 0.0
          %1020 = vst.msk [vmem:[#allocation3 + $0x8] sm:$0xff] %vm1017, %v1009
          %1021 = vst.msk [vmem:[#allocation3 + $0x18] sm:$0xff] %vm1017, %v1014
        $region168: #{tpu_custom_call.1} parent=91 // pred_fallthru
          _
        %v1022 = vld [vmem:[#allocation2] sm:$0xff]
        %v1023 = vld [vmem:[#allocation2 + $0x8] sm:$0xff]
        %v1024 = vld [vmem:[#allocation3 + $0x8] sm:$0xff]
        %v1025 = vld [vmem:[#allocation3 + $0x18] sm:$0xff]
        %v1026 = vld [vmem:[#allocation3 + $0x6] sm:$0xff]
        %v1027 = vld [vmem:[#allocation3 + $0x16] sm:$0xff]
        %v1028 = vld [vmem:[%s793] sm:$0xff]
        %v1029 = vld [vmem:[%s793 + $0x8] sm:$0xff]
        %v1030 = vld [vmem:[%s793 + $0x10] sm:$0xff]
        %v1031 = vld [vmem:[%s793 + $0x18] sm:$0xff]
        %v1032 = vld [vmem:[%s802] sm:$0xff]
        %v1033 = vld [vmem:[%s802 + $0x8] sm:$0xff]
        %v1034 = vld [vmem:[%s802 + $0x10] sm:$0xff]
        %v1035 = vld [vmem:[%s802 + $0x18] sm:$0xff]
        %v1036 = vld [vmem:[#allocation3 + $0x7] sm:$0xff]
        %v1037 = vld [vmem:[#allocation3 + $0x17] sm:$0xff]
        %s1038 = scalar_lea.vmem %s793, 32 [#allocation15]
        %v1039 = vld [vmem:[%s1038] sm:$0xff]
        %v1040 = vld [vmem:[%s1038 + $0x8] sm:$0xff]
        %v1041 = vld [vmem:[%s1038 + $0x10] sm:$0xff]
        %v1042 = vld [vmem:[%s1038 + $0x18] sm:$0xff]
        %vm1043 = vcmask 261120
        %v1045 = vsel %vm1043, %v1036, 0
        %v1048 = vsel %vm1043, %v1037, 0
        %1050 = vmatprep.subr.mxu0 0.0
        %1051 = vmatpush1.msra.mxu0 %v1039
        %1052 = vmatprep.subr.mxu0 0.0
        %1053 = vmatpush1.msra.mxu0 %v1040
        %1054 = vmatprep.subr.mxu0 0.0
        %1055 = vmatpush1.msra.mxu0 %v1041
        %1056 = vmatprep.subr.mxu0 0.0
        %1057 = vmatpush1.msra.mxu0 %v1042
        %1058 = vmatprep.subr.mxu0 0.0
        %1059 = vmatpush1.msra.mxu0 0.0
        %1060 = vmatprep.subr.mxu0 0.0
        %1061 = vmatpush1.msra.mxu0 0.0
        %1062 = vmatprep.subr.mxu0 0.0
        %1063 = vmatpush1.msra.mxu0 0.0
        %1064 = vmatprep.subr.mxu0 0.0
        %1065 = vmatpush1.msra.mxu0 0.0
        %1066 = vmatprep.subr.mxu0 0.0
        %1067 = vmatpush1.msra.mxu0 0.0
        %1068 = vmatprep.subr.mxu0 0.0
        %1069 = vmatpush1.msra.mxu0 0.0
        %1070 = vmatprep.subr.mxu0 0.0
        %1071 = vmatpush1.msra.mxu0 0.0
        %1072 = vmatprep.subr.mxu0 0.0
        %1073 = vmatpush1.msra.mxu0 0.0
        %1074 = vmatprep.subr.mxu0 0.0
        %1075 = vmatpush1.msra.mxu0 0.0
        %1076 = vmatprep.subr.mxu0 0.0
        %1077 = vmatpush1.msra.mxu0 0.0
        %1078 = vmatprep.subr.mxu0 0.0
        %1079 = vmatpush1.msra.mxu0 0.0
        %1080 = vmatprep.subr.mxu0 0.0
        %1081 = vmatpush1.msra.mxu0 0.0
        %1082 = vmatprep.subr.mxu0 0.0
        %1083 = vmatpush1.msra.mxu0 0.0
        %1084 = vmatprep.subr.mxu0 0.0
        %1085 = vmatpush1.msra.mxu0 0.0
        %1086 = vmatprep.subr.mxu0 0.0
        %1087 = vmatpush1.msra.mxu0 0.0
        %1088 = vmatprep.subr.mxu0 0.0
        %1089 = vmatpush1.msra.mxu0 0.0
        %1090 = vmatprep.subr.mxu0 0.0
        %1091 = vmatpush1.msra.mxu0 0.0
        %1092 = vmatprep.subr.mxu0 0.0
        %1093 = vmatpush1.msra.mxu0 0.0
        %1094 = vmatprep.subr.mxu0 0.0
        %1095 = vmatpush1.msra.mxu0 0.0
        %1096 = vmatprep.subr.mxu0 0.0
        %1097 = vmatpush1.msra.mxu0 0.0
        %1098 = vmatprep.subr.mxu0 0.0
        %1099 = vmatpush1.msra.mxu0 0.0
        %1100 = vmatprep.subr.mxu0 0.0
        %1101 = vmatpush1.msra.mxu0 0.0
        %1102 = vmatprep.subr.mxu0 0.0
        %1103 = vmatpush1.msra.mxu0 0.0
        %1104 = vmatprep.subr.mxu0 0.0
        %1105 = vmatpush1.msra.mxu0 0.0
        %1106 = vmatprep.subr.mxu0 0.0
        %1107 = vmatpush1.msra.mxu0 0.0
        %1108 = vmatprep.subr.mxu0 0.0
        %1109 = vmatpush1.msra.mxu0 0.0
        %1110 = vmatprep.subr.mxu0 0.0
        %1111 = vmatpush1.msra.mxu0 0.0
        %1112 = vmatprep.subr.mxu0 0.0
        %1113 = vmatpush1.msra.mxu0 0.0
        %1114 = vmatprep.mubr.f32.mxu0 0.0
        %1115 = vmatmul.mubr.f32.gmra.mrb[0].mxu0 %v1045
        %v1116 = vpop.f32.mrb[0].mxu0
        %v1117 = vadd.f32 0.0, %v1116
        %v1118 = vpop.f32.mrb[0].mxu0
        %1119 = vmatprep.mubr.f32.mxu0 0.0
        %1120 = vmatmul.mubr.f32.gmra.mrb[0].mxu0 %v1048
        %v1121 = vpop.f32.mrb[0].mxu0
        %v1122 = vadd.f32 0.0, %v1121
        %v1123 = vpop.f32.mrb[0].mxu0
        %1124 = vdwg.mxu0
        %v1126 = vsel %vm1043, %v1026, 0
        %v1129 = vsel %vm1043, %v1027, 0
        %1131 = vmatprep.subr.mxu0 0.0
        %1132 = vmatpush1.msra.mxu0 %v1028
        %1133 = vmatprep.subr.mxu0 0.0
        %1134 = vmatpush1.msra.mxu0 %v1029
        %1135 = vmatprep.subr.mxu0 0.0
        %1136 = vmatpush1.msra.mxu0 %v1030
        %1137 = vmatprep.subr.mxu0 0.0
        %1138 = vmatpush1.msra.mxu0 %v1031
        %1139 = vmatprep.subr.mxu0 0.0
        %1140 = vmatpush1.msra.mxu0 0.0
        %1141 = vmatprep.subr.mxu0 0.0
        %1142 = vmatpush1.msra.mxu0 0.0
        %1143 = vmatprep.subr.mxu0 0.0
        %1144 = vmatpush1.msra.mxu0 0.0
        %1145 = vmatprep.subr.mxu0 0.0
        %1146 = vmatpush1.msra.mxu0 0.0
        %1147 = vmatprep.subr.mxu0 0.0
        %1148 = vmatpush1.msra.mxu0 0.0
        %1149 = vmatprep.subr.mxu0 0.0
        %1150 = vmatpush1.msra.mxu0 0.0
        %1151 = vmatprep.subr.mxu0 0.0
        %1152 = vmatpush1.msra.mxu0 0.0
        %1153 = vmatprep.subr.mxu0 0.0
        %1154 = vmatpush1.msra.mxu0 0.0
        %1155 = vmatprep.subr.mxu0 0.0
        %1156 = vmatpush1.msra.mxu0 0.0
        %1157 = vmatprep.subr.mxu0 0.0
        %1158 = vmatpush1.msra.mxu0 0.0
        %1159 = vmatprep.subr.mxu0 0.0
        %1160 = vmatpush1.msra.mxu0 0.0
        %1161 = vmatprep.subr.mxu0 0.0
        %1162 = vmatpush1.msra.mxu0 0.0
        %1163 = vmatprep.subr.mxu0 0.0
        %1164 = vmatpush1.msra.mxu0 0.0
        %1165 = vmatprep.subr.mxu0 0.0
        %1166 = vmatpush1.msra.mxu0 0.0
        %1167 = vmatprep.subr.mxu0 0.0
        %1168 = vmatpush1.msra.mxu0 0.0
        %1169 = vmatprep.subr.mxu0 0.0
        %1170 = vmatpush1.msra.mxu0 0.0
        %1171 = vmatprep.subr.mxu0 0.0
        %1172 = vmatpush1.msra.mxu0 0.0
        %1173 = vmatprep.subr.mxu0 0.0
        %1174 = vmatpush1.msra.mxu0 0.0
        %1175 = vmatprep.subr.mxu0 0.0
        %1176 = vmatpush1.msra.mxu0 0.0
        %1177 = vmatprep.subr.mxu0 0.0
        %1178 = vmatpush1.msra.mxu0 0.0
        %1179 = vmatprep.subr.mxu0 0.0
        %1180 = vmatpush1.msra.mxu0 0.0
        %1181 = vmatprep.subr.mxu0 0.0
        %1182 = vmatpush1.msra.mxu0 0.0
        %1183 = vmatprep.subr.mxu0 0.0
        %1184 = vmatpush1.msra.mxu0 0.0
        %1185 = vmatprep.subr.mxu0 0.0
        %1186 = vmatpush1.msra.mxu0 0.0
        %1187 = vmatprep.subr.mxu0 0.0
        %1188 = vmatpush1.msra.mxu0 0.0
        %1189 = vmatprep.subr.mxu0 0.0
        %1190 = vmatpush1.msra.mxu0 0.0
        %1191 = vmatprep.subr.mxu0 0.0
        %1192 = vmatpush1.msra.mxu0 0.0
        %1193 = vmatprep.subr.mxu0 0.0
        %1194 = vmatpush1.msra.mxu0 0.0
        %1195 = vmatprep.mubr.f32.mxu0 0.0
        %1196 = vmatmul.mubr.f32.gmra.mrb[0].mxu0 %v1126
        %v1197 = vpop.f32.mrb[0].mxu0
        %v1198 = vadd.f32 %v1117, %v1197
        %v1199 = vpop.f32.mrb[0].mxu0
        %1200 = vmatprep.mubr.f32.mxu0 0.0
        %1201 = vmatmul.mubr.f32.gmra.mrb[0].mxu0 %v1129
        %v1202 = vpop.f32.mrb[0].mxu0
        %v1203 = vadd.f32 %v1122, %v1202
        %v1204 = vpop.f32.mrb[0].mxu0
        %1205 = vdwg.mxu0
        %s1206 = scalar_lea.vmem %s802, 32 [#allocation16]
        %v1207 = vld [vmem:[%s1206] sm:$0xff]
        %v1208 = vld [vmem:[%s1206 + $0x8] sm:$0xff]
        %v1209 = vld [vmem:[%s1206 + $0x10] sm:$0xff]
        %v1210 = vld [vmem:[%s1206 + $0x18] sm:$0xff]
        %1211 = vmatprep.subr.mxu0 0.0
        %1212 = vmatpush1.msra.mxu0 %v1207
        %1213 = vmatprep.subr.mxu0 0.0
        %1214 = vmatpush1.msra.mxu0 %v1208
        %1215 = vmatprep.subr.mxu0 0.0
        %1216 = vmatpush1.msra.mxu0 %v1209
        %1217 = vmatprep.subr.mxu0 0.0
        %1218 = vmatpush1.msra.mxu0 %v1210
        %1219 = vmatprep.subr.mxu0 0.0
        %1220 = vmatpush1.msra.mxu0 0.0
        %1221 = vmatprep.subr.mxu0 0.0
        %1222 = vmatpush1.msra.mxu0 0.0
        %1223 = vmatprep.subr.mxu0 0.0
        %1224 = vmatpush1.msra.mxu0 0.0
        %1225 = vmatprep.subr.mxu0 0.0
        %1226 = vmatpush1.msra.mxu0 0.0
        %1227 = vmatprep.subr.mxu0 0.0
        %1228 = vmatpush1.msra.mxu0 0.0
        %1229 = vmatprep.subr.mxu0 0.0
        %1230 = vmatpush1.msra.mxu0 0.0
        %1231 = vmatprep.subr.mxu0 0.0
        %1232 = vmatpush1.msra.mxu0 0.0
        %1233 = vmatprep.subr.mxu0 0.0
        %1234 = vmatpush1.msra.mxu0 0.0
        %1235 = vmatprep.subr.mxu0 0.0
        %1236 = vmatpush1.msra.mxu0 0.0
        %1237 = vmatprep.subr.mxu0 0.0
        %1238 = vmatpush1.msra.mxu0 0.0
        %1239 = vmatprep.subr.mxu0 0.0
        %1240 = vmatpush1.msra.mxu0 0.0
        %1241 = vmatprep.subr.mxu0 0.0
        %1242 = vmatpush1.msra.mxu0 0.0
        %1243 = vmatprep.subr.mxu0 0.0
        %1244 = vmatpush1.msra.mxu0 0.0
        %1245 = vmatprep.subr.mxu0 0.0
        %1246 = vmatpush1.msra.mxu0 0.0
        %1247 = vmatprep.subr.mxu0 0.0
        %1248 = vmatpush1.msra.mxu0 0.0
        %1249 = vmatprep.subr.mxu0 0.0
        %1250 = vmatpush1.msra.mxu0 0.0
        %1251 = vmatprep.subr.mxu0 0.0
        %1252 = vmatpush1.msra.mxu0 0.0
        %1253 = vmatprep.subr.mxu0 0.0
        %1254 = vmatpush1.msra.mxu0 0.0
        %1255 = vmatprep.subr.mxu0 0.0
        %1256 = vmatpush1.msra.mxu0 0.0
        %1257 = vmatprep.subr.mxu0 0.0
        %1258 = vmatpush1.msra.mxu0 0.0
        %1259 = vmatprep.subr.mxu0 0.0
        %1260 = vmatpush1.msra.mxu0 0.0
        %1261 = vmatprep.subr.mxu0 0.0
        %1262 = vmatpush1.msra.mxu0 0.0
        %1263 = vmatprep.subr.mxu0 0.0
        %1264 = vmatpush1.msra.mxu0 0.0
        %1265 = vmatprep.subr.mxu0 0.0
        %1266 = vmatpush1.msra.mxu0 0.0
        %1267 = vmatprep.subr.mxu0 0.0
        %1268 = vmatpush1.msra.mxu0 0.0
        %1269 = vmatprep.subr.mxu0 0.0
        %1270 = vmatpush1.msra.mxu0 0.0
        %1271 = vmatprep.subr.mxu0 0.0
        %1272 = vmatpush1.msra.mxu0 0.0
        %1273 = vmatprep.subr.mxu0 0.0
        %1274 = vmatpush1.msra.mxu0 0.0
        %1275 = vmatprep.mubr.f32.mxu0 0.0
        %1276 = vmatmul.mubr.f32.gmra.mrb[0].mxu0 %v1045
        %v1277 = vpop.f32.mrb[0].mxu0
        %v1278 = vadd.f32 0.0, %v1277
        %v1279 = vpop.f32.mrb[0].mxu0
        %1280 = vmatprep.mubr.f32.mxu0 0.0
        %1281 = vmatmul.mubr.f32.gmra.mrb[0].mxu0 %v1048
        %v1282 = vpop.f32.mrb[0].mxu0
        %v1283 = vadd.f32 0.0, %v1282
        %v1284 = vpop.f32.mrb[0].mxu0
        %1285 = vdwg.mxu0
        %1286 = vmatprep.subr.mxu0 0.0
        %1287 = vmatpush1.msra.mxu0 %v1032
        %1288 = vmatprep.subr.mxu0 0.0
        %1289 = vmatpush1.msra.mxu0 %v1033
        %1290 = vmatprep.subr.mxu0 0.0
        %1291 = vmatpush1.msra.mxu0 %v1034
        %1292 = vmatprep.subr.mxu0 0.0
        %1293 = vmatpush1.msra.mxu0 %v1035
        %1294 = vmatprep.subr.mxu0 0.0
        %1295 = vmatpush1.msra.mxu0 0.0
        %1296 = vmatprep.subr.mxu0 0.0
        %1297 = vmatpush1.msra.mxu0 0.0
        %1298 = vmatprep.subr.mxu0 0.0
        %1299 = vmatpush1.msra.mxu0 0.0
        %1300 = vmatprep.subr.mxu0 0.0
        %1301 = vmatpush1.msra.mxu0 0.0
        %1302 = vmatprep.subr.mxu0 0.0
        %1303 = vmatpush1.msra.mxu0 0.0
        %1304 = vmatprep.subr.mxu0 0.0
        %1305 = vmatpush1.msra.mxu0 0.0
        %1306 = vmatprep.subr.mxu0 0.0
        %1307 = vmatpush1.msra.mxu0 0.0
        %1308 = vmatprep.subr.mxu0 0.0
        %1309 = vmatpush1.msra.mxu0 0.0
        %1310 = vmatprep.subr.mxu0 0.0
        %1311 = vmatpush1.msra.mxu0 0.0
        %1312 = vmatprep.subr.mxu0 0.0
        %1313 = vmatpush1.msra.mxu0 0.0
        %1314 = vmatprep.subr.mxu0 0.0
        %1315 = vmatpush1.msra.mxu0 0.0
        %1316 = vmatprep.subr.mxu0 0.0
        %1317 = vmatpush1.msra.mxu0 0.0
        %1318 = vmatprep.subr.mxu0 0.0
        %1319 = vmatpush1.msra.mxu0 0.0
        %1320 = vmatprep.subr.mxu0 0.0
        %1321 = vmatpush1.msra.mxu0 0.0
        %1322 = vmatprep.subr.mxu0 0.0
        %1323 = vmatpush1.msra.mxu0 0.0
        %1324 = vmatprep.subr.mxu0 0.0
        %1325 = vmatpush1.msra.mxu0 0.0
        %1326 = vmatprep.subr.mxu0 0.0
        %1327 = vmatpush1.msra.mxu0 0.0
        %1328 = vmatprep.subr.mxu0 0.0
        %1329 = vmatpush1.msra.mxu0 0.0
        %1330 = vmatprep.subr.mxu0 0.0
        %1331 = vmatpush1.msra.mxu0 0.0
        %1332 = vmatprep.subr.mxu0 0.0
        %1333 = vmatpush1.msra.mxu0 0.0
        %1334 = vmatprep.subr.mxu0 0.0
        %1335 = vmatpush1.msra.mxu0 0.0
        %1336 = vmatprep.subr.mxu0 0.0
        %1337 = vmatpush1.msra.mxu0 0.0
        %1338 = vmatprep.subr.mxu0 0.0
        %1339 = vmatpush1.msra.mxu0 0.0
        %1340 = vmatprep.subr.mxu0 0.0
        %1341 = vmatpush1.msra.mxu0 0.0
        %1342 = vmatprep.subr.mxu0 0.0
        %1343 = vmatpush1.msra.mxu0 0.0
        %1344 = vmatprep.subr.mxu0 0.0
        %1345 = vmatpush1.msra.mxu0 0.0
        %1346 = vmatprep.subr.mxu0 0.0
        %1347 = vmatpush1.msra.mxu0 0.0
        %1348 = vmatprep.subr.mxu0 0.0
        %1349 = vmatpush1.msra.mxu0 0.0
        %1350 = vmatprep.mubr.f32.mxu0 0.0
        %1351 = vmatmul.mubr.f32.gmra.mrb[0].mxu0 %v1126
        %v1352 = vpop.f32.mrb[0].mxu0
        %v1353 = vadd.f32 %v1278, %v1352
        %v1354 = vpop.f32.mrb[0].mxu0
        %1355 = vmatprep.mubr.f32.mxu0 0.0
        %1356 = vmatmul.mubr.f32.gmra.mrb[0].mxu0 %v1129
        %v1357 = vpop.f32.mrb[0].mxu0
        %v1358 = vadd.f32 %v1283, %v1357
        %v1359 = vpop.f32.mrb[0].mxu0
        %1360 = vdwg.mxu0
        %s1361 = scalar_lea.vmem %s793, 64 [#allocation15]
        %v1362 = vld [vmem:[%s1361] sm:$0xff]
        %v1363 = vld [vmem:[%s1361 + $0x8] sm:$0xff]
        %v1364 = vld [vmem:[%s1361 + $0x10] sm:$0xff]
        %v1365 = vld [vmem:[%s1361 + $0x18] sm:$0xff]
        %v1367 = vsel %vm1043, %v1024, 0
        %v1370 = vsel %vm1043, %v1025, 0
        %1372 = vmatprep.subr.mxu0 0.0
        %1373 = vmatpush1.msra.mxu0 %v1362
        %1374 = vmatprep.subr.mxu0 0.0
        %1375 = vmatpush1.msra.mxu0 %v1363
        %1376 = vmatprep.subr.mxu0 0.0
        %1377 = vmatpush1.msra.mxu0 %v1364
        %1378 = vmatprep.subr.mxu0 0.0
        %1379 = vmatpush1.msra.mxu0 %v1365
        %1380 = vmatprep.subr.mxu0 0.0
        %1381 = vmatpush1.msra.mxu0 0.0
        %1382 = vmatprep.subr.mxu0 0.0
        %1383 = vmatpush1.msra.mxu0 0.0
        %1384 = vmatprep.subr.mxu0 0.0
        %1385 = vmatpush1.msra.mxu0 0.0
        %1386 = vmatprep.subr.mxu0 0.0
        %1387 = vmatpush1.msra.mxu0 0.0
        %1388 = vmatprep.subr.mxu0 0.0
        %1389 = vmatpush1.msra.mxu0 0.0
        %1390 = vmatprep.subr.mxu0 0.0
        %1391 = vmatpush1.msra.mxu0 0.0
        %1392 = vmatprep.subr.mxu0 0.0
        %1393 = vmatpush1.msra.mxu0 0.0
        %1394 = vmatprep.subr.mxu0 0.0
        %1395 = vmatpush1.msra.mxu0 0.0
        %1396 = vmatprep.subr.mxu0 0.0
        %1397 = vmatpush1.msra.mxu0 0.0
        %1398 = vmatprep.subr.mxu0 0.0
        %1399 = vmatpush1.msra.mxu0 0.0
        %1400 = vmatprep.subr.mxu0 0.0
        %1401 = vmatpush1.msra.mxu0 0.0
        %1402 = vmatprep.subr.mxu0 0.0
        %1403 = vmatpush1.msra.mxu0 0.0
        %1404 = vmatprep.subr.mxu0 0.0
        %1405 = vmatpush1.msra.mxu0 0.0
        %1406 = vmatprep.subr.mxu0 0.0
        %1407 = vmatpush1.msra.mxu0 0.0
        %1408 = vmatprep.subr.mxu0 0.0
        %1409 = vmatpush1.msra.mxu0 0.0
        %1410 = vmatprep.subr.mxu0 0.0
        %1411 = vmatpush1.msra.mxu0 0.0
        %1412 = vmatprep.subr.mxu0 0.0
        %1413 = vmatpush1.msra.mxu0 0.0
        %1414 = vmatprep.subr.mxu0 0.0
        %1415 = vmatpush1.msra.mxu0 0.0
        %1416 = vmatprep.subr.mxu0 0.0
        %1417 = vmatpush1.msra.mxu0 0.0
        %1418 = vmatprep.subr.mxu0 0.0
        %1419 = vmatpush1.msra.mxu0 0.0
        %1420 = vmatprep.subr.mxu0 0.0
        %1421 = vmatpush1.msra.mxu0 0.0
        %1422 = vmatprep.subr.mxu0 0.0
        %1423 = vmatpush1.msra.mxu0 0.0
        %1424 = vmatprep.subr.mxu0 0.0
        %1425 = vmatpush1.msra.mxu0 0.0
        %1426 = vmatprep.subr.mxu0 0.0
        %1427 = vmatpush1.msra.mxu0 0.0
        %1428 = vmatprep.subr.mxu0 0.0
        %1429 = vmatpush1.msra.mxu0 0.0
        %1430 = vmatprep.subr.mxu0 0.0
        %1431 = vmatpush1.msra.mxu0 0.0
        %1432 = vmatprep.subr.mxu0 0.0
        %1433 = vmatpush1.msra.mxu0 0.0
        %1434 = vmatprep.subr.mxu0 0.0
        %1435 = vmatpush1.msra.mxu0 0.0
        %1436 = vmatprep.mubr.f32.mxu0 0.0
        %1437 = vmatmul.mubr.f32.gmra.mrb[0].mxu0 %v1367
        %v1438 = vpop.f32.mrb[0].mxu0
        %v1439 = vadd.f32 0.0, %v1438
        %v1440 = vpop.f32.mrb[0].mxu0
        %1441 = vmatprep.mubr.f32.mxu0 0.0
        %1442 = vmatmul.mubr.f32.gmra.mrb[0].mxu0 %v1370
        %v1443 = vpop.f32.mrb[0].mxu0
        %v1444 = vadd.f32 0.0, %v1443
        %v1445 = vpop.f32.mrb[0].mxu0
        %1446 = vdwg.mxu0
        %v1447 = vadd.f32 %v1198, %v1439
        %v1448 = vadd.f32 %v1203, %v1444
        %s1449 = scalar_lea.vmem %s802, 64 [#allocation16]
        %v1450 = vld [vmem:[%s1449] sm:$0xff]
        %v1451 = vld [vmem:[%s1449 + $0x8] sm:$0xff]
        %v1452 = vld [vmem:[%s1449 + $0x10] sm:$0xff]
        %v1453 = vld [vmem:[%s1449 + $0x18] sm:$0xff]
        %1454 = vmatprep.subr.mxu0 0.0
        %1455 = vmatpush1.msra.mxu0 %v1450
        %1456 = vmatprep.subr.mxu0 0.0
        %1457 = vmatpush1.msra.mxu0 %v1451
        %1458 = vmatprep.subr.mxu0 0.0
        %1459 = vmatpush1.msra.mxu0 %v1452
        %1460 = vmatprep.subr.mxu0 0.0
        %1461 = vmatpush1.msra.mxu0 %v1453
        %1462 = vmatprep.subr.mxu0 0.0
        %1463 = vmatpush1.msra.mxu0 0.0
        %1464 = vmatprep.subr.mxu0 0.0
        %1465 = vmatpush1.msra.mxu0 0.0
        %1466 = vmatprep.subr.mxu0 0.0
        %1467 = vmatpush1.msra.mxu0 0.0
        %1468 = vmatprep.subr.mxu0 0.0
        %1469 = vmatpush1.msra.mxu0 0.0
        %1470 = vmatprep.subr.mxu0 0.0
        %1471 = vmatpush1.msra.mxu0 0.0
        %1472 = vmatprep.subr.mxu0 0.0
        %1473 = vmatpush1.msra.mxu0 0.0
        %1474 = vmatprep.subr.mxu0 0.0
        %1475 = vmatpush1.msra.mxu0 0.0
        %1476 = vmatprep.subr.mxu0 0.0
        %1477 = vmatpush1.msra.mxu0 0.0
        %1478 = vmatprep.subr.mxu0 0.0
        %1479 = vmatpush1.msra.mxu0 0.0
        %1480 = vmatprep.subr.mxu0 0.0
        %1481 = vmatpush1.msra.mxu0 0.0
        %1482 = vmatprep.subr.mxu0 0.0
        %1483 = vmatpush1.msra.mxu0 0.0
        %1484 = vmatprep.subr.mxu0 0.0
        %1485 = vmatpush1.msra.mxu0 0.0
        %1486 = vmatprep.subr.mxu0 0.0
        %1487 = vmatpush1.msra.mxu0 0.0
        %1488 = vmatprep.subr.mxu0 0.0
        %1489 = vmatpush1.msra.mxu0 0.0
        %1490 = vmatprep.subr.mxu0 0.0
        %1491 = vmatpush1.msra.mxu0 0.0
        %1492 = vmatprep.subr.mxu0 0.0
        %1493 = vmatpush1.msra.mxu0 0.0
        %1494 = vmatprep.subr.mxu0 0.0
        %1495 = vmatpush1.msra.mxu0 0.0
        %1496 = vmatprep.subr.mxu0 0.0
        %1497 = vmatpush1.msra.mxu0 0.0
        %1498 = vmatprep.subr.mxu0 0.0
        %1499 = vmatpush1.msra.mxu0 0.0
        %1500 = vmatprep.subr.mxu0 0.0
        %1501 = vmatpush1.msra.mxu0 0.0
        %1502 = vmatprep.subr.mxu0 0.0
        %1503 = vmatpush1.msra.mxu0 0.0
        %1504 = vmatprep.subr.mxu0 0.0
        %1505 = vmatpush1.msra.mxu0 0.0
        %1506 = vmatprep.subr.mxu0 0.0
        %1507 = vmatpush1.msra.mxu0 0.0
        %1508 = vmatprep.subr.mxu0 0.0
        %1509 = vmatpush1.msra.mxu0 0.0
        %1510 = vmatprep.subr.mxu0 0.0
        %1511 = vmatpush1.msra.mxu0 0.0
        %1512 = vmatprep.subr.mxu0 0.0
        %1513 = vmatpush1.msra.mxu0 0.0
        %1514 = vmatprep.subr.mxu0 0.0
        %1515 = vmatpush1.msra.mxu0 0.0
        %1516 = vmatprep.subr.mxu0 0.0
        %1517 = vmatpush1.msra.mxu0 0.0
        %1518 = vmatprep.mubr.f32.mxu0 0.0
        %1519 = vmatmul.mubr.f32.gmra.mrb[0].mxu0 %v1367
        %v1520 = vpop.f32.mrb[0].mxu0
        %v1521 = vadd.f32 0.0, %v1520
        %v1522 = vpop.f32.mrb[0].mxu0
        %1523 = vmatprep.mubr.f32.mxu0 0.0
        %1524 = vmatmul.mubr.f32.gmra.mrb[0].mxu0 %v1370
        %v1525 = vpop.f32.mrb[0].mxu0
        %v1526 = vadd.f32 0.0, %v1525
        %v1527 = vpop.f32.mrb[0].mxu0
        %1528 = vdwg.mxu0
        %v1529 = vadd.f32 %v1353, %v1521
        %v1530 = vadd.f32 %v1358, %v1526
        %v1531 = vld [vmem:[%s810] sm:$0x1]
        %v1533 = vlaneseq
        %v1534 = vshrl.u32 %v1533, 7
        %v1535 = vsub.s32 0, %v1534
        %v1536 = vrot.slane %v1531, %v1535
        %v1538 = vadd.f32 %v1447, %v1536
        %v1539 = vadd.f32 %v1448, %v1536
        %v1540 = vld [vmem:[%s818] sm:$0x1]
        %v1542 = vlaneseq
        %v1543 = vshrl.u32 %v1542, 7
        %v1544 = vsub.s32 0, %v1543
        %v1545 = vrot.slane %v1540, %v1544
        %v1547 = vadd.f32 %v1529, %v1545
        %v1548 = vadd.f32 %v1530, %v1545
        %v1549 = vxor.u32 %v1547, 2147483648
        %v1550 = vxor.u32 %v1548, 2147483648
        %v1551 = vmul.f32 %v1549, 1.442695
        %v1552 = vpow.pop %v1551
        %v1553 = vmul.f32 %v1550, 1.442695
        %v1554 = vpow.pop %v1553
        %v1555 = vadd.f32 %v1552, 1.0
        %v1556 = vadd.f32 %v1554, 1.0
        %v1557 = vrcp.pop %v1555
        %v1558 = vmul.f32 1.0, %v1557
        %v1559 = vrcp.pop %v1556
        %v1560 = vmul.f32 1.0, %v1559
        %v1561 = vmul.f32 %v1538, %v1558
        %v1562 = vmul.f32 %v1539, %v1560
        %v1563 = vld [vmem:[#allocation19] sm:$0xff]
        %v1564 = vld [vmem:[#allocation19 + $0x8] sm:$0xff]
        %v1565 = vld [vmem:[#allocation19 + $0x10] sm:$0xff]
        %v1566 = vld [vmem:[#allocation19 + $0x18] sm:$0xff]
        %v1567 = vld [vmem:[#allocation20] sm:$0x1]
        %v1569 = vlaneseq
        %v1570 = vshrl.u32 %v1569, 7
        %v1571 = vsub.s32 0, %v1570
        %v1572 = vrot.slane %v1567, %v1571
        %v1575 = vsel %vm1043, %v1561, 0
        %v1578 = vsel %vm1043, %v1562, 0
        %1580 = vmatprep.subr.mxu0 0.0
        %1581 = vmatpush1.msra.mxu0 %v1563
        %1582 = vmatprep.subr.mxu0 0.0
        %1583 = vmatpush1.msra.mxu0 %v1564
        %1584 = vmatprep.subr.mxu0 0.0
        %1585 = vmatpush1.msra.mxu0 %v1565
        %1586 = vmatprep.subr.mxu0 0.0
        %1587 = vmatpush1.msra.mxu0 %v1566
        %1588 = vmatprep.subr.mxu0 0.0
        %1589 = vmatpush1.msra.mxu0 0.0
        %1590 = vmatprep.subr.mxu0 0.0
        %1591 = vmatpush1.msra.mxu0 0.0
        %1592 = vmatprep.subr.mxu0 0.0
        %1593 = vmatpush1.msra.mxu0 0.0
        %1594 = vmatprep.subr.mxu0 0.0
        %1595 = vmatpush1.msra.mxu0 0.0
        %1596 = vmatprep.subr.mxu0 0.0
        %1597 = vmatpush1.msra.mxu0 0.0
        %1598 = vmatprep.subr.mxu0 0.0
        %1599 = vmatpush1.msra.mxu0 0.0
        %1600 = vmatprep.subr.mxu0 0.0
        %1601 = vmatpush1.msra.mxu0 0.0
        %1602 = vmatprep.subr.mxu0 0.0
        %1603 = vmatpush1.msra.mxu0 0.0
        %1604 = vmatprep.subr.mxu0 0.0
        %1605 = vmatpush1.msra.mxu0 0.0
        %1606 = vmatprep.subr.mxu0 0.0
        %1607 = vmatpush1.msra.mxu0 0.0
        %1608 = vmatprep.subr.mxu0 0.0
        %1609 = vmatpush1.msra.mxu0 0.0
        %1610 = vmatprep.subr.mxu0 0.0
        %1611 = vmatpush1.msra.mxu0 0.0
        %1612 = vmatprep.subr.mxu0 0.0
        %1613 = vmatpush1.msra.mxu0 0.0
        %1614 = vmatprep.subr.mxu0 0.0
        %1615 = vmatpush1.msra.mxu0 0.0
        %1616 = vmatprep.subr.mxu0 0.0
        %1617 = vmatpush1.msra.mxu0 0.0
        %1618 = vmatprep.subr.mxu0 0.0
        %1619 = vmatpush1.msra.mxu0 0.0
        %1620 = vmatprep.subr.mxu0 0.0
        %1621 = vmatpush1.msra.mxu0 0.0
        %1622 = vmatprep.subr.mxu0 0.0
        %1623 = vmatpush1.msra.mxu0 0.0
        %1624 = vmatprep.subr.mxu0 0.0
        %1625 = vmatpush1.msra.mxu0 0.0
        %1626 = vmatprep.subr.mxu0 0.0
        %1627 = vmatpush1.msra.mxu0 0.0
        %1628 = vmatprep.subr.mxu0 0.0
        %1629 = vmatpush1.msra.mxu0 0.0
        %1630 = vmatprep.subr.mxu0 0.0
        %1631 = vmatpush1.msra.mxu0 0.0
        %1632 = vmatprep.subr.mxu0 0.0
        %1633 = vmatpush1.msra.mxu0 0.0
        %1634 = vmatprep.subr.mxu0 0.0
        %1635 = vmatpush1.msra.mxu0 0.0
        %1636 = vmatprep.subr.mxu0 0.0
        %1637 = vmatpush1.msra.mxu0 0.0
        %1638 = vmatprep.subr.mxu0 0.0
        %1639 = vmatpush1.msra.mxu0 0.0
        %1640 = vmatprep.subr.mxu0 0.0
        %1641 = vmatpush1.msra.mxu0 0.0
        %1642 = vmatprep.subr.mxu0 0.0
        %1643 = vmatpush1.msra.mxu0 0.0
        %1644 = vmatprep.mubr.f32.mxu0 0.0
        %1645 = vmatmul.mubr.f32.gmra.mrb[0].mxu0 %v1575
        %v1646 = vpop.f32.mrb[0].mxu0
        %v1647 = vadd.f32 %v1572, %v1646
        %v1648 = vpop.f32.mrb[0].mxu0
        %1649 = vmatprep.mubr.f32.mxu0 0.0
        %1650 = vmatmul.mubr.f32.gmra.mrb[0].mxu0 %v1578
        %v1651 = vpop.f32.mrb[0].mxu0
        %v1652 = vadd.f32 %v1572, %v1651
        %v1653 = vpop.f32.mrb[0].mxu0
        %1654 = vdwg.mxu0
        %v1655 = vadd.f32 %v1647, %v1022
        %v1656 = vadd.f32 %v1652, %v1023
        %v1657 = vmul.f32 %v1655, 0.5
        %v1658 = vmul.f32 %v1656, 0.5
        %v1659 = vld [vmem:[#allocation7] sm:$0xff]
        %v1660 = vld [vmem:[#allocation7 + $0x8] sm:$0xff]
        %v1661 = vld [vmem:[#allocation7 + $0x10] sm:$0xff]
        %v1662 = vld [vmem:[#allocation7 + $0x18] sm:$0xff]
        %vm1663 = vcmask 130048
        %v1665 = vsel %vm1663, %v1657, 0
        %1667 = vmatprep.subr.mxu0 0.0
        %1668 = vmatpush1.msra.mxu0 %v1659
        %1669 = vmatprep.subr.mxu0 0.0
        %1670 = vmatpush1.msra.mxu0 %v1660
        %1671 = vmatprep.subr.mxu0 0.0
        %1672 = vmatpush1.msra.mxu0 0.0
        %1673 = vmatprep.subr.mxu0 0.0
        %1674 = vmatpush1.msra.mxu0 0.0
        %1675 = vmatprep.subr.mxu0 0.0
        %1676 = vmatpush1.msra.mxu0 0.0
        %1677 = vmatprep.subr.mxu0 0.0
        %1678 = vmatpush1.msra.mxu0 0.0
        %1679 = vmatprep.subr.mxu0 0.0
        %1680 = vmatpush1.msra.mxu0 0.0
        %1681 = vmatprep.subr.mxu0 0.0
        %1682 = vmatpush1.msra.mxu0 0.0
        %1683 = vmatprep.subr.mxu0 0.0
        %1684 = vmatpush1.msra.mxu0 0.0
        %1685 = vmatprep.subr.mxu0 0.0
        %1686 = vmatpush1.msra.mxu0 0.0
        %1687 = vmatprep.subr.mxu0 0.0
        %1688 = vmatpush1.msra.mxu0 0.0
        %1689 = vmatprep.subr.mxu0 0.0
        %1690 = vmatpush1.msra.mxu0 0.0
        %1691 = vmatprep.subr.mxu0 0.0
        %1692 = vmatpush1.msra.mxu0 0.0
        %1693 = vmatprep.subr.mxu0 0.0
        %1694 = vmatpush1.msra.mxu0 0.0
        %1695 = vmatprep.subr.mxu0 0.0
        %1696 = vmatpush1.msra.mxu0 0.0
        %1697 = vmatprep.subr.mxu0 0.0
        %1698 = vmatpush1.msra.mxu0 0.0
        %1699 = vmatprep.subr.mxu0 0.0
        %1700 = vmatpush1.msra.mxu0 0.0
        %1701 = vmatprep.subr.mxu0 0.0
        %1702 = vmatpush1.msra.mxu0 0.0
        %1703 = vmatprep.subr.mxu0 0.0
        %1704 = vmatpush1.msra.mxu0 0.0
        %1705 = vmatprep.subr.mxu0 0.0
        %1706 = vmatpush1.msra.mxu0 0.0
        %1707 = vmatprep.subr.mxu0 0.0
        %1708 = vmatpush1.msra.mxu0 0.0
        %1709 = vmatprep.subr.mxu0 0.0
        %1710 = vmatpush1.msra.mxu0 0.0
        %1711 = vmatprep.subr.mxu0 0.0
        %1712 = vmatpush1.msra.mxu0 0.0
        %1713 = vmatprep.subr.mxu0 0.0
        %1714 = vmatpush1.msra.mxu0 0.0
        %1715 = vmatprep.subr.mxu0 0.0
        %1716 = vmatpush1.msra.mxu0 0.0
        %1717 = vmatprep.subr.mxu0 0.0
        %1718 = vmatpush1.msra.mxu0 0.0
        %1719 = vmatprep.subr.mxu0 0.0
        %1720 = vmatpush1.msra.mxu0 0.0
        %1721 = vmatprep.subr.mxu0 0.0
        %1722 = vmatpush1.msra.mxu0 0.0
        %1723 = vmatprep.subr.mxu0 0.0
        %1724 = vmatpush1.msra.mxu0 0.0
        %1725 = vmatprep.subr.mxu0 0.0
        %1726 = vmatpush1.msra.mxu0 0.0
        %1727 = vmatprep.subr.mxu0 0.0
        %1728 = vmatpush1.msra.mxu0 0.0
        %1729 = vmatprep.subr.mxu0 0.0
        %1730 = vmatpush1.msra.mxu0 0.0
        %1731 = vmatprep.mubr.f32.mxu0 0.0
        %1732 = vmatmul.mubr.f32.gmra.mrb[0].mxu0 %v1665
        %v1733 = vpop.f32.mrb[0].mxu0
        %v1734 = vadd.f32 0.0, %v1733
        %v1735 = vpop.f32.mrb[0].mxu0
        %1736 = vdwg.mxu0
        %v1738 = vsel %vm1663, %v1658, 0
        %1740 = vmatprep.subr.mxu0 0.0
        %1741 = vmatpush1.msra.mxu0 %v1661
        %1742 = vmatprep.subr.mxu0 0.0
        %1743 = vmatpush1.msra.mxu0 %v1662
        %1744 = vmatprep.subr.mxu0 0.0
        %1745 = vmatpush1.msra.mxu0 0.0
        %1746 = vmatprep.subr.mxu0 0.0
        %1747 = vmatpush1.msra.mxu0 0.0
        %1748 = vmatprep.subr.mxu0 0.0
        %1749 = vmatpush1.msra.mxu0 0.0
        %1750 = vmatprep.subr.mxu0 0.0
        %1751 = vmatpush1.msra.mxu0 0.0
        %1752 = vmatprep.subr.mxu0 0.0
        %1753 = vmatpush1.msra.mxu0 0.0
        %1754 = vmatprep.subr.mxu0 0.0
        %1755 = vmatpush1.msra.mxu0 0.0
        %1756 = vmatprep.subr.mxu0 0.0
        %1757 = vmatpush1.msra.mxu0 0.0
        %1758 = vmatprep.subr.mxu0 0.0
        %1759 = vmatpush1.msra.mxu0 0.0
        %1760 = vmatprep.subr.mxu0 0.0
        %1761 = vmatpush1.msra.mxu0 0.0
        %1762 = vmatprep.subr.mxu0 0.0
        %1763 = vmatpush1.msra.mxu0 0.0
        %1764 = vmatprep.subr.mxu0 0.0
        %1765 = vmatpush1.msra.mxu0 0.0
        %1766 = vmatprep.subr.mxu0 0.0
        %1767 = vmatpush1.msra.mxu0 0.0
        %1768 = vmatprep.subr.mxu0 0.0
        %1769 = vmatpush1.msra.mxu0 0.0
        %1770 = vmatprep.subr.mxu0 0.0
        %1771 = vmatpush1.msra.mxu0 0.0
        %1772 = vmatprep.subr.mxu0 0.0
        %1773 = vmatpush1.msra.mxu0 0.0
        %1774 = vmatprep.subr.mxu0 0.0
        %1775 = vmatpush1.msra.mxu0 0.0
        %1776 = vmatprep.subr.mxu0 0.0
        %1777 = vmatpush1.msra.mxu0 0.0
        %1778 = vmatprep.subr.mxu0 0.0
        %1779 = vmatpush1.msra.mxu0 0.0
        %1780 = vmatprep.subr.mxu0 0.0
        %1781 = vmatpush1.msra.mxu0 0.0
        %1782 = vmatprep.subr.mxu0 0.0
        %1783 = vmatpush1.msra.mxu0 0.0
        %1784 = vmatprep.subr.mxu0 0.0
        %1785 = vmatpush1.msra.mxu0 0.0
        %1786 = vmatprep.subr.mxu0 0.0
        %1787 = vmatpush1.msra.mxu0 0.0
        %1788 = vmatprep.subr.mxu0 0.0
        %1789 = vmatpush1.msra.mxu0 0.0
        %1790 = vmatprep.subr.mxu0 0.0
        %1791 = vmatpush1.msra.mxu0 0.0
        %1792 = vmatprep.subr.mxu0 0.0
        %1793 = vmatpush1.msra.mxu0 0.0
        %1794 = vmatprep.subr.mxu0 0.0
        %1795 = vmatpush1.msra.mxu0 0.0
        %1796 = vmatprep.subr.mxu0 0.0
        %1797 = vmatpush1.msra.mxu0 0.0
        %1798 = vmatprep.subr.mxu0 0.0
        %1799 = vmatpush1.msra.mxu0 0.0
        %1800 = vmatprep.subr.mxu0 0.0
        %1801 = vmatpush1.msra.mxu0 0.0
        %1802 = vmatprep.subr.mxu0 0.0
        %1803 = vmatpush1.msra.mxu0 0.0
        %1804 = vmatprep.mubr.f32.mxu0 0.0
        %1805 = vmatmul.mubr.f32.gmra.mrb[0].mxu0 %v1738
        %v1806 = vpop.f32.mrb[0].mxu0
        %v1807 = vadd.f32 0.0, %v1806
        %v1808 = vpop.f32.mrb[0].mxu0
        %1809 = vdwg.mxu0
        %vm1810 = vcmask 64512
        %v1811 = vsel %vm1810, %v1734, -inf
        %1812 = vmax.xlane.f32.xlu0 %v1811
        %v1813 = vpop.xlane.xlu0 %1812
        %v1814 = vsel %vm1810, %v1807, -inf
        %1815 = vmax.xlane.f32.xlu0 %v1814
        %v1816 = vpop.xlane.xlu0 %1815
        %v1817 = vsub.f32 %v1734, %v1813
        %v1818 = vsub.f32 %v1807, %v1816
        %v1819 = vmul.f32 %v1817, 1.442695
        %v1820 = vpow.pop %v1819
        %v1821 = vmul.f32 %v1818, 1.442695
        %v1822 = vpow.pop %v1821
        %v1823 = vsel %vm1810, %v1820, 0.0
        %1824 = vadd.xlane.f32.xlu0 %v1823
        %v1825 = vpop.xlane.xlu0 %1824
        %v1826 = vsel %vm1810, %v1822, 0.0
        %1827 = vadd.xlane.f32.xlu0 %v1826
        %v1828 = vpop.xlane.xlu0 %1827
        %v1829 = vrcp.pop %v1825
        %v1830 = vrcp.pop %v1828
        %v1831 = vmul.f32 %v1825, %v1829
        %v1832 = vmul.f32 %v1828, %v1830
        %v1833 = vsub.f32 2.0, %v1831
        %v1834 = vsub.f32 2.0, %v1832
        %v1835 = vmul.f32 %v1829, %v1833
        %v1836 = vmul.f32 %v1830, %v1834
        %v1837 = vmul.f32 %v1820, %v1835
        %v1838 = vmul.f32 %v1822, %v1836
        %v1839 = vld [vmem:[#allocation9] sm:$0xff]
        %v1840 = vld [vmem:[#allocation9 + $0x8] sm:$0xff]
        %v1842 = vsel %vm1810, %v1837, 0
        %1844 = vmatprep.subr.mxu0 0.0
        %1845 = vmatpush1.msra.mxu0 %v1839
        %1846 = vmatprep.subr.mxu0 0.0
        %1847 = vmatpush1.msra.mxu0 0.0
        %1848 = vmatprep.subr.mxu0 0.0
        %1849 = vmatpush1.msra.mxu0 0.0
        %1850 = vmatprep.subr.mxu0 0.0
        %1851 = vmatpush1.msra.mxu0 0.0
        %1852 = vmatprep.subr.mxu0 0.0
        %1853 = vmatpush1.msra.mxu0 0.0
        %1854 = vmatprep.subr.mxu0 0.0
        %1855 = vmatpush1.msra.mxu0 0.0
        %1856 = vmatprep.subr.mxu0 0.0
        %1857 = vmatpush1.msra.mxu0 0.0
        %1858 = vmatprep.subr.mxu0 0.0
        %1859 = vmatpush1.msra.mxu0 0.0
        %1860 = vmatprep.subr.mxu0 0.0
        %1861 = vmatpush1.msra.mxu0 0.0
        %1862 = vmatprep.subr.mxu0 0.0
        %1863 = vmatpush1.msra.mxu0 0.0
        %1864 = vmatprep.subr.mxu0 0.0
        %1865 = vmatpush1.msra.mxu0 0.0
        %1866 = vmatprep.subr.mxu0 0.0
        %1867 = vmatpush1.msra.mxu0 0.0
        %1868 = vmatprep.subr.mxu0 0.0
        %1869 = vmatpush1.msra.mxu0 0.0
        %1870 = vmatprep.subr.mxu0 0.0
        %1871 = vmatpush1.msra.mxu0 0.0
        %1872 = vmatprep.subr.mxu0 0.0
        %1873 = vmatpush1.msra.mxu0 0.0
        %1874 = vmatprep.subr.mxu0 0.0
        %1875 = vmatpush1.msra.mxu0 0.0
        %1876 = vmatprep.subr.mxu0 0.0
        %1877 = vmatpush1.msra.mxu0 0.0
        %1878 = vmatprep.subr.mxu0 0.0
        %1879 = vmatpush1.msra.mxu0 0.0
        %1880 = vmatprep.subr.mxu0 0.0
        %1881 = vmatpush1.msra.mxu0 0.0
        %1882 = vmatprep.subr.mxu0 0.0
        %1883 = vmatpush1.msra.mxu0 0.0
        %1884 = vmatprep.subr.mxu0 0.0
        %1885 = vmatpush1.msra.mxu0 0.0
        %1886 = vmatprep.subr.mxu0 0.0
        %1887 = vmatpush1.msra.mxu0 0.0
        %1888 = vmatprep.subr.mxu0 0.0
        %1889 = vmatpush1.msra.mxu0 0.0
        %1890 = vmatprep.subr.mxu0 0.0
        %1891 = vmatpush1.msra.mxu0 0.0
        %1892 = vmatprep.subr.mxu0 0.0
        %1893 = vmatpush1.msra.mxu0 0.0
        %1894 = vmatprep.subr.mxu0 0.0
        %1895 = vmatpush1.msra.mxu0 0.0
        %1896 = vmatprep.subr.mxu0 0.0
        %1897 = vmatpush1.msra.mxu0 0.0
        %1898 = vmatprep.subr.mxu0 0.0
        %1899 = vmatpush1.msra.mxu0 0.0
        %1900 = vmatprep.subr.mxu0 0.0
        %1901 = vmatpush1.msra.mxu0 0.0
        %1902 = vmatprep.subr.mxu0 0.0
        %1903 = vmatpush1.msra.mxu0 0.0
        %1904 = vmatprep.subr.mxu0 0.0
        %1905 = vmatpush1.msra.mxu0 0.0
        %1906 = vmatprep.subr.mxu0 0.0
        %1907 = vmatpush1.msra.mxu0 0.0
        %1908 = vmatprep.mubr.f32.mxu0 0.0
        %1909 = vmatmul.mubr.f32.gmra.mrb[0].mxu0 %v1842
        %v1910 = vpop.f32.mrb[0].mxu0
        %v1911 = vadd.f32 0.0, %v1910
        %v1912 = vpop.f32.mrb[0].mxu0
        %1913 = vdwg.mxu0
        %v1915 = vsel %vm1810, %v1838, 0
        %1917 = vmatprep.subr.mxu0 0.0
        %1918 = vmatpush1.msra.mxu0 %v1840
        %1919 = vmatprep.subr.mxu0 0.0
        %1920 = vmatpush1.msra.mxu0 0.0
        %1921 = vmatprep.subr.mxu0 0.0
        %1922 = vmatpush1.msra.mxu0 0.0
        %1923 = vmatprep.subr.mxu0 0.0
        %1924 = vmatpush1.msra.mxu0 0.0
        %1925 = vmatprep.subr.mxu0 0.0
        %1926 = vmatpush1.msra.mxu0 0.0
        %1927 = vmatprep.subr.mxu0 0.0
        %1928 = vmatpush1.msra.mxu0 0.0
        %1929 = vmatprep.subr.mxu0 0.0
        %1930 = vmatpush1.msra.mxu0 0.0
        %1931 = vmatprep.subr.mxu0 0.0
        %1932 = vmatpush1.msra.mxu0 0.0
        %1933 = vmatprep.subr.mxu0 0.0
        %1934 = vmatpush1.msra.mxu0 0.0
        %1935 = vmatprep.subr.mxu0 0.0
        %1936 = vmatpush1.msra.mxu0 0.0
        %1937 = vmatprep.subr.mxu0 0.0
        %1938 = vmatpush1.msra.mxu0 0.0
        %1939 = vmatprep.subr.mxu0 0.0
        %1940 = vmatpush1.msra.mxu0 0.0
        %1941 = vmatprep.subr.mxu0 0.0
        %1942 = vmatpush1.msra.mxu0 0.0
        %1943 = vmatprep.subr.mxu0 0.0
        %1944 = vmatpush1.msra.mxu0 0.0
        %1945 = vmatprep.subr.mxu0 0.0
        %1946 = vmatpush1.msra.mxu0 0.0
        %1947 = vmatprep.subr.mxu0 0.0
        %1948 = vmatpush1.msra.mxu0 0.0
        %1949 = vmatprep.subr.mxu0 0.0
        %1950 = vmatpush1.msra.mxu0 0.0
        %1951 = vmatprep.subr.mxu0 0.0
        %1952 = vmatpush1.msra.mxu0 0.0
        %1953 = vmatprep.subr.mxu0 0.0
        %1954 = vmatpush1.msra.mxu0 0.0
        %1955 = vmatprep.subr.mxu0 0.0
        %1956 = vmatpush1.msra.mxu0 0.0
        %1957 = vmatprep.subr.mxu0 0.0
        %1958 = vmatpush1.msra.mxu0 0.0
        %1959 = vmatprep.subr.mxu0 0.0
        %1960 = vmatpush1.msra.mxu0 0.0
        %1961 = vmatprep.subr.mxu0 0.0
        %1962 = vmatpush1.msra.mxu0 0.0
        %1963 = vmatprep.subr.mxu0 0.0
        %1964 = vmatpush1.msra.mxu0 0.0
        %1965 = vmatprep.subr.mxu0 0.0
        %1966 = vmatpush1.msra.mxu0 0.0
        %1967 = vmatprep.subr.mxu0 0.0
        %1968 = vmatpush1.msra.mxu0 0.0
        %1969 = vmatprep.subr.mxu0 0.0
        %1970 = vmatpush1.msra.mxu0 0.0
        %1971 = vmatprep.subr.mxu0 0.0
        %1972 = vmatpush1.msra.mxu0 0.0
        %1973 = vmatprep.subr.mxu0 0.0
        %1974 = vmatpush1.msra.mxu0 0.0
        %1975 = vmatprep.subr.mxu0 0.0
        %1976 = vmatpush1.msra.mxu0 0.0
        %1977 = vmatprep.subr.mxu0 0.0
        %1978 = vmatpush1.msra.mxu0 0.0
        %1979 = vmatprep.subr.mxu0 0.0
        %1980 = vmatpush1.msra.mxu0 0.0
        %1981 = vmatprep.mubr.f32.mxu0 0.0
        %1982 = vmatmul.mubr.f32.gmra.mrb[0].mxu0 %v1915
        %v1983 = vpop.f32.mrb[0].mxu0
        %v1984 = vadd.f32 0.0, %v1983
        %v1985 = vpop.f32.mrb[0].mxu0
        %1986 = vdwg.mxu0
        %v1987 = vld [vmem:[#allocation21] sm:$0xff]
        %v1988 = vld [vmem:[#allocation21 + $0x8] sm:$0xff]
        %v1989 = vld [vmem:[#allocation22] sm:$0x1]
        %v1991 = vlaneseq
        %v1992 = vshrl.u32 %v1991, 7
        %v1993 = vsub.s32 0, %v1992
        %v1994 = vrot.slane %v1989, %v1993
        %v1997 = vsel %vm1663, %v1911, 0
        %v2000 = vsel %vm1663, %v1984, 0
        %2002 = vmatprep.subr.mxu0 0.0
        %2003 = vmatpush1.msra.mxu0 %v1987
        %2004 = vmatprep.subr.mxu0 0.0
        %2005 = vmatpush1.msra.mxu0 %v1988
        %2006 = vmatprep.subr.mxu0 0.0
        %2007 = vmatpush1.msra.mxu0 0.0
        %2008 = vmatprep.subr.mxu0 0.0
        %2009 = vmatpush1.msra.mxu0 0.0
        %2010 = vmatprep.subr.mxu0 0.0
        %2011 = vmatpush1.msra.mxu0 0.0
        %2012 = vmatprep.subr.mxu0 0.0
        %2013 = vmatpush1.msra.mxu0 0.0
        %2014 = vmatprep.subr.mxu0 0.0
        %2015 = vmatpush1.msra.mxu0 0.0
        %2016 = vmatprep.subr.mxu0 0.0
        %2017 = vmatpush1.msra.mxu0 0.0
        %2018 = vmatprep.subr.mxu0 0.0
        %2019 = vmatpush1.msra.mxu0 0.0
        %2020 = vmatprep.subr.mxu0 0.0
        %2021 = vmatpush1.msra.mxu0 0.0
        %2022 = vmatprep.subr.mxu0 0.0
        %2023 = vmatpush1.msra.mxu0 0.0
        %2024 = vmatprep.subr.mxu0 0.0
        %2025 = vmatpush1.msra.mxu0 0.0
        %2026 = vmatprep.subr.mxu0 0.0
        %2027 = vmatpush1.msra.mxu0 0.0
        %2028 = vmatprep.subr.mxu0 0.0
        %2029 = vmatpush1.msra.mxu0 0.0
        %2030 = vmatprep.subr.mxu0 0.0
        %2031 = vmatpush1.msra.mxu0 0.0
        %2032 = vmatprep.subr.mxu0 0.0
        %2033 = vmatpush1.msra.mxu0 0.0
        %2034 = vmatprep.subr.mxu0 0.0
        %2035 = vmatpush1.msra.mxu0 0.0
        %2036 = vmatprep.subr.mxu0 0.0
        %2037 = vmatpush1.msra.mxu0 0.0
        %2038 = vmatprep.subr.mxu0 0.0
        %2039 = vmatpush1.msra.mxu0 0.0
        %2040 = vmatprep.subr.mxu0 0.0
        %2041 = vmatpush1.msra.mxu0 0.0
        %2042 = vmatprep.subr.mxu0 0.0
        %2043 = vmatpush1.msra.mxu0 0.0
        %2044 = vmatprep.subr.mxu0 0.0
        %2045 = vmatpush1.msra.mxu0 0.0
        %2046 = vmatprep.subr.mxu0 0.0
        %2047 = vmatpush1.msra.mxu0 0.0
        %2048 = vmatprep.subr.mxu0 0.0
        %2049 = vmatpush1.msra.mxu0 0.0
        %2050 = vmatprep.subr.mxu0 0.0
        %2051 = vmatpush1.msra.mxu0 0.0
        %2052 = vmatprep.subr.mxu0 0.0
        %2053 = vmatpush1.msra.mxu0 0.0
        %2054 = vmatprep.subr.mxu0 0.0
        %2055 = vmatpush1.msra.mxu0 0.0
        %2056 = vmatprep.subr.mxu0 0.0
        %2057 = vmatpush1.msra.mxu0 0.0
        %2058 = vmatprep.subr.mxu0 0.0
        %2059 = vmatpush1.msra.mxu0 0.0
        %2060 = vmatprep.subr.mxu0 0.0
        %2061 = vmatpush1.msra.mxu0 0.0
        %2062 = vmatprep.subr.mxu0 0.0
        %2063 = vmatpush1.msra.mxu0 0.0
        %2064 = vmatprep.subr.mxu0 0.0
        %2065 = vmatpush1.msra.mxu0 0.0
        %2066 = vmatprep.mubr.f32.mxu0 0.0
        %2067 = vmatmul.mubr.f32.gmra.mrb[0].mxu0 %v1997
        %v2068 = vpop.f32.mrb[0].mxu0
        %v2069 = vadd.f32 %v1994, %v2068
        %v2070 = vpop.f32.mrb[0].mxu0
        %2071 = vmatprep.mubr.f32.mxu0 0.0
        %2072 = vmatmul.mubr.f32.gmra.mrb[0].mxu0 %v2000
        %v2073 = vpop.f32.mrb[0].mxu0
        %v2074 = vadd.f32 %v1994, %v2073
        %v2075 = vpop.f32.mrb[0].mxu0
        %2076 = vdwg.mxu0
        %v2077 = vadd.f32 %v1561, %v2069
        %v2078 = vadd.f32 %v1562, %v2074
        %v2079 = vmul.f32 %v2077, 0.5
        %v2080 = vmul.f32 %v2078, 0.5
        %v2081 = vadd.f32 %v2079, %v1024
        %v2082 = vadd.f32 %v2080, %v1025
        %v2083 = vmul.f32 %v2081, 0.5
        %v2084 = vmul.f32 %v2082, 0.5
        %2085 = vst.msk [vmem:[#allocation3 + $0x8] sm:$0xff] %vm1043, %v2083
        %2086 = vst.msk [vmem:[#allocation3 + $0x18] sm:$0xff] %vm1043, %v2084
        %p2087 = scmp.eq.s32.totalorder %s42, 1
        // Predicated region
        $region169: #{tpu_custom_call.1} parent=91 // pred_check
          %p2088 = pneg %p2087
        $region170: #{tpu_custom_call.1} parent=91 // pred_check_branch
          %2090 = sbr.rel (%p2088) target = $region172
        $region171: #{tpu_custom_call.1} parent=91 // pred_region
          %v2091 = vld [vmem:[#allocation24] sm:$0xff]
          %v2092 = vld [vmem:[#allocation24 + $0x8] sm:$0xff]
          %v2093 = vld [vmem:[#allocation24 + $0x10] sm:$0xff]
          %v2094 = vld [vmem:[#allocation24 + $0x18] sm:$0xff]
          %v2095 = vld [vmem:[#allocation25] sm:$0x1]
          %v2097 = vlaneseq
          %v2098 = vshrl.u32 %v2097, 7
          %v2099 = vsub.s32 0, %v2098
          %v2100 = vrot.slane %v2095, %v2099
          %v2103 = vsel %vm1043, %v2083, 0
          %v2106 = vsel %vm1043, %v2084, 0
          %2108 = vmatprep.subr.mxu0 0.0
          %2109 = vmatpush1.msra.mxu0 %v2091
          %2110 = vmatprep.subr.mxu0 0.0
          %2111 = vmatpush1.msra.mxu0 %v2092
          %2112 = vmatprep.subr.mxu0 0.0
          %2113 = vmatpush1.msra.mxu0 %v2093
          %2114 = vmatprep.subr.mxu0 0.0
          %2115 = vmatpush1.msra.mxu0 %v2094
          %2116 = vmatprep.subr.mxu0 0.0
          %2117 = vmatpush1.msra.mxu0 0.0
          %2118 = vmatprep.subr.mxu0 0.0
          %2119 = vmatpush1.msra.mxu0 0.0
          %2120 = vmatprep.subr.mxu0 0.0
          %2121 = vmatpush1.msra.mxu0 0.0
          %2122 = vmatprep.subr.mxu0 0.0
          %2123 = vmatpush1.msra.mxu0 0.0
          %2124 = vmatprep.subr.mxu0 0.0
          %2125 = vmatpush1.msra.mxu0 0.0
          %2126 = vmatprep.subr.mxu0 0.0
          %2127 = vmatpush1.msra.mxu0 0.0
          %2128 = vmatprep.subr.mxu0 0.0
          %2129 = vmatpush1.msra.mxu0 0.0
          %2130 = vmatprep.subr.mxu0 0.0
          %2131 = vmatpush1.msra.mxu0 0.0
          %2132 = vmatprep.subr.mxu0 0.0
          %2133 = vmatpush1.msra.mxu0 0.0
          %2134 = vmatprep.subr.mxu0 0.0
          %2135 = vmatpush1.msra.mxu0 0.0
          %2136 = vmatprep.subr.mxu0 0.0
          %2137 = vmatpush1.msra.mxu0 0.0
          %2138 = vmatprep.subr.mxu0 0.0
          %2139 = vmatpush1.msra.mxu0 0.0
          %2140 = vmatprep.subr.mxu0 0.0
          %2141 = vmatpush1.msra.mxu0 0.0
          %2142 = vmatprep.subr.mxu0 0.0
          %2143 = vmatpush1.msra.mxu0 0.0
          %2144 = vmatprep.subr.mxu0 0.0
          %2145 = vmatpush1.msra.mxu0 0.0
          %2146 = vmatprep.subr.mxu0 0.0
          %2147 = vmatpush1.msra.mxu0 0.0
          %2148 = vmatprep.subr.mxu0 0.0
          %2149 = vmatpush1.msra.mxu0 0.0
          %2150 = vmatprep.subr.mxu0 0.0
          %2151 = vmatpush1.msra.mxu0 0.0
          %2152 = vmatprep.subr.mxu0 0.0
          %2153 = vmatpush1.msra.mxu0 0.0
          %2154 = vmatprep.subr.mxu0 0.0
          %2155 = vmatpush1.msra.mxu0 0.0
          %2156 = vmatprep.subr.mxu0 0.0
          %2157 = vmatpush1.msra.mxu0 0.0
          %2158 = vmatprep.subr.mxu0 0.0
          %2159 = vmatpush1.msra.mxu0 0.0
          %2160 = vmatprep.subr.mxu0 0.0
          %2161 = vmatpush1.msra.mxu0 0.0
          %2162 = vmatprep.subr.mxu0 0.0
          %2163 = vmatpush1.msra.mxu0 0.0
          %2164 = vmatprep.subr.mxu0 0.0
          %2165 = vmatpush1.msra.mxu0 0.0
          %2166 = vmatprep.subr.mxu0 0.0
          %2167 = vmatpush1.msra.mxu0 0.0
          %2168 = vmatprep.subr.mxu0 0.0
          %2169 = vmatpush1.msra.mxu0 0.0
          %2170 = vmatprep.subr.mxu0 0.0
          %2171 = vmatpush1.msra.mxu0 0.0
          %2172 = vmatprep.mubr.f32.mxu0 0.0
          %2173 = vmatmul.mubr.f32.gmra.mrb[0].mxu0 %v2103
          %v2174 = vpop.f32.mrb[0].mxu0
          %v2175 = vadd.f32 %v2100, %v2174
          %v2176 = vpop.f32.mrb[0].mxu0
          %2177 = vmatprep.mubr.f32.mxu0 0.0
          %2178 = vmatmul.mubr.f32.gmra.mrb[0].mxu0 %v2106
          %v2179 = vpop.f32.mrb[0].mxu0
          %v2180 = vadd.f32 %v2100, %v2179
          %v2181 = vpop.f32.mrb[0].mxu0
          %2182 = vdwg.mxu0
          %v2183 = vld [vmem:[#allocation27] sm:$0xff]
          %v2184 = vld [vmem:[#allocation27 + $0x8] sm:$0xff]
          %v2185 = vld [vmem:[#allocation28] sm:$0x1]
          %v2187 = vlaneseq
          %v2188 = vshrl.u32 %v2187, 7
          %v2189 = vsub.s32 0, %v2188
          %v2190 = vrot.slane %v2185, %v2189
          %v2193 = vsel %vm1663, %v2175, 0
          %v2196 = vsel %vm1663, %v2180, 0
          %2198 = vmatprep.subr.mxu0 0.0
          %2199 = vmatpush1.msra.mxu0 %v2183
          %2200 = vmatprep.subr.mxu0 0.0
          %2201 = vmatpush1.msra.mxu0 %v2184
          %2202 = vmatprep.subr.mxu0 0.0
          %2203 = vmatpush1.msra.mxu0 0.0
          %2204 = vmatprep.subr.mxu0 0.0
          %2205 = vmatpush1.msra.mxu0 0.0
          %2206 = vmatprep.subr.mxu0 0.0
          %2207 = vmatpush1.msra.mxu0 0.0
          %2208 = vmatprep.subr.mxu0 0.0
          %2209 = vmatpush1.msra.mxu0 0.0
          %2210 = vmatprep.subr.mxu0 0.0
          %2211 = vmatpush1.msra.mxu0 0.0
          %2212 = vmatprep.subr.mxu0 0.0
          %2213 = vmatpush1.msra.mxu0 0.0
          %2214 = vmatprep.subr.mxu0 0.0
          %2215 = vmatpush1.msra.mxu0 0.0
          %2216 = vmatprep.subr.mxu0 0.0
          %2217 = vmatpush1.msra.mxu0 0.0
          %2218 = vmatprep.subr.mxu0 0.0
          %2219 = vmatpush1.msra.mxu0 0.0
          %2220 = vmatprep.subr.mxu0 0.0
          %2221 = vmatpush1.msra.mxu0 0.0
          %2222 = vmatprep.subr.mxu0 0.0
          %2223 = vmatpush1.msra.mxu0 0.0
          %2224 = vmatprep.subr.mxu0 0.0
          %2225 = vmatpush1.msra.mxu0 0.0
          %2226 = vmatprep.subr.mxu0 0.0
          %2227 = vmatpush1.msra.mxu0 0.0
          %2228 = vmatprep.subr.mxu0 0.0
          %2229 = vmatpush1.msra.mxu0 0.0
          %2230 = vmatprep.subr.mxu0 0.0
          %2231 = vmatpush1.msra.mxu0 0.0
          %2232 = vmatprep.subr.mxu0 0.0
          %2233 = vmatpush1.msra.mxu0 0.0
          %2234 = vmatprep.subr.mxu0 0.0
          %2235 = vmatpush1.msra.mxu0 0.0
          %2236 = vmatprep.subr.mxu0 0.0
          %2237 = vmatpush1.msra.mxu0 0.0
          %2238 = vmatprep.subr.mxu0 0.0
          %2239 = vmatpush1.msra.mxu0 0.0
          %2240 = vmatprep.subr.mxu0 0.0
          %2241 = vmatpush1.msra.mxu0 0.0
          %2242 = vmatprep.subr.mxu0 0.0
          %2243 = vmatpush1.msra.mxu0 0.0
          %2244 = vmatprep.subr.mxu0 0.0
          %2245 = vmatpush1.msra.mxu0 0.0
          %2246 = vmatprep.subr.mxu0 0.0
          %2247 = vmatpush1.msra.mxu0 0.0
          %2248 = vmatprep.subr.mxu0 0.0
          %2249 = vmatpush1.msra.mxu0 0.0
          %2250 = vmatprep.subr.mxu0 0.0
          %2251 = vmatpush1.msra.mxu0 0.0
          %2252 = vmatprep.subr.mxu0 0.0
          %2253 = vmatpush1.msra.mxu0 0.0
          %2254 = vmatprep.subr.mxu0 0.0
          %2255 = vmatpush1.msra.mxu0 0.0
          %2256 = vmatprep.subr.mxu0 0.0
          %2257 = vmatpush1.msra.mxu0 0.0
          %2258 = vmatprep.subr.mxu0 0.0
          %2259 = vmatpush1.msra.mxu0 0.0
          %2260 = vmatprep.subr.mxu0 0.0
          %2261 = vmatpush1.msra.mxu0 0.0
          %2262 = vmatprep.mubr.f32.mxu0 0.0
          %2263 = vmatmul.mubr.f32.gmra.mrb[0].mxu0 %v2193
          %v2264 = vpop.f32.mrb[0].mxu0
          %v2265 = vadd.f32 %v2190, %v2264
          %v2266 = vpop.f32.mrb[0].mxu0
          %2267 = vmatprep.mubr.f32.mxu0 0.0
          %2268 = vmatmul.mubr.f32.gmra.mrb[0].mxu0 %v2196
          %v2269 = vpop.f32.mrb[0].mxu0
          %v2270 = vadd.f32 %v2190, %v2269
          %v2271 = vpop.f32.mrb[0].mxu0
          %2272 = vdwg.mxu0
          %2273 = vrot.lane.b32.xlu0 %v1837, 16
          %v2274 = vpop.permute.xlu0 %2273
          %2275 = vrot.lane.b32.xlu0 %v1838, 16
          %v2276 = vpop.permute.xlu0 %2275
          %v2279 = vsel %vm1663, %v2265, %v2274
          %v2280 = vsel %vm1663, %v2270, %v2276
          %vm2281 = vcmask 195584
          %v2282 = vsel %vm2281, %v2279, 0.0
          %v2283 = vsel %vm2281, %v2280, 0.0
          %2284 = vst [vmem:[#allocation30] sm:$0xff] %v2282
          %2285 = vst [vmem:[#allocation30 + $0x8] sm:$0xff] %v2283
        $region172: #{tpu_custom_call.1} parent=91 // pred_fallthru
          _
        // Predicated region
        $region173: #{tpu_custom_call.1} parent=91 // pred_check
          %p2286 = pneg %p480
        $region174: #{tpu_custom_call.1} parent=91 // pred_check_branch
          %2288 = sbr.rel (%p2286) target = $region176
        $region175: #{tpu_custom_call.1} parent=91 // pred_region
          %s2289 = smul.u32 2, %s41
          %s2291 = ssub.s32 256, 256
          %2292 = vsyncadd [#allocation6], %s2291
          %s2293 = smul.addr %s2289, 128
          %s2294 = scalar_lea.hbm %s18, %s2293
          %s2295 = sshll.u32 [#allocation30], 4
          %s2296 = int_to_ptr.vmem [resolvable:$true] %s2295
          %2301 = dma.vmem_to_hbm [thread:$0]  %s2296, 256, %s2294, [#allocation6], 128, 128, 8
        $region176: #{tpu_custom_call.1} parent=91 // pred_fallthru
          _
        // Predicated region
        $region177: #{tpu_custom_call.1} parent=91 // pred_check
          %p2302 = pneg %p480
        $region178: #{tpu_custom_call.1} parent=91 // pred_check_branch
          %2304 = sbr.rel (%p2302) target = $region180
        $region179: #{tpu_custom_call.1} parent=91 // pred_region
          %2305 = dma.done [#allocation6], 256
        $region180: #{tpu_custom_call.1} parent=91 // pred_fallthru
          _
      $region92: #{tpu_custom_call.1} parent=5 // pred_fallthru
        _
      %p2306 = scmp.le.s32.totalorder 2, %s32
      // Predicated region
      $region181: #{tpu_custom_call.1} parent=5 // pred_check
        %p2307 = pneg %p2306
      $region182: #{tpu_custom_call.1} parent=5 // pred_check_branch
        %2309 = sbr.rel (%p2307) target = $region184
      $region183: #{tpu_custom_call.1} parent=5 // pred_region
        %s2310 = ssub.s32 %s32, 2
      $region184: #{tpu_custom_call.1} parent=5 // pred_fallthru
        _
    $region6: #{tpu_custom_call.1} parent=1 // loop_footer
      %s36 = sadd.s32 1, %s32
    $region7: #{tpu_custom_call.1} parent=1 // loop_footer_branch
      %31 = sbr.rel target = $region3
    $region8: #{tpu_custom_call.1} parent=1 // loop_exit
      _
    %2311 = vsyncpa [#allocation5], 1
    %s2312 = scalar_lea.sflag [#allocation5], 1
    %2313 = vsyncpa %s2312, 1
    %2314 = vsyncpa [#allocation8], 1
    %2315 = vsyncpa [#allocation11], 1
    %2316 = vsyncpa [#allocation14], 1
    %2317 = vsyncpa [#allocation23], 1
    %2318 = vsyncpa [#allocation26], 1
    %2319 = vsyncpa [#allocation29], 1
    %2320 = vsyncpa [#allocation6], 1
    %s2321 = scalar_lea.sflag [#allocation6], 1
    %2322 = vsyncpa %s2321, 1

// kernel: tpu_custom_call.1
$region0: #{tpu_custom_call.1}
  #allocation0 [shape = 'u32[]', space=smem, size = 0x4, offset = 0x4, fixed_abs, tag = 'smem constant byte address 0x4 - core index']
  #allocation1 [shape = 'u32[144,128]{1,0:T(1,128)}', space=vmem, size = 0x12000, scoped, tag = 'internal scratch']
  #allocation2 [shape = 'f32[2,8,16]{2,1,0:T(8,128)}', space=vmem, size = 0x2000, scoped, tag = 'scratch operand']
  #allocation3 [shape = 'f32[2,16,32]{2,1,0:T(8,128)}', space=vmem, size = 0x4000, scoped, tag = 'scratch operand']
  %s0 = inlined_call_operand.hbm [shape: f32[2,8,16], index: 0, kind: input, shape index: {}]
  %s1 = inlined_call_operand.hbm [shape: f32[2,16,8], index: 1, kind: input, shape index: {}]
  %s2 = inlined_call_operand.hbm [shape: f32[2,8,16], index: 2, kind: input, shape index: {}]
  %s3 = inlined_call_operand.hbm [shape: f32[8,16], index: 3, kind: input, shape index: {}]
  %s4 = inlined_call_operand.hbm [shape: f32[16,32], index: 4, kind: input, shape index: {}]
  %s5 = inlined_call_operand.hbm [shape: f32[1,32], index: 5, kind: input, shape index: {}]
  %s6 = inlined_call_operand.hbm [shape: f32[2,3,32,32], index: 6, kind: input, shape index: {}]
  %s7 = inlined_call_operand.hbm [shape: f32[2,3,32,32], index: 7, kind: input, shape index: {}]
  %s8 = inlined_call_operand.hbm [shape: f32[2,1,32], index: 8, kind: input, shape index: {}]
  %s9 = inlined_call_operand.hbm [shape: f32[2,1,32], index: 9, kind: input, shape index: {}]
  %s10 = inlined_call_operand.hbm [shape: f32[32,16], index: 10, kind: input, shape index: {}]
  %s11 = inlined_call_operand.hbm [shape: f32[1,16], index: 11, kind: input, shape index: {}]
  %s12 = inlined_call_operand.hbm [shape: f32[16,32], index: 12, kind: input, shape index: {}]
  %s13 = inlined_call_operand.hbm [shape: f32[1,32], index: 13, kind: input, shape index: {}]
  %s14 = inlined_call_operand.hbm [shape: f32[32,16], index: 14, kind: input, shape index: {}]
  %s15 = inlined_call_operand.hbm [shape: f32[1,16], index: 15, kind: input, shape index: {}]
  %s16 = inlined_call_operand.hbm [shape: f32[16,16], index: 16, kind: input, shape index: {}]
  %s17 = inlined_call_operand.hbm [shape: f32[1,16], index: 17, kind: input, shape index: {}]
  %s18 = inlined_call_operand.hbm [shape: f32[2,8,128], index: 18, kind: output, shape index: {}]
  %s19 = sld [smem:[#allocation0]]
  $region185: #{tpu_custom_call.1} parent=0
    _
  %s21 = ssub.s32 1, %s19
  %s22 = scalar_select 0, %s21, %s19
  $region1: #{tpu_custom_call.1} parent=0
    #allocation4 [shape = 'u8[8192]{0}', space=vmem, size = 0x2000, scoped, tag = 'input window, operand 0, single buffered']
    #allocation5 [shape = 's32[2]{0}', space=sflag, size = 0x8, scoped, tag = 'scoped memory for tpu_custom_call.1']
    #allocation6 [shape = 's32[2]{0}', space=sflag, size = 0x8, scoped, tag = 'scoped memory for tpu_custom_call.1']
    #allocation7 [shape = 'u8[16384]{0}', space=vmem, size = 0x4000, scoped, tag = 'input window, operand 1, single buffered']
    #allocation8 [shape = 's32[1]{0}', space=sflag, size = 0x4, scoped, tag = 'scoped memory for tpu_custom_call.1']
    #allocation9 [shape = 'u8[8192]{0}', space=vmem, size = 0x2000, scoped, tag = 'input window, operand 2, single buffered']
    #allocation10 [shape = 'u8[4096]{0}', space=vmem, size = 0x1000, scoped, tag = 'input window, operand 3, single buffered']
    #allocation11 [shape = 's32[1]{0}', space=sflag, size = 0x4, scoped, tag = 'scoped memory for tpu_custom_call.1']
    #allocation12 [shape = 'u8[8192]{0}', space=vmem, size = 0x2000, scoped, tag = 'input window, operand 4, single buffered']
    #allocation13 [shape = 'u8[512]{0}', space=vmem, size = 0x400, scoped, tag = 'input window, operand 5, single buffered']
    #allocation14 [shape = 's32[1]{0}', space=sflag, size = 0x4, scoped, tag = 'scoped memory for tpu_custom_call.1']
    #allocation15 [shape = 'u8[98304]{0}', space=vmem, size = 0x18000, scoped, tag = 'input window, operand 6']
    #allocation16 [shape = 'u8[98304]{0}', space=vmem, size = 0x18000, scoped, tag = 'input window, operand 7']
    #allocation17 [shape = 'u8[1024]{0}', space=vmem, size = 0x400, scoped, tag = 'input window, operand 8']
    #allocation18 [shape = 'u8[1024]{0}', space=vmem, size = 0x400, scoped, tag = 'input window, operand 9']
    #allocation19 [shape = 'u8[16384]{0}', space=vmem, size = 0x4000, scoped, tag = 'input window, operand 10, single buffered']
    #allocation20 [shape = 'u8[512]{0}', space=vmem, size = 0x400, scoped, tag = 'input window, operand 11, single buffered']
    #allocation21 [shape = 'u8[8192]{0}', space=vmem, size = 0x2000, scoped, tag = 'input window, operand 12, single buffered']
    #allocation22 [shape = 'u8[512]{0}', space=vmem, size = 0x400, scoped, tag = 'input window, operand 13, single buffered']
    #allocation23 [shape = 's32[1]{0}', space=sflag, size = 0x4, scoped, tag = 'scoped memory for tpu_custom_call.1']
    #allocation24 [shape = 'u8[16384]{0}', space=vmem, size = 0x4000, scoped, tag = 'input window, operand 14, single buffered']
    #allocation25 [shape = 'u8[512]{0}', space=vmem, size = 0x400, scoped, tag = 'input window, operand 15, single buffered']
    #allocation26 [shape = 's32[1]{0}', space=sflag, size = 0x4, scoped, tag = 'scoped memory for tpu_custom_call.1']
    #allocation27 [shape = 'u8[8192]{0}', space=vmem, size = 0x2000, scoped, tag = 'input window, operand 16, single buffered']
    #allocation28 [shape = 'u8[512]{0}', space=vmem, size = 0x400, scoped, tag = 'input window, operand 17, single buffered']
    #allocation29 [shape = 's32[1]{0}', space=sflag, size = 0x4, scoped, tag = 'scoped memory for tpu_custom_call.1']
    #allocation30 [shape = 'u8[8192]{0}', space=vmem, size = 0x2000, scoped, tag = 'output window, operand 0, single buffered']
    %23 = vsyncpa [#allocation5], 0
    %24 = vsyncpa [#allocation8], 0
    %25 = vsyncpa [#allocation11], 0
    %26 = vsyncpa [#allocation14], 0
    %27 = vsyncpa [#allocation23], 0
    %28 = vsyncpa [#allocation26], 0
    %29 = vsyncpa [#allocation29], 0
    %30 = vsyncpa [#allocation6], 0
    loop: start=0, step=1, limit=4
    $region2: #{tpu_custom_call.1} parent=1 // loop_pre_header
      _
    $region3: #{tpu_custom_call.1} parent=1 // loop_header
      %s32 = sphi 0, %s36
      %p33 = scmp.ge.s32.totalorder %s32, 4
      %s39 = sphi 0, %s51
      %s40 = sphi 0, %s47
      %s41 = sphi 0, %s39
      %s42 = sphi 0, %s40
      %s43 = sphi 0, %s41
      %s44 = sphi 0, %s42
      %s54 = sphi 0, %s56
      %s57 = sphi 0, %s54
      %s58 = sphi 0, %s57
      %s74 = sphi 0, %s58
      %s80 = sphi 0, %s82
      %s83 = sphi 0, %s80
      %s84 = sphi 0, %s83
      %s100 = sphi 0, %s84
      %s106 = sphi 0, %s108
      %s109 = sphi 0, %s106
      %s110 = sphi 0, %s109
      %s126 = sphi 0, %s110
      %s130 = sphi 0, %s130
      %s132 = sphi 0, %s130
      %s133 = sphi 0, %s132
      %s147 = sphi 0, %s133
      %s151 = sphi 0, %s151
      %s153 = sphi 0, %s151
      %s154 = sphi 0, %s153
      %s168 = sphi 0, %s154
      %s172 = sphi 0, %s172
      %s174 = sphi 0, %s172
      %s175 = sphi 0, %s174
      %s189 = sphi 0, %s175
      %s195 = sphi 0, %s197
      %s198 = sphi 0, %s195
      %s199 = sphi 0, %s198
      %s215 = sphi 0, %s199
      %s221 = sphi 0, %s223
      %s224 = sphi 0, %s221
      %s225 = sphi 0, %s224
      %s241 = sphi 0, %s225
      %s247 = sphi 0, %s249
      %s250 = sphi 0, %s247
      %s251 = sphi 0, %s250
      %s267 = sphi 0, %s251
      %s273 = sphi 0, %s275
      %s276 = sphi 0, %s273
      %s277 = sphi 0, %s276
      %s293 = sphi 0, %s277
      %s297 = sphi 0, %s297
      %s299 = sphi 0, %s297
      %s300 = sphi 0, %s299
      %s314 = sphi 0, %s300
      %s318 = sphi 0, %s318
      %s320 = sphi 0, %s318
      %s321 = sphi 0, %s320
      %s335 = sphi 0, %s321
      %s339 = sphi 0, %s339
      %s341 = sphi 0, %s339
      %s342 = sphi 0, %s341
      %s356 = sphi 0, %s342
      %s360 = sphi 0, %s360
      %s362 = sphi 0, %s360
      %s363 = sphi 0, %s362
      %s377 = sphi 0, %s363
      %s381 = sphi 0, %s381
      %s383 = sphi 0, %s381
      %s384 = sphi 0, %s383
      %s398 = sphi 0, %s384
      %s402 = sphi 0, %s402
      %s404 = sphi 0, %s402
      %s405 = sphi 0, %s404
      %s419 = sphi 0, %s405
      %s423 = sphi 0, %s423
      %s425 = sphi 0, %s423
      %s426 = sphi 0, %s425
      %s440 = sphi 0, %s426
      %s444 = sphi 0, %s444
      %s446 = sphi 0, %s444
      %s447 = sphi 0, %s446
      %s461 = sphi 0, %s447
      %s467 = sphi 0, %s469
      %s470 = sphi 0, %s467
      %s471 = sphi 0, %s470
      %s487 = sphi 0, %s471
    $region4: #{tpu_custom_call.1} parent=1 // loop_header_branch
      %35 = sbr.rel (%p33) target = $region8
    $region5: #{tpu_custom_call.1} parent=1 // loop_body
      %s37 = ssub.s32 %s32, 1
      %s38 = ssub.s32 %s32, 2
      %s45 = sadd.s32 1, %s40
      %p46 = scmp.ge.s32.totalorder %s45, 2
      %s47 = scalar_select %p46, 0, %s45
      %s48 = sadd.s32 1, %s39
      %s49 = scalar_select %p46, %s48, %s39
      %p50 = scmp.ge.s32.totalorder %s49, 1
      %s51 = scalar_select %p50, 0, %s49
      %s52 = ssub.s32 %s39, %s51
      %p53 = scmp.eq.s32.totalorder %s52, 0
      %s55 = sadd.s32 %s54, 1
      %s56 = scalar_select %p53, %s54, %s55
      %p59 = pneg %p53
      %p60 = scmp.eq.s32.totalorder %s32, 1
      %p61 = por %p59, %p60
      %p62 = scmp.ne.s32.totalorder %s54, %s57
      %p63 = scmp.eq.s32.totalorder %s32, 0
      %p64 = por %p62, %p63
      %p65 = scmp.ne.s32.totalorder %s54, %s57
      %p66 = scmp.eq.s32.totalorder %s37, 1
      %p67 = por %p65, %p66
      %p68 = scmp.ne.s32.totalorder %s57, %s58
      %p69 = scmp.eq.s32.totalorder %s37, 0
      %p70 = por %p68, %p69
      %p71 = scmp.ne.s32.totalorder %s57, %s58
      %p72 = scmp.eq.s32.totalorder %s38, 1
      %p73 = por %p71, %p72
      %p75 = scmp.ne.s32.totalorder %s58, %s74
      %p76 = scmp.eq.s32.totalorder %s38, 0
      %p77 = por %p75, %p76
      %s78 = ssub.s32 %s39, %s51
      %p79 = scmp.eq.s32.totalorder %s78, 0
      %s81 = sadd.s32 %s80, 1
      %s82 = scalar_select %p79, %s80, %s81
      %p85 = pneg %p79
      %p86 = scmp.eq.s32.totalorder %s32, 1
      %p87 = por %p85, %p86
      %p88 = scmp.ne.s32.totalorder %s80, %s83
      %p89 = scmp.eq.s32.totalorder %s32, 0
      %p90 = por %p88, %p89
      %p91 = scmp.ne.s32.totalorder %s80, %s83
      %p92 = scmp.eq.s32.totalorder %s37, 1
      %p93 = por %p91, %p92
      %p94 = scmp.ne.s32.totalorder %s83, %s84
      %p95 = scmp.eq.s32.totalorder %s37, 0
      %p96 = por %p94, %p95
      %p97 = scmp.ne.s32.totalorder %s83, %s84
      %p98 = scmp.eq.s32.totalorder %s38, 1
      %p99 = por %p97, %p98
      %p101 = scmp.ne.s32.totalorder %s84, %s100
      %p102 = scmp.eq.s32.totalorder %s38, 0
      %p103 = por %p101, %p102
      %s104 = ssub.s32 %s39, %s51
      %p105 = scmp.eq.s32.totalorder %s104, 0
      %s107 = sadd.s32 %s106, 1
      %s108 = scalar_select %p105, %s106, %s107
      %p111 = pneg %p105
      %p112 = scmp.eq.s32.totalorder %s32, 1
      %p113 = por %p111, %p112
      %p114 = scmp.ne.s32.totalorder %s106, %s109
      %p115 = scmp.eq.s32.totalorder %s32, 0
      %p116 = por %p114, %p115
      %p117 = scmp.ne.s32.totalorder %s106, %s109
      %p118 = scmp.eq.s32.totalorder %s37, 1
      %p119 = por %p117, %p118
      %p120 = scmp.ne.s32.totalorder %s109, %s110
      %p121 = scmp.eq.s32.totalorder %s37, 0
      %p122 = por %p120, %p121
      %p123 = scmp.ne.s32.totalorder %s109, %s110
      %p124 = scmp.eq.s32.totalorder %s38, 1
      %p125 = por %p123, %p124
      %p127 = scmp.ne.s32.totalorder %s110, %s126
      %p128 = scmp.eq.s32.totalorder %s38, 0
      %p129 = por %p127, %p128
      %s131 = sadd.s32 %s130, 1
      %p134 = scmp.eq.s32.totalorder %s32, 1
      %p135 = scmp.ne.s32.totalorder %s130, %s132
      %p136 = scmp.eq.s32.totalorder %s32, 0
      %p137 = por %p135, %p136
      %p138 = scmp.ne.s32.totalorder %s130, %s132
      %p139 = scmp.eq.s32.totalorder %s37, 1
      %p140 = por %p138, %p139
      %p141 = scmp.ne.s32.totalorder %s132, %s133
      %p142 = scmp.eq.s32.totalorder %s37, 0
      %p143 = por %p141, %p142
      %p144 = scmp.ne.s32.totalorder %s132, %s133
      %p145 = scmp.eq.s32.totalorder %s38, 1
      %p146 = por %p144, %p145
      %p148 = scmp.ne.s32.totalorder %s133, %s147
      %p149 = scmp.eq.s32.totalorder %s38, 0
      %p150 = por %p148, %p149
      %s152 = sadd.s32 %s151, 1
      %p155 = scmp.eq.s32.totalorder %s32, 1
      %p156 = scmp.ne.s32.totalorder %s151, %s153
      %p157 = scmp.eq.s32.totalorder %s32, 0
      %p158 = por %p156, %p157
      %p159 = scmp.ne.s32.totalorder %s151, %s153
      %p160 = scmp.eq.s32.totalorder %s37, 1
      %p161 = por %p159, %p160
      %p162 = scmp.ne.s32.totalorder %s153, %s154
      %p163 = scmp.eq.s32.totalorder %s37, 0
      %p164 = por %p162, %p163
      %p165 = scmp.ne.s32.totalorder %s153, %s154
      %p166 = scmp.eq.s32.totalorder %s38, 1
      %p167 = por %p165, %p166
      %p169 = scmp.ne.s32.totalorder %s154, %s168
      %p170 = scmp.eq.s32.totalorder %s38, 0
      %p171 = por %p169, %p170
      %s173 = sadd.s32 %s172, 1
      %p176 = scmp.eq.s32.totalorder %s32, 1
      %p177 = scmp.ne.s32.totalorder %s172, %s174
      %p178 = scmp.eq.s32.totalorder %s32, 0
      %p179 = por %p177, %p178
      %p180 = scmp.ne.s32.totalorder %s172, %s174
      %p181 = scmp.eq.s32.totalorder %s37, 1
      %p182 = por %p180, %p181
      %p183 = scmp.ne.s32.totalorder %s174, %s175
      %p184 = scmp.eq.s32.totalorder %s37, 0
      %p185 = por %p183, %p184
      %p186 = scmp.ne.s32.totalorder %s174, %s175
      %p187 = scmp.eq.s32.totalorder %s38, 1
      %p188 = por %p186, %p187
      %p190 = scmp.ne.s32.totalorder %s175, %s189
      %p191 = scmp.eq.s32.totalorder %s38, 0
      %p192 = por %p190, %p191
      %s193 = ssub.s32 %s40, %s47
      %p194 = scmp.eq.s32.totalorder %s193, 0
      %s196 = sadd.s32 %s195, 1
      %s197 = scalar_select %p194, %s195, %s196
      %p200 = pneg %p194
      %p201 = scmp.eq.s32.totalorder %s32, 1
      %p202 = por %p200, %p201
      %p203 = scmp.ne.s32.totalorder %s195, %s198
      %p204 = scmp.eq.s32.totalorder %s32, 0
      %p205 = por %p203, %p204
      %p206 = scmp.ne.s32.totalorder %s195, %s198
      %p207 = scmp.eq.s32.totalorder %s37, 1
      %p208 = por %p206, %p207
      %p209 = scmp.ne.s32.totalorder %s198, %s199
      %p210 = scmp.eq.s32.totalorder %s37, 0
      %p211 = por %p209, %p210
      %p212 = scmp.ne.s32.totalorder %s198, %s199
      %p213 = scmp.eq.s32.totalorder %s38, 1
      %p214 = por %p212, %p213
      %p216 = scmp.ne.s32.totalorder %s199, %s215
      %p217 = scmp.eq.s32.totalorder %s38, 0
      %p218 = por %p216, %p217
      %s219 = ssub.s32 %s40, %s47
      %p220 = scmp.eq.s32.totalorder %s219, 0
      %s222 = sadd.s32 %s221, 1
      %s223 = scalar_select %p220, %s221, %s222
      %p226 = pneg %p220
      %p227 = scmp.eq.s32.totalorder %s32, 1
      %p228 = por %p226, %p227
      %p229 = scmp.ne.s32.totalorder %s221, %s224
      %p230 = scmp.eq.s32.totalorder %s32, 0
      %p231 = por %p229, %p230
      %p232 = scmp.ne.s32.totalorder %s221, %s224
      %p233 = scmp.eq.s32.totalorder %s37, 1
      %p234 = por %p232, %p233
      %p235 = scmp.ne.s32.totalorder %s224, %s225
      %p236 = scmp.eq.s32.totalorder %s37, 0
      %p237 = por %p235, %p236
      %p238 = scmp.ne.s32.totalorder %s224, %s225
      %p239 = scmp.eq.s32.totalorder %s38, 1
      %p240 = por %p238, %p239
      %p242 = scmp.ne.s32.totalorder %s225, %s241
      %p243 = scmp.eq.s32.totalorder %s38, 0
      %p244 = por %p242, %p243
      %s245 = ssub.s32 %s40, %s47
      %p246 = scmp.eq.s32.totalorder %s245, 0
      %s248 = sadd.s32 %s247, 1
      %s249 = scalar_select %p246, %s247, %s248
      %p252 = pneg %p246
      %p253 = scmp.eq.s32.totalorder %s32, 1
      %p254 = por %p252, %p253
      %p255 = scmp.ne.s32.totalorder %s247, %s250
      %p256 = scmp.eq.s32.totalorder %s32, 0
      %p257 = por %p255, %p256
      %p258 = scmp.ne.s32.totalorder %s247, %s250
      %p259 = scmp.eq.s32.totalorder %s37, 1
      %p260 = por %p258, %p259
      %p261 = scmp.ne.s32.totalorder %s250, %s251
      %p262 = scmp.eq.s32.totalorder %s37, 0
      %p263 = por %p261, %p262
      %p264 = scmp.ne.s32.totalorder %s250, %s251
      %p265 = scmp.eq.s32.totalorder %s38, 1
      %p266 = por %p264, %p265
      %p268 = scmp.ne.s32.totalorder %s251, %s267
      %p269 = scmp.eq.s32.totalorder %s38, 0
      %p270 = por %p268, %p269
      %s271 = ssub.s32 %s40, %s47
      %p272 = scmp.eq.s32.totalorder %s271, 0
      %s274 = sadd.s32 %s273, 1
      %s275 = scalar_select %p272, %s273, %s274
      %p278 = pneg %p272
      %p279 = scmp.eq.s32.totalorder %s32, 1
      %p280 = por %p278, %p279
      %p281 = scmp.ne.s32.totalorder %s273, %s276
      %p282 = scmp.eq.s32.totalorder %s32, 0
      %p283 = por %p281, %p282
      %p284 = scmp.ne.s32.totalorder %s273, %s276
      %p285 = scmp.eq.s32.totalorder %s37, 1
      %p286 = por %p284, %p285
      %p287 = scmp.ne.s32.totalorder %s276, %s277
      %p288 = scmp.eq.s32.totalorder %s37, 0
      %p289 = por %p287, %p288
      %p290 = scmp.ne.s32.totalorder %s276, %s277
      %p291 = scmp.eq.s32.totalorder %s38, 1
      %p292 = por %p290, %p291
      %p294 = scmp.ne.s32.totalorder %s277, %s293
      %p295 = scmp.eq.s32.totalorder %s38, 0
      %p296 = por %p294, %p295
      %s298 = sadd.s32 %s297, 1
      %p301 = scmp.eq.s32.totalorder %s32, 1
      %p302 = scmp.ne.s32.totalorder %s297, %s299
      %p303 = scmp.eq.s32.totalorder %s32, 0
      %p304 = por %p302, %p303
      %p305 = scmp.ne.s32.totalorder %s297, %s299
      %p306 = scmp.eq.s32.totalorder %s37, 1
      %p307 = por %p305, %p306
      %p308 = scmp.ne.s32.totalorder %s299, %s300
      %p309 = scmp.eq.s32.totalorder %s37, 0
      %p310 = por %p308, %p309
      %p311 = scmp.ne.s32.totalorder %s299, %s300
      %p312 = scmp.eq.s32.totalorder %s38, 1
      %p313 = por %p311, %p312
      %p315 = scmp.ne.s32.totalorder %s300, %s314
      %p316 = scmp.eq.s32.totalorder %s38, 0
      %p317 = por %p315, %p316
      %s319 = sadd.s32 %s318, 1
      %p322 = scmp.eq.s32.totalorder %s32, 1
      %p323 = scmp.ne.s32.totalorder %s318, %s320
      %p324 = scmp.eq.s32.totalorder %s32, 0
      %p325 = por %p323, %p324
      %p326 = scmp.ne.s32.totalorder %s318, %s320
      %p327 = scmp.eq.s32.totalorder %s37, 1
      %p328 = por %p326, %p327
      %p329 = scmp.ne.s32.totalorder %s320, %s321
      %p330 = scmp.eq.s32.totalorder %s37, 0
      %p331 = por %p329, %p330
      %p332 = scmp.ne.s32.totalorder %s320, %s321
      %p333 = scmp.eq.s32.totalorder %s38, 1
      %p334 = por %p332, %p333
      %p336 = scmp.ne.s32.totalorder %s321, %s335
      %p337 = scmp.eq.s32.totalorder %s38, 0
      %p338 = por %p336, %p337
      %s340 = sadd.s32 %s339, 1
      %p343 = scmp.eq.s32.totalorder %s32, 1
      %p344 = scmp.ne.s32.totalorder %s339, %s341
      %p345 = scmp.eq.s32.totalorder %s32, 0
      %p346 = por %p344, %p345
      %p347 = scmp.ne.s32.totalorder %s339, %s341
      %p348 = scmp.eq.s32.totalorder %s37, 1
      %p349 = por %p347, %p348
      %p350 = scmp.ne.s32.totalorder %s341, %s342
      %p351 = scmp.eq.s32.totalorder %s37, 0
      %p352 = por %p350, %p351
      %p353 = scmp.ne.s32.totalorder %s341, %s342
      %p354 = scmp.eq.s32.totalorder %s38, 1
      %p355 = por %p353, %p354
      %p357 = scmp.ne.s32.totalorder %s342, %s356
      %p358 = scmp.eq.s32.totalorder %s38, 0
      %p359 = por %p357, %p358
      %s361 = sadd.s32 %s360, 1
      %p364 = scmp.eq.s32.totalorder %s32, 1
      %p365 = scmp.ne.s32.totalorder %s360, %s362
      %p366 = scmp.eq.s32.totalorder %s32, 0
      %p367 = por %p365, %p366
      %p368 = scmp.ne.s32.totalorder %s360, %s362
      %p369 = scmp.eq.s32.totalorder %s37, 1
      %p370 = por %p368, %p369
      %p371 = scmp.ne.s32.totalorder %s362, %s363
      %p372 = scmp.eq.s32.totalorder %s37, 0
      %p373 = por %p371, %p372
      %p374 = scmp.ne.s32.totalorder %s362, %s363
      %p375 = scmp.eq.s32.totalorder %s38, 1
      %p376 = por %p374, %p375
      %p378 = scmp.ne.s32.totalorder %s363, %s377
      %p379 = scmp.eq.s32.totalorder %s38, 0
      %p380 = por %p378, %p379
      %s382 = sadd.s32 %s381, 1
      %p385 = scmp.eq.s32.totalorder %s32, 1
      %p386 = scmp.ne.s32.totalorder %s381, %s383
      %p387 = scmp.eq.s32.totalorder %s32, 0
      %p388 = por %p386, %p387
      %p389 = scmp.ne.s32.totalorder %s381, %s383
      %p390 = scmp.eq.s32.totalorder %s37, 1
      %p391 = por %p389, %p390
      %p392 = scmp.ne.s32.totalorder %s383, %s384
      %p393 = scmp.eq.s32.totalorder %s37, 0
      %p394 = por %p392, %p393
      %p395 = scmp.ne.s32.totalorder %s383, %s384
      %p396 = scmp.eq.s32.totalorder %s38, 1
      %p397 = por %p395, %p396
      %p399 = scmp.ne.s32.totalorder %s384, %s398
      %p400 = scmp.eq.s32.totalorder %s38, 0
      %p401 = por %p399, %p400
      %s403 = sadd.s32 %s402, 1
      %p406 = scmp.eq.s32.totalorder %s32, 1
      %p407 = scmp.ne.s32.totalorder %s402, %s404
      %p408 = scmp.eq.s32.totalorder %s32, 0
      %p409 = por %p407, %p408
      %p410 = scmp.ne.s32.totalorder %s402, %s404
      %p411 = scmp.eq.s32.totalorder %s37, 1
      %p412 = por %p410, %p411
      %p413 = scmp.ne.s32.totalorder %s404, %s405
      %p414 = scmp.eq.s32.totalorder %s37, 0
      %p415 = por %p413, %p414
      %p416 = scmp.ne.s32.totalorder %s404, %s405
      %p417 = scmp.eq.s32.totalorder %s38, 1
      %p418 = por %p416, %p417
      %p420 = scmp.ne.s32.totalorder %s405, %s419
      %p421 = scmp.eq.s32.totalorder %s38, 0
      %p422 = por %p420, %p421
      %s424 = sadd.s32 %s423, 1
      %p427 = scmp.eq.s32.totalorder %s32, 1
      %p428 = scmp.ne.s32.totalorder %s423, %s425
      %p429 = scmp.eq.s32.totalorder %s32, 0
      %p430 = por %p428, %p429
      %p431 = scmp.ne.s32.totalorder %s423, %s425
      %p432 = scmp.eq.s32.totalorder %s37, 1
      %p433 = por %p431, %p432
      %p434 = scmp.ne.s32.totalorder %s425, %s426
      %p435 = scmp.eq.s32.totalorder %s37, 0
      %p436 = por %p434, %p435
      %p437 = scmp.ne.s32.totalorder %s425, %s426
      %p438 = scmp.eq.s32.totalorder %s38, 1
      %p439 = por %p437, %p438
      %p441 = scmp.ne.s32.totalorder %s426, %s440
      %p442 = scmp.eq.s32.totalorder %s38, 0
      %p443 = por %p441, %p442
      %s445 = sadd.s32 %s444, 1
      %p448 = scmp.eq.s32.totalorder %s32, 1
      %p449 = scmp.ne.s32.totalorder %s444, %s446
      %p450 = scmp.eq.s32.totalorder %s32, 0
      %p451 = por %p449, %p450
      %p452 = scmp.ne.s32.totalorder %s444, %s446
      %p453 = scmp.eq.s32.totalorder %s37, 1
      %p454 = por %p452, %p453
      %p455 = scmp.ne.s32.totalorder %s446, %s447
      %p456 = scmp.eq.s32.totalorder %s37, 0
      %p457 = por %p455, %p456
      %p458 = scmp.ne.s32.totalorder %s446, %s447
      %p459 = scmp.eq.s32.totalorder %s38, 1
      %p460 = por %p458, %p459
      %p462 = scmp.ne.s32.totalorder %s447, %s461
      %p463 = scmp.eq.s32.totalorder %s38, 0
      %p464 = por %p462, %p463
      %s465 = ssub.s32 %s39, %s51
      %p466 = scmp.eq.s32.totalorder %s465, 0
      %s468 = sadd.s32 %s467, 1
      %s469 = scalar_select %p466, %s467, %s468
      %p472 = pneg %p466
      %p473 = scmp.eq.s32.totalorder %s32, 1
      %p474 = por %p472, %p473
      %p475 = scmp.ne.s32.totalorder %s467, %s470
      %p476 = scmp.eq.s32.totalorder %s32, 0
      %p477 = por %p475, %p476
      %p478 = scmp.ne.s32.totalorder %s467, %s470
      %p479 = scmp.eq.s32.totalorder %s37, 1
      %p480 = por %p478, %p479
      %p481 = scmp.ne.s32.totalorder %s470, %s471
      %p482 = scmp.eq.s32.totalorder %s37, 0
      %p483 = por %p481, %p482
      %p484 = scmp.ne.s32.totalorder %s470, %s471
      %p485 = scmp.eq.s32.totalorder %s38, 1
      %p486 = por %p484, %p485
      %p488 = scmp.ne.s32.totalorder %s471, %s487
      %p489 = scmp.eq.s32.totalorder %s38, 0
      %p490 = por %p488, %p489
      %p491 = scmp.le.s32.totalorder 1, %s32
      %p492 = scmp.lt.s32.totalorder %s32, 3
      %p493 = pnand %p491, %p492
      %p494 = pneg %p493
      // Predicated region
      $region9: #{tpu_custom_call.1} parent=5 // pred_check
        _
      $region10: #{tpu_custom_call.1} parent=5 // pred_check_branch
        %496 = sbr.rel (%p493) target = $region12
      $region11: #{tpu_custom_call.1} parent=5 // pred_region
        %s497 = ssub.s32 %s32, 1
        // Predicated region
        $region13: #{tpu_custom_call.1} parent=11 // pred_check
          %p498 = pneg %p70
        $region14: #{tpu_custom_call.1} parent=11 // pred_check_branch
          %500 = sbr.rel (%p498) target = $region16
        $region15: #{tpu_custom_call.1} parent=11 // pred_region
          %s501 = smul.u32 2, %s41
          %s503 = ssub.s32 256, 256
          %504 = vsyncadd [#allocation5], %s503
          %s505 = smul.addr %s501, 128
          %s506 = scalar_lea.hbm %s0, %s505
          %s507 = sshll.u32 [#allocation4], 4
          %s508 = int_to_ptr.vmem [resolvable:$true] %s507
          %513 = dma.hbm_to_vmem [thread:$0]  %s506, 256, %s508, [#allocation5], 128, 128, 8
        $region16: #{tpu_custom_call.1} parent=11 // pred_fallthru
          _
        // Predicated region
        $region17: #{tpu_custom_call.1} parent=11 // pred_check
          %p514 = pneg %p96
        $region18: #{tpu_custom_call.1} parent=11 // pred_check_branch
          %516 = sbr.rel (%p514) target = $region20
        $region19: #{tpu_custom_call.1} parent=11 // pred_region
          %s517 = smul.u32 2, %s41
          %s519 = ssub.s32 512, 512
          %520 = vsyncadd [#allocation8], %s519
          %s521 = smul.addr %s517, 2
          %s522 = smul.addr %s521, 128
          %s523 = scalar_lea.hbm %s1, %s522
          %s524 = sshll.u32 [#allocation7], 4
          %s525 = int_to_ptr.vmem [resolvable:$true] %s524
          %530 = dma.hbm_to_vmem [thread:$0]  %s523, 512, %s525, [#allocation8], 128, 128, 8
        $region20: #{tpu_custom_call.1} parent=11 // pred_fallthru
          _
        // Predicated region
        $region21: #{tpu_custom_call.1} parent=11 // pred_check
          %p531 = pneg %p122
        $region22: #{tpu_custom_call.1} parent=11 // pred_check_branch
          %533 = sbr.rel (%p531) target = $region24
        $region23: #{tpu_custom_call.1} parent=11 // pred_region
          %s534 = smul.u32 2, %s41
          %s536 = ssub.s32 256, 256
          %537 = vsyncadd [#allocation8], %s536
          %s538 = smul.addr %s534, 128
          %s539 = scalar_lea.hbm %s2, %s538
          %s540 = sshll.u32 [#allocation9], 4
          %s541 = int_to_ptr.vmem [resolvable:$true] %s540
          %546 = dma.hbm_to_vmem [thread:$0]  %s539, 256, %s541, [#allocation8], 128, 128, 8
        $region24: #{tpu_custom_call.1} parent=11 // pred_fallthru
          _
        // Predicated region
        $region25: #{tpu_custom_call.1} parent=11 // pred_check
          %p547 = pneg %p143
        $region26: #{tpu_custom_call.1} parent=11 // pred_check_branch
          %549 = sbr.rel (%p547) target = $region28
        $region27: #{tpu_custom_call.1} parent=11 // pred_region
          %s551 = ssub.s32 128, 128
          %552 = vsyncadd [#allocation11], %s551
          %s554 = sshll.u32 [#allocation10], 4
          %s555 = int_to_ptr.vmem [resolvable:$true] %s554
          %557 = dma.hbm_to_vmem [thread:$0]  %s3, 128, %s555, [#allocation11]
        $region28: #{tpu_custom_call.1} parent=11 // pred_fallthru
          _
        // Predicated region
        $region29: #{tpu_custom_call.1} parent=11 // pred_check
          %p558 = pneg %p164
        $region30: #{tpu_custom_call.1} parent=11 // pred_check_branch
          %560 = sbr.rel (%p558) target = $region32
        $region31: #{tpu_custom_call.1} parent=11 // pred_region
          %s562 = ssub.s32 256, 256
          %563 = vsyncadd [#allocation11], %s562
          %s564 = sshll.u32 [#allocation12], 4
          %s565 = int_to_ptr.vmem [resolvable:$true] %s564
          %570 = dma.hbm_to_vmem [thread:$0]  %s4, 256, %s565, [#allocation11], 128, 128, 8
        $region32: #{tpu_custom_call.1} parent=11 // pred_fallthru
          _
        // Predicated region
        $region33: #{tpu_custom_call.1} parent=11 // pred_check
          %p571 = pneg %p185
        $region34: #{tpu_custom_call.1} parent=11 // pred_check_branch
          %573 = sbr.rel (%p571) target = $region36
        $region35: #{tpu_custom_call.1} parent=11 // pred_region
          %s575 = ssub.s32 16, 16
          %576 = vsyncadd [#allocation14], %s575
          %s578 = sshll.u32 [#allocation13], 4
          %s579 = int_to_ptr.vmem [resolvable:$true] %s578
          %581 = dma.hbm_to_vmem [thread:$0]  %s5, 16, %s579, [#allocation14]
        $region36: #{tpu_custom_call.1} parent=11 // pred_fallthru
          _
        // Predicated region
        $region37: #{tpu_custom_call.1} parent=11 // pred_check
          %p582 = pneg %p310
        $region38: #{tpu_custom_call.1} parent=11 // pred_check_branch
          %584 = sbr.rel (%p582) target = $region40
        $region39: #{tpu_custom_call.1} parent=11 // pred_region
          %s586 = ssub.s32 512, 512
          %587 = vsyncadd [#allocation8], %s586
          %s588 = sshll.u32 [#allocation19], 4
          %s589 = int_to_ptr.vmem [resolvable:$true] %s588
          %594 = dma.hbm_to_vmem [thread:$0]  %s10, 512, %s589, [#allocation8], 128, 128, 8
        $region40: #{tpu_custom_call.1} parent=11 // pred_fallthru
          _
        // Predicated region
        $region41: #{tpu_custom_call.1} parent=11 // pred_check
          %p595 = pneg %p331
        $region42: #{tpu_custom_call.1} parent=11 // pred_check_branch
          %597 = sbr.rel (%p595) target = $region44
        $region43: #{tpu_custom_call.1} parent=11 // pred_region
          %s599 = ssub.s32 16, 16
          %600 = vsyncadd [#allocation11], %s599
          %s602 = sshll.u32 [#allocation20], 4
          %s603 = int_to_ptr.vmem [resolvable:$true] %s602
          %605 = dma.hbm_to_vmem [thread:$0]  %s11, 16, %s603, [#allocation11]
        $region44: #{tpu_custom_call.1} parent=11 // pred_fallthru
          _
        // Predicated region
        $region45: #{tpu_custom_call.1} parent=11 // pred_check
          %p606 = pneg %p352
        $region46: #{tpu_custom_call.1} parent=11 // pred_check_branch
          %608 = sbr.rel (%p606) target = $region48
        $region47: #{tpu_custom_call.1} parent=11 // pred_region
          %s610 = ssub.s32 256, 256
          %611 = vsyncadd [#allocation14], %s610
          %s612 = sshll.u32 [#allocation21], 4
          %s613 = int_to_ptr.vmem [resolvable:$true] %s612
          %618 = dma.hbm_to_vmem [thread:$0]  %s12, 256, %s613, [#allocation14], 128, 128, 8
        $region48: #{tpu_custom_call.1} parent=11 // pred_fallthru
          _
        // Predicated region
        $region49: #{tpu_custom_call.1} parent=11 // pred_check
          %p619 = pneg %p373
        $region50: #{tpu_custom_call.1} parent=11 // pred_check_branch
          %621 = sbr.rel (%p619) target = $region52
        $region51: #{tpu_custom_call.1} parent=11 // pred_region
          %s623 = ssub.s32 16, 16
          %624 = vsyncadd [#allocation23], %s623
          %s626 = sshll.u32 [#allocation22], 4
          %s627 = int_to_ptr.vmem [resolvable:$true] %s626
          %629 = dma.hbm_to_vmem [thread:$0]  %s13, 16, %s627, [#allocation23]
        $region52: #{tpu_custom_call.1} parent=11 // pred_fallthru
          _
        // Predicated region
        $region53: #{tpu_custom_call.1} parent=11 // pred_check
          %p630 = pneg %p394
        $region54: #{tpu_custom_call.1} parent=11 // pred_check_branch
          %632 = sbr.rel (%p630) target = $region56
        $region55: #{tpu_custom_call.1} parent=11 // pred_region
          %s634 = ssub.s32 512, 512
          %635 = vsyncadd [#allocation23], %s634
          %s636 = sshll.u32 [#allocation24], 4
          %s637 = int_to_ptr.vmem [resolvable:$true] %s636
          %642 = dma.hbm_to_vmem [thread:$0]  %s14, 512, %s637, [#allocation23], 128, 128, 8
        $region56: #{tpu_custom_call.1} parent=11 // pred_fallthru
          _
        // Predicated region
        $region57: #{tpu_custom_call.1} parent=11 // pred_check
          %p643 = pneg %p415
        $region58: #{tpu_custom_call.1} parent=11 // pred_check_branch
          %645 = sbr.rel (%p643) target = $region60
        $region59: #{tpu_custom_call.1} parent=11 // pred_region
          %s647 = ssub.s32 16, 16
          %648 = vsyncadd [#allocation26], %s647
          %s650 = sshll.u32 [#allocation25], 4
          %s651 = int_to_ptr.vmem [resolvable:$true] %s650
          %653 = dma.hbm_to_vmem [thread:$0]  %s15, 16, %s651, [#allocation26]
        $region60: #{tpu_custom_call.1} parent=11 // pred_fallthru
          _
        // Predicated region
        $region61: #{tpu_custom_call.1} parent=11 // pred_check
          %p654 = pneg %p436
        $region62: #{tpu_custom_call.1} parent=11 // pred_check_branch
          %656 = sbr.rel (%p654) target = $region64
        $region63: #{tpu_custom_call.1} parent=11 // pred_region
          %s658 = ssub.s32 256, 256
          %659 = vsyncadd [#allocation26], %s658
          %s660 = sshll.u32 [#allocation27], 4
          %s661 = int_to_ptr.vmem [resolvable:$true] %s660
          %666 = dma.hbm_to_vmem [thread:$0]  %s16, 256, %s661, [#allocation26], 128, 128, 8
        $region64: #{tpu_custom_call.1} parent=11 // pred_fallthru
          _
        // Predicated region
        $region65: #{tpu_custom_call.1} parent=11 // pred_check
          %p667 = pneg %p457
        $region66: #{tpu_custom_call.1} parent=11 // pred_check_branch
          %669 = sbr.rel (%p667) target = $region68
        $region67: #{tpu_custom_call.1} parent=11 // pred_region
          %s671 = ssub.s32 16, 16
          %672 = vsyncadd [#allocation29], %s671
          %s674 = sshll.u32 [#allocation28], 4
          %s675 = int_to_ptr.vmem [resolvable:$true] %s674
          %677 = dma.hbm_to_vmem [thread:$0]  %s17, 16, %s675, [#allocation29]
        $region68: #{tpu_custom_call.1} parent=11 // pred_fallthru
          _
      $region12: #{tpu_custom_call.1} parent=5 // pred_fallthru
        _
      %p678 = scmp.lt.s32.totalorder %s32, 2
      // Predicated region
      $region69: #{tpu_custom_call.1} parent=5 // pred_check
        %p679 = pneg %p678
      $region70: #{tpu_custom_call.1} parent=5 // pred_check_branch
        %681 = sbr.rel (%p679) target = $region72
      $region71: #{tpu_custom_call.1} parent=5 // pred_region
        // Predicated region
        $region73: #{tpu_custom_call.1} parent=71 // pred_check
          %p682 = pneg %p205
        $region74: #{tpu_custom_call.1} parent=71 // pred_check_branch
          %684 = sbr.rel (%p682) target = $region76
        $region75: #{tpu_custom_call.1} parent=71 // pred_region
          %s685 = sand.u32 %s32, 1
          %s686 = scalar_lea.sflag [#allocation5], %s685
          %s687 = sand.u32 %s195, 1
          %s688 = smul.addr %s687, 96
          %s689 = scalar_lea.vmem [#allocation15], %s688
          %s691 = ssub.s32 1536, 1536
          %692 = vsyncadd %s686, %s691
          %s693 = smul.addr %s40, 12
          %s694 = smul.addr %s693, 128
          %s695 = scalar_lea.hbm %s6, %s694
          %s696 = sshll.u32 %s689, 4
          %s697 = int_to_ptr.vmem [resolvable:$true] %s696
          %702 = dma.hbm_to_vmem [thread:$0]  %s695, 1536, %s697, %s686, 128, 128, 8
        $region76: #{tpu_custom_call.1} parent=71 // pred_fallthru
          _
        // Predicated region
        $region77: #{tpu_custom_call.1} parent=71 // pred_check
          %p703 = pneg %p231
        $region78: #{tpu_custom_call.1} parent=71 // pred_check_branch
          %705 = sbr.rel (%p703) target = $region80
        $region79: #{tpu_custom_call.1} parent=71 // pred_region
          %s706 = sand.u32 %s32, 1
          %s707 = scalar_lea.sflag [#allocation5], %s706
          %s708 = sand.u32 %s221, 1
          %s709 = smul.addr %s708, 96
          %s710 = scalar_lea.vmem [#allocation16], %s709
          %s712 = ssub.s32 1536, 1536
          %713 = vsyncadd %s707, %s712
          %s714 = smul.addr %s40, 12
          %s715 = smul.addr %s714, 128
          %s716 = scalar_lea.hbm %s7, %s715
          %s717 = sshll.u32 %s710, 4
          %s718 = int_to_ptr.vmem [resolvable:$true] %s717
          %723 = dma.hbm_to_vmem [thread:$0]  %s716, 1536, %s718, %s707, 128, 128, 8
        $region80: #{tpu_custom_call.1} parent=71 // pred_fallthru
          _
        // Predicated region
        $region81: #{tpu_custom_call.1} parent=71 // pred_check
          %p724 = pneg %p257
        $region82: #{tpu_custom_call.1} parent=71 // pred_check_branch
          %726 = sbr.rel (%p724) target = $region84
        $region83: #{tpu_custom_call.1} parent=71 // pred_region
          %s727 = sand.u32 %s32, 1
          %s728 = scalar_lea.sflag [#allocation5], %s727
          %s729 = sand.u32 %s247, 1
          %s730 = scalar_lea.vmem [#allocation17], %s729
          %s732 = ssub.s32 16, 16
          %733 = vsyncadd %s728, %s732
          %s734 = smul.addr %s40, 16
          %s735 = scalar_lea.hbm %s8, %s734
          %s737 = sshll.u32 %s730, 4
          %s738 = int_to_ptr.vmem [resolvable:$true] %s737
          %740 = dma.hbm_to_vmem [thread:$0]  %s735, 16, %s738, %s728
        $region84: #{tpu_custom_call.1} parent=71 // pred_fallthru
          _
        // Predicated region
        $region85: #{tpu_custom_call.1} parent=71 // pred_check
          %p741 = pneg %p283
        $region86: #{tpu_custom_call.1} parent=71 // pred_check_branch
          %743 = sbr.rel (%p741) target = $region88
        $region87: #{tpu_custom_call.1} parent=71 // pred_region
          %s744 = sand.u32 %s32, 1
          %s745 = scalar_lea.sflag [#allocation5], %s744
          %s746 = sand.u32 %s273, 1
          %s747 = scalar_lea.vmem [#allocation18], %s746
          %s749 = ssub.s32 16, 16
          %750 = vsyncadd %s745, %s749
          %s751 = smul.addr %s40, 16
          %s752 = scalar_lea.hbm %s9, %s751
          %s754 = sshll.u32 %s747, 4
          %s755 = int_to_ptr.vmem [resolvable:$true] %s754
          %757 = dma.hbm_to_vmem [thread:$0]  %s752, 16, %s755, %s745
        $region88: #{tpu_custom_call.1} parent=71 // pred_fallthru
          _
      $region72: #{tpu_custom_call.1} parent=5 // pred_fallthru
        _
      %p758 = scmp.le.s32.totalorder 1, %s32
      %p759 = scmp.lt.s32.totalorder %s32, 3
      %p760 = pnand %p758, %p759
      %p761 = pneg %p760
      // Predicated region
      $region89: #{tpu_custom_call.1} parent=5 // pred_check
        _
      $region90: #{tpu_custom_call.1} parent=5 // pred_check_branch
        %763 = sbr.rel (%p760) target = $region92
      $region91: #{tpu_custom_call.1} parent=5 // pred_region
        %s764 = ssub.s32 %s32, 1
        // Predicated region
        $region93: #{tpu_custom_call.1} parent=91 // pred_check
          %p765 = pneg %p70
        $region94: #{tpu_custom_call.1} parent=91 // pred_check_branch
          %767 = sbr.rel (%p765) target = $region96
        $region95: #{tpu_custom_call.1} parent=91 // pred_region
          %768 = dma.done [#allocation5], 256
        $region96: #{tpu_custom_call.1} parent=91 // pred_fallthru
          _
        // Predicated region
        $region97: #{tpu_custom_call.1} parent=91 // pred_check
          %p769 = pneg %p96
        $region98: #{tpu_custom_call.1} parent=91 // pred_check_branch
          %771 = sbr.rel (%p769) target = $region100
        $region99: #{tpu_custom_call.1} parent=91 // pred_region
          %772 = dma.done [#allocation8], 512
        $region100: #{tpu_custom_call.1} parent=91 // pred_fallthru
          _
        // Predicated region
        $region101: #{tpu_custom_call.1} parent=91 // pred_check
          %p773 = pneg %p122
        $region102: #{tpu_custom_call.1} parent=91 // pred_check_branch
          %775 = sbr.rel (%p773) target = $region104
        $region103: #{tpu_custom_call.1} parent=91 // pred_region
          %776 = dma.done [#allocation8], 256
        $region104: #{tpu_custom_call.1} parent=91 // pred_fallthru
          _
        // Predicated region
        $region105: #{tpu_custom_call.1} parent=91 // pred_check
          %p777 = pneg %p143
        $region106: #{tpu_custom_call.1} parent=91 // pred_check_branch
          %779 = sbr.rel (%p777) target = $region108
        $region107: #{tpu_custom_call.1} parent=91 // pred_region
          %780 = dma.done [#allocation11], 128
        $region108: #{tpu_custom_call.1} parent=91 // pred_fallthru
          _
        // Predicated region
        $region109: #{tpu_custom_call.1} parent=91 // pred_check
          %p781 = pneg %p164
        $region110: #{tpu_custom_call.1} parent=91 // pred_check_branch
          %783 = sbr.rel (%p781) target = $region112
        $region111: #{tpu_custom_call.1} parent=91 // pred_region
          %784 = dma.done [#allocation11], 256
        $region112: #{tpu_custom_call.1} parent=91 // pred_fallthru
          _
        // Predicated region
        $region113: #{tpu_custom_call.1} parent=91 // pred_check
          %p785 = pneg %p185
        $region114: #{tpu_custom_call.1} parent=91 // pred_check_branch
          %787 = sbr.rel (%p785) target = $region116
        $region115: #{tpu_custom_call.1} parent=91 // pred_region
          %788 = dma.done [#allocation14], 16
        $region116: #{tpu_custom_call.1} parent=91 // pred_fallthru
          _
        %s789 = sand.u32 %s37, 1
        %s790 = scalar_lea.sflag [#allocation5], %s789
        %s791 = sand.u32 %s198, 1
        %s792 = smul.addr %s791, 96
        %s793 = scalar_lea.vmem [#allocation15], %s792
        // Predicated region
        $region117: #{tpu_custom_call.1} parent=91 // pred_check
          %p794 = pneg %p211
        $region118: #{tpu_custom_call.1} parent=91 // pred_check_branch
          %796 = sbr.rel (%p794) target = $region120
        $region119: #{tpu_custom_call.1} parent=91 // pred_region
          %797 = dma.done %s790, 1536
        $region120: #{tpu_custom_call.1} parent=91 // pred_fallthru
          _
        %s798 = sand.u32 %s37, 1
        %s799 = scalar_lea.sflag [#allocation5], %s798
        %s800 = sand.u32 %s224, 1
        %s801 = smul.addr %s800, 96
        %s802 = scalar_lea.vmem [#allocation16], %s801
        // Predicated region
        $region121: #{tpu_custom_call.1} parent=91 // pred_check
          %p803 = pneg %p237
        $region122: #{tpu_custom_call.1} parent=91 // pred_check_branch
          %805 = sbr.rel (%p803) target = $region124
        $region123: #{tpu_custom_call.1} parent=91 // pred_region
          %806 = dma.done %s799, 1536
        $region124: #{tpu_custom_call.1} parent=91 // pred_fallthru
          _
        %s807 = sand.u32 %s37, 1
        %s808 = scalar_lea.sflag [#allocation5], %s807
        %s809 = sand.u32 %s250, 1
        %s810 = scalar_lea.vmem [#allocation17], %s809
        // Predicated region
        $region125: #{tpu_custom_call.1} parent=91 // pred_check
          %p811 = pneg %p263
        $region126: #{tpu_custom_call.1} parent=91 // pred_check_branch
          %813 = sbr.rel (%p811) target = $region128
        $region127: #{tpu_custom_call.1} parent=91 // pred_region
          %814 = dma.done %s808, 16
        $region128: #{tpu_custom_call.1} parent=91 // pred_fallthru
          _
        %s815 = sand.u32 %s37, 1
        %s816 = scalar_lea.sflag [#allocation5], %s815
        %s817 = sand.u32 %s276, 1
        %s818 = scalar_lea.vmem [#allocation18], %s817
        // Predicated region
        $region129: #{tpu_custom_call.1} parent=91 // pred_check
          %p819 = pneg %p289
        $region130: #{tpu_custom_call.1} parent=91 // pred_check_branch
          %821 = sbr.rel (%p819) target = $region132
        $region131: #{tpu_custom_call.1} parent=91 // pred_region
          %822 = dma.done %s816, 16
        $region132: #{tpu_custom_call.1} parent=91 // pred_fallthru
          _
        // Predicated region
        $region133: #{tpu_custom_call.1} parent=91 // pred_check
          %p823 = pneg %p310
        $region134: #{tpu_custom_call.1} parent=91 // pred_check_branch
          %825 = sbr.rel (%p823) target = $region136
        $region135: #{tpu_custom_call.1} parent=91 // pred_region
          %826 = dma.done [#allocation8], 512
        $region136: #{tpu_custom_call.1} parent=91 // pred_fallthru
          _
        // Predicated region
        $region137: #{tpu_custom_call.1} parent=91 // pred_check
          %p827 = pneg %p331
        $region138: #{tpu_custom_call.1} parent=91 // pred_check_branch
          %829 = sbr.rel (%p827) target = $region140
        $region139: #{tpu_custom_call.1} parent=91 // pred_region
          %830 = dma.done [#allocation11], 16
        $region140: #{tpu_custom_call.1} parent=91 // pred_fallthru
          _
        // Predicated region
        $region141: #{tpu_custom_call.1} parent=91 // pred_check
          %p831 = pneg %p352
        $region142: #{tpu_custom_call.1} parent=91 // pred_check_branch
          %833 = sbr.rel (%p831) target = $region144
        $region143: #{tpu_custom_call.1} parent=91 // pred_region
          %834 = dma.done [#allocation14], 256
        $region144: #{tpu_custom_call.1} parent=91 // pred_fallthru
          _
        // Predicated region
        $region145: #{tpu_custom_call.1} parent=91 // pred_check
          %p835 = pneg %p373
        $region146: #{tpu_custom_call.1} parent=91 // pred_check_branch
          %837 = sbr.rel (%p835) target = $region148
        $region147: #{tpu_custom_call.1} parent=91 // pred_region
          %838 = dma.done [#allocation23], 16
        $region148: #{tpu_custom_call.1} parent=91 // pred_fallthru
          _
        // Predicated region
        $region149: #{tpu_custom_call.1} parent=91 // pred_check
          %p839 = pneg %p394
        $region150: #{tpu_custom_call.1} parent=91 // pred_check_branch
          %841 = sbr.rel (%p839) target = $region152
        $region151: #{tpu_custom_call.1} parent=91 // pred_region
          %842 = dma.done [#allocation23], 512
        $region152: #{tpu_custom_call.1} parent=91 // pred_fallthru
          _
        // Predicated region
        $region153: #{tpu_custom_call.1} parent=91 // pred_check
          %p843 = pneg %p415
        $region154: #{tpu_custom_call.1} parent=91 // pred_check_branch
          %845 = sbr.rel (%p843) target = $region156
        $region155: #{tpu_custom_call.1} parent=91 // pred_region
          %846 = dma.done [#allocation26], 16
        $region156: #{tpu_custom_call.1} parent=91 // pred_fallthru
          _
        // Predicated region
        $region157: #{tpu_custom_call.1} parent=91 // pred_check
          %p847 = pneg %p436
        $region158: #{tpu_custom_call.1} parent=91 // pred_check_branch
          %849 = sbr.rel (%p847) target = $region160
        $region159: #{tpu_custom_call.1} parent=91 // pred_region
          %850 = dma.done [#allocation26], 256
        $region160: #{tpu_custom_call.1} parent=91 // pred_fallthru
          _
        // Predicated region
        $region161: #{tpu_custom_call.1} parent=91 // pred_check
          %p851 = pneg %p457
        $region162: #{tpu_custom_call.1} parent=91 // pred_check_branch
          %853 = sbr.rel (%p851) target = $region164
        $region163: #{tpu_custom_call.1} parent=91 // pred_region
          %854 = dma.done [#allocation29], 16
        $region164: #{tpu_custom_call.1} parent=91 // pred_fallthru
          _
        %p855 = pneg %p70
        %p856 = pneg %p67
        %p857 = pneg %p96
        %p858 = pneg %p93
        %p859 = pneg %p122
        %p860 = pneg %p119
        %p861 = pneg %p143
        %p862 = pneg %p140
        %p863 = pneg %p164
        %p864 = pneg %p161
        %p865 = pneg %p185
        %p866 = pneg %p182
        %s867 = sand.u32 %s37, 1
        %s868 = scalar_lea.sflag [#allocation5], %s867
        %s869 = sand.u32 %s198, 1
        %s870 = smul.addr %s869, 96
        %s871 = scalar_lea.vmem [#allocation15], %s870
        %p872 = pneg %p211
        %p873 = pneg %p208
        %s874 = sand.u32 %s37, 1
        %s875 = scalar_lea.sflag [#allocation5], %s874
        %s876 = sand.u32 %s224, 1
        %s877 = smul.addr %s876, 96
        %s878 = scalar_lea.vmem [#allocation16], %s877
        %p879 = pneg %p237
        %p880 = pneg %p234
        %s881 = sand.u32 %s37, 1
        %s882 = scalar_lea.sflag [#allocation5], %s881
        %s883 = sand.u32 %s250, 1
        %s884 = scalar_lea.vmem [#allocation17], %s883
        %p885 = pneg %p263
        %p886 = pneg %p260
        %s887 = sand.u32 %s37, 1
        %s888 = scalar_lea.sflag [#allocation5], %s887
        %s889 = sand.u32 %s276, 1
        %s890 = scalar_lea.vmem [#allocation18], %s889
        %p891 = pneg %p289
        %p892 = pneg %p286
        %p893 = pneg %p310
        %p894 = pneg %p307
        %p895 = pneg %p331
        %p896 = pneg %p328
        %p897 = pneg %p352
        %p898 = pneg %p349
        %p899 = pneg %p373
        %p900 = pneg %p370
        %p901 = pneg %p394
        %p902 = pneg %p391
        %p903 = pneg %p415
        %p904 = pneg %p412
        %p905 = pneg %p436
        %p906 = pneg %p433
        %p907 = pneg %p457
        %p908 = pneg %p454
        %p909 = pneg %p483
        %p910 = pneg %p480
        %s911 = smul.u32 2, %s41
        %s912 = smul.u32 2, %s41
        %s913 = smul.u32 2, %s41
        %s914 = smul.u32 2, %s41
        %p915 = scmp.eq.s32.totalorder %s42, 0
        // Predicated region
        $region165: #{tpu_custom_call.1} parent=91 // pred_check
          %p916 = pneg %p915
        $region166: #{tpu_custom_call.1} parent=91 // pred_check_branch
          %918 = sbr.rel (%p916) target = $region168
        $region167: #{tpu_custom_call.1} parent=91 // pred_region
          %v919 = vld [vmem:[#allocation4] sm:$0xff]
          %v920 = vld [vmem:[#allocation4 + $0x8] sm:$0xff]
          %v921 = vld [vmem:[#allocation10] sm:$0xff]
          %v922 = vadd.f32 %v919, %v921
          %v923 = vadd.f32 %v920, %v921
          %vm924 = vcmask 130048
          %925 = vst.msk [vmem:[#allocation2] sm:$0xff] %vm924, %v922
          %926 = vst.msk [vmem:[#allocation2 + $0x8] sm:$0xff] %vm924, %v923
          %v927 = vld [vmem:[#allocation12] sm:$0xff]
          %v928 = vld [vmem:[#allocation12 + $0x8] sm:$0xff]
          %v929 = vld [vmem:[#allocation13] sm:$0x1]
          %v931 = vlaneseq
          %v932 = vshrl.u32 %v931, 7
          %v933 = vsub.s32 0, %v932
          %v934 = vrot.slane %v929, %v933
          %v937 = vsel %vm924, %v922, 0
          %v940 = vsel %vm924, %v923, 0
          %942 = vmatprep.subr.mxu0 0.0
          %943 = vmatpush1.msra.mxu0 %v927
          %944 = vmatprep.subr.mxu0 0.0
          %945 = vmatpush1.msra.mxu0 %v928
          %946 = vmatprep.subr.mxu0 0.0
          %947 = vmatpush1.msra.mxu0 0.0
          %948 = vmatprep.subr.mxu0 0.0
          %949 = vmatpush1.msra.mxu0 0.0
          %950 = vmatprep.subr.mxu0 0.0
          %951 = vmatpush1.msra.mxu0 0.0
          %952 = vmatprep.subr.mxu0 0.0
          %953 = vmatpush1.msra.mxu0 0.0
          %954 = vmatprep.subr.mxu0 0.0
          %955 = vmatpush1.msra.mxu0 0.0
          %956 = vmatprep.subr.mxu0 0.0
          %957 = vmatpush1.msra.mxu0 0.0
          %958 = vmatprep.subr.mxu0 0.0
          %959 = vmatpush1.msra.mxu0 0.0
          %960 = vmatprep.subr.mxu0 0.0
          %961 = vmatpush1.msra.mxu0 0.0
          %962 = vmatprep.subr.mxu0 0.0
          %963 = vmatpush1.msra.mxu0 0.0
          %964 = vmatprep.subr.mxu0 0.0
          %965 = vmatpush1.msra.mxu0 0.0
          %966 = vmatprep.subr.mxu0 0.0
          %967 = vmatpush1.msra.mxu0 0.0
          %968 = vmatprep.subr.mxu0 0.0
          %969 = vmatpush1.msra.mxu0 0.0
          %970 = vmatprep.subr.mxu0 0.0
          %971 = vmatpush1.msra.mxu0 0.0
          %972 = vmatprep.subr.mxu0 0.0
          %973 = vmatpush1.msra.mxu0 0.0
          %974 = vmatprep.subr.mxu0 0.0
          %975 = vmatpush1.msra.mxu0 0.0
          %976 = vmatprep.subr.mxu0 0.0
          %977 = vmatpush1.msra.mxu0 0.0
          %978 = vmatprep.subr.mxu0 0.0
          %979 = vmatpush1.msra.mxu0 0.0
          %980 = vmatprep.subr.mxu0 0.0
          %981 = vmatpush1.msra.mxu0 0.0
          %982 = vmatprep.subr.mxu0 0.0
          %983 = vmatpush1.msra.mxu0 0.0
          %984 = vmatprep.subr.mxu0 0.0
          %985 = vmatpush1.msra.mxu0 0.0
          %986 = vmatprep.subr.mxu0 0.0
          %987 = vmatpush1.msra.mxu0 0.0
          %988 = vmatprep.subr.mxu0 0.0
          %989 = vmatpush1.msra.mxu0 0.0
          %990 = vmatprep.subr.mxu0 0.0
          %991 = vmatpush1.msra.mxu0 0.0
          %992 = vmatprep.subr.mxu0 0.0
          %993 = vmatpush1.msra.mxu0 0.0
          %994 = vmatprep.subr.mxu0 0.0
          %995 = vmatpush1.msra.mxu0 0.0
          %996 = vmatprep.subr.mxu0 0.0
          %997 = vmatpush1.msra.mxu0 0.0
          %998 = vmatprep.subr.mxu0 0.0
          %999 = vmatpush1.msra.mxu0 0.0
          %1000 = vmatprep.subr.mxu0 0.0
          %1001 = vmatpush1.msra.mxu0 0.0
          %1002 = vmatprep.subr.mxu0 0.0
          %1003 = vmatpush1.msra.mxu0 0.0
          %1004 = vmatprep.subr.mxu0 0.0
          %1005 = vmatpush1.msra.mxu0 0.0
          %1006 = vmatprep.mubr.f32.mxu0 0.0
          %1007 = vmatmul.mubr.f32.gmra.mrb[0].mxu0 %v937
          %v1008 = vpop.f32.mrb[0].mxu0
          %v1009 = vadd.f32 %v934, %v1008
          %v1010 = vpop.f32.mrb[0].mxu0
          %1011 = vmatprep.mubr.f32.mxu0 0.0
          %1012 = vmatmul.mubr.f32.gmra.mrb[0].mxu0 %v940
          %v1013 = vpop.f32.mrb[0].mxu0
          %v1014 = vadd.f32 %v934, %v1013
          %v1015 = vpop.f32.mrb[0].mxu0
          %1016 = vdwg.mxu0
          %vm1017 = vcmask 261120
          %1018 = vst.msk [vmem:[#allocation3] sm:$0xff] %vm1017, 0.0
          %1019 = vst.msk [vmem:[#allocation3 + $0x10] sm:$0xff] %vm1017, 0.0
          %1020 = vst.msk [vmem:[#allocation3 + $0x8] sm:$0xff] %vm1017, %v1009
          %1021 = vst.msk [vmem:[#allocation3 + $0x18] sm:$0xff] %vm1017, %v1014
        $region168: #{tpu_custom_call.1} parent=91 // pred_fallthru
          _
        %v1022 = vld [vmem:[#allocation2] sm:$0xff]
        %v1023 = vld [vmem:[#allocation2 + $0x8] sm:$0xff]
        %v1024 = vld [vmem:[#allocation3 + $0x8] sm:$0xff]
        %v1025 = vld [vmem:[#allocation3 + $0x18] sm:$0xff]
        %v1026 = vld [vmem:[#allocation3 + $0x6] sm:$0xff]
        %v1027 = vld [vmem:[#allocation3 + $0x16] sm:$0xff]
        %v1028 = vld [vmem:[%s793] sm:$0xff]
        %v1029 = vld [vmem:[%s793 + $0x8] sm:$0xff]
        %v1030 = vld [vmem:[%s793 + $0x10] sm:$0xff]
        %v1031 = vld [vmem:[%s793 + $0x18] sm:$0xff]
        %v1032 = vld [vmem:[%s802] sm:$0xff]
        %v1033 = vld [vmem:[%s802 + $0x8] sm:$0xff]
        %v1034 = vld [vmem:[%s802 + $0x10] sm:$0xff]
        %v1035 = vld [vmem:[%s802 + $0x18] sm:$0xff]
        %v1036 = vld [vmem:[#allocation3 + $0x7] sm:$0xff]
        %v1037 = vld [vmem:[#allocation3 + $0x17] sm:$0xff]
        %s1038 = scalar_lea.vmem %s793, 32 [#allocation15]
        %v1039 = vld [vmem:[%s1038] sm:$0xff]
        %v1040 = vld [vmem:[%s1038 + $0x8] sm:$0xff]
        %v1041 = vld [vmem:[%s1038 + $0x10] sm:$0xff]
        %v1042 = vld [vmem:[%s1038 + $0x18] sm:$0xff]
        %vm1043 = vcmask 261120
        %v1045 = vsel %vm1043, %v1036, 0
        %v1048 = vsel %vm1043, %v1037, 0
        %1050 = vmatprep.subr.mxu0 0.0
        %1051 = vmatpush1.msra.mxu0 %v1039
        %1052 = vmatprep.subr.mxu0 0.0
        %1053 = vmatpush1.msra.mxu0 %v1040
        %1054 = vmatprep.subr.mxu0 0.0
        %1055 = vmatpush1.msra.mxu0 %v1041
        %1056 = vmatprep.subr.mxu0 0.0
        %1057 = vmatpush1.msra.mxu0 %v1042
        %1058 = vmatprep.subr.mxu0 0.0
        %1059 = vmatpush1.msra.mxu0 0.0
        %1060 = vmatprep.subr.mxu0 0.0
        %1061 = vmatpush1.msra.mxu0 0.0
        %1062 = vmatprep.subr.mxu0 0.0
        %1063 = vmatpush1.msra.mxu0 0.0
        %1064 = vmatprep.subr.mxu0 0.0
        %1065 = vmatpush1.msra.mxu0 0.0
        %1066 = vmatprep.subr.mxu0 0.0
        %1067 = vmatpush1.msra.mxu0 0.0
        %1068 = vmatprep.subr.mxu0 0.0
        %1069 = vmatpush1.msra.mxu0 0.0
        %1070 = vmatprep.subr.mxu0 0.0
        %1071 = vmatpush1.msra.mxu0 0.0
        %1072 = vmatprep.subr.mxu0 0.0
        %1073 = vmatpush1.msra.mxu0 0.0
        %1074 = vmatprep.subr.mxu0 0.0
        %1075 = vmatpush1.msra.mxu0 0.0
        %1076 = vmatprep.subr.mxu0 0.0
        %1077 = vmatpush1.msra.mxu0 0.0
        %1078 = vmatprep.subr.mxu0 0.0
        %1079 = vmatpush1.msra.mxu0 0.0
        %1080 = vmatprep.subr.mxu0 0.0
        %1081 = vmatpush1.msra.mxu0 0.0
        %1082 = vmatprep.subr.mxu0 0.0
        %1083 = vmatpush1.msra.mxu0 0.0
        %1084 = vmatprep.subr.mxu0 0.0
        %1085 = vmatpush1.msra.mxu0 0.0
        %1086 = vmatprep.subr.mxu0 0.0
        %1087 = vmatpush1.msra.mxu0 0.0
        %1088 = vmatprep.subr.mxu0 0.0
        %1089 = vmatpush1.msra.mxu0 0.0
        %1090 = vmatprep.subr.mxu0 0.0
        %1091 = vmatpush1.msra.mxu0 0.0
        %1092 = vmatprep.subr.mxu0 0.0
        %1093 = vmatpush1.msra.mxu0 0.0
        %1094 = vmatprep.subr.mxu0 0.0
        %1095 = vmatpush1.msra.mxu0 0.0
        %1096 = vmatprep.subr.mxu0 0.0
        %1097 = vmatpush1.msra.mxu0 0.0
        %1098 = vmatprep.subr.mxu0 0.0
        %1099 = vmatpush1.msra.mxu0 0.0
        %1100 = vmatprep.subr.mxu0 0.0
        %1101 = vmatpush1.msra.mxu0 0.0
        %1102 = vmatprep.subr.mxu0 0.0
        %1103 = vmatpush1.msra.mxu0 0.0
        %1104 = vmatprep.subr.mxu0 0.0
        %1105 = vmatpush1.msra.mxu0 0.0
        %1106 = vmatprep.subr.mxu0 0.0
        %1107 = vmatpush1.msra.mxu0 0.0
        %1108 = vmatprep.subr.mxu0 0.0
        %1109 = vmatpush1.msra.mxu0 0.0
        %1110 = vmatprep.subr.mxu0 0.0
        %1111 = vmatpush1.msra.mxu0 0.0
        %1112 = vmatprep.subr.mxu0 0.0
        %1113 = vmatpush1.msra.mxu0 0.0
        %1114 = vmatprep.mubr.f32.mxu0 0.0
        %1115 = vmatmul.mubr.f32.gmra.mrb[0].mxu0 %v1045
        %v1116 = vpop.f32.mrb[0].mxu0
        %v1117 = vadd.f32 0.0, %v1116
        %v1118 = vpop.f32.mrb[0].mxu0
        %1119 = vmatprep.mubr.f32.mxu0 0.0
        %1120 = vmatmul.mubr.f32.gmra.mrb[0].mxu0 %v1048
        %v1121 = vpop.f32.mrb[0].mxu0
        %v1122 = vadd.f32 0.0, %v1121
        %v1123 = vpop.f32.mrb[0].mxu0
        %1124 = vdwg.mxu0
        %v1126 = vsel %vm1043, %v1026, 0
        %v1129 = vsel %vm1043, %v1027, 0
        %1131 = vmatprep.subr.mxu0 0.0
        %1132 = vmatpush1.msra.mxu0 %v1028
        %1133 = vmatprep.subr.mxu0 0.0
        %1134 = vmatpush1.msra.mxu0 %v1029
        %1135 = vmatprep.subr.mxu0 0.0
        %1136 = vmatpush1.msra.mxu0 %v1030
        %1137 = vmatprep.subr.mxu0 0.0
        %1138 = vmatpush1.msra.mxu0 %v1031
        %1139 = vmatprep.subr.mxu0 0.0
        %1140 = vmatpush1.msra.mxu0 0.0
        %1141 = vmatprep.subr.mxu0 0.0
        %1142 = vmatpush1.msra.mxu0 0.0
        %1143 = vmatprep.subr.mxu0 0.0
        %1144 = vmatpush1.msra.mxu0 0.0
        %1145 = vmatprep.subr.mxu0 0.0
        %1146 = vmatpush1.msra.mxu0 0.0
        %1147 = vmatprep.subr.mxu0 0.0
        %1148 = vmatpush1.msra.mxu0 0.0
        %1149 = vmatprep.subr.mxu0 0.0
        %1150 = vmatpush1.msra.mxu0 0.0
        %1151 = vmatprep.subr.mxu0 0.0
        %1152 = vmatpush1.msra.mxu0 0.0
        %1153 = vmatprep.subr.mxu0 0.0
        %1154 = vmatpush1.msra.mxu0 0.0
        %1155 = vmatprep.subr.mxu0 0.0
        %1156 = vmatpush1.msra.mxu0 0.0
        %1157 = vmatprep.subr.mxu0 0.0
        %1158 = vmatpush1.msra.mxu0 0.0
        %1159 = vmatprep.subr.mxu0 0.0
        %1160 = vmatpush1.msra.mxu0 0.0
        %1161 = vmatprep.subr.mxu0 0.0
        %1162 = vmatpush1.msra.mxu0 0.0
        %1163 = vmatprep.subr.mxu0 0.0
        %1164 = vmatpush1.msra.mxu0 0.0
        %1165 = vmatprep.subr.mxu0 0.0
        %1166 = vmatpush1.msra.mxu0 0.0
        %1167 = vmatprep.subr.mxu0 0.0
        %1168 = vmatpush1.msra.mxu0 0.0
        %1169 = vmatprep.subr.mxu0 0.0
        %1170 = vmatpush1.msra.mxu0 0.0
        %1171 = vmatprep.subr.mxu0 0.0
        %1172 = vmatpush1.msra.mxu0 0.0
        %1173 = vmatprep.subr.mxu0 0.0
        %1174 = vmatpush1.msra.mxu0 0.0
        %1175 = vmatprep.subr.mxu0 0.0
        %1176 = vmatpush1.msra.mxu0 0.0
        %1177 = vmatprep.subr.mxu0 0.0
        %1178 = vmatpush1.msra.mxu0 0.0
        %1179 = vmatprep.subr.mxu0 0.0
        %1180 = vmatpush1.msra.mxu0 0.0
        %1181 = vmatprep.subr.mxu0 0.0
        %1182 = vmatpush1.msra.mxu0 0.0
        %1183 = vmatprep.subr.mxu0 0.0
        %1184 = vmatpush1.msra.mxu0 0.0
        %1185 = vmatprep.subr.mxu0 0.0
        %1186 = vmatpush1.msra.mxu0 0.0
        %1187 = vmatprep.subr.mxu0 0.0
        %1188 = vmatpush1.msra.mxu0 0.0
        %1189 = vmatprep.subr.mxu0 0.0
        %1190 = vmatpush1.msra.mxu0 0.0
        %1191 = vmatprep.subr.mxu0 0.0
        %1192 = vmatpush1.msra.mxu0 0.0
        %1193 = vmatprep.subr.mxu0 0.0
        %1194 = vmatpush1.msra.mxu0 0.0
        %1195 = vmatprep.mubr.f32.mxu0 0.0
        %1196 = vmatmul.mubr.f32.gmra.mrb[0].mxu0 %v1126
        %v1197 = vpop.f32.mrb[0].mxu0
        %v1198 = vadd.f32 %v1117, %v1197
        %v1199 = vpop.f32.mrb[0].mxu0
        %1200 = vmatprep.mubr.f32.mxu0 0.0
        %1201 = vmatmul.mubr.f32.gmra.mrb[0].mxu0 %v1129
        %v1202 = vpop.f32.mrb[0].mxu0
        %v1203 = vadd.f32 %v1122, %v1202
        %v1204 = vpop.f32.mrb[0].mxu0
        %1205 = vdwg.mxu0
        %s1206 = scalar_lea.vmem %s802, 32 [#allocation16]
        %v1207 = vld [vmem:[%s1206] sm:$0xff]
        %v1208 = vld [vmem:[%s1206 + $0x8] sm:$0xff]
        %v1209 = vld [vmem:[%s1206 + $0x10] sm:$0xff]
        %v1210 = vld [vmem:[%s1206 + $0x18] sm:$0xff]
        %1211 = vmatprep.subr.mxu0 0.0
        %1212 = vmatpush1.msra.mxu0 %v1207
        %1213 = vmatprep.subr.mxu0 0.0
        %1214 = vmatpush1.msra.mxu0 %v1208
        %1215 = vmatprep.subr.mxu0 0.0
        %1216 = vmatpush1.msra.mxu0 %v1209
        %1217 = vmatprep.subr.mxu0 0.0
        %1218 = vmatpush1.msra.mxu0 %v1210
        %1219 = vmatprep.subr.mxu0 0.0
        %1220 = vmatpush1.msra.mxu0 0.0
        %1221 = vmatprep.subr.mxu0 0.0
        %1222 = vmatpush1.msra.mxu0 0.0
        %1223 = vmatprep.subr.mxu0 0.0
        %1224 = vmatpush1.msra.mxu0 0.0
        %1225 = vmatprep.subr.mxu0 0.0
        %1226 = vmatpush1.msra.mxu0 0.0
        %1227 = vmatprep.subr.mxu0 0.0
        %1228 = vmatpush1.msra.mxu0 0.0
        %1229 = vmatprep.subr.mxu0 0.0
        %1230 = vmatpush1.msra.mxu0 0.0
        %1231 = vmatprep.subr.mxu0 0.0
        %1232 = vmatpush1.msra.mxu0 0.0
        %1233 = vmatprep.subr.mxu0 0.0
        %1234 = vmatpush1.msra.mxu0 0.0
        %1235 = vmatprep.subr.mxu0 0.0
        %1236 = vmatpush1.msra.mxu0 0.0
        %1237 = vmatprep.subr.mxu0 0.0
        %1238 = vmatpush1.msra.mxu0 0.0
        %1239 = vmatprep.subr.mxu0 0.0
        %1240 = vmatpush1.msra.mxu0 0.0
        %1241 = vmatprep.subr.mxu0 0.0
        %1242 = vmatpush1.msra.mxu0 0.0
        %1243 = vmatprep.subr.mxu0 0.0
        %1244 = vmatpush1.msra.mxu0 0.0
        %1245 = vmatprep.subr.mxu0 0.0
        %1246 = vmatpush1.msra.mxu0 0.0
        %1247 = vmatprep.subr.mxu0 0.0
        %1248 = vmatpush1.msra.mxu0 0.0
        %1249 = vmatprep.subr.mxu0 0.0
        %1250 = vmatpush1.msra.mxu0 0.0
        %1251 = vmatprep.subr.mxu0 0.0
        %1252 = vmatpush1.msra.mxu0 0.0
        %1253 = vmatprep.subr.mxu0 0.0
        %1254 = vmatpush1.msra.mxu0 0.0
        %1255 = vmatprep.subr.mxu0 0.0
        %1256 = vmatpush1.msra.mxu0 0.0
        %1257 = vmatprep.subr.mxu0 0.0
        %1258 = vmatpush1.msra.mxu0 0.0
        %1259 = vmatprep.subr.mxu0 0.0
        %1260 = vmatpush1.msra.mxu0 0.0
        %1261 = vmatprep.subr.mxu0 0.0
        %1262 = vmatpush1.msra.mxu0 0.0
        %1263 = vmatprep.subr.mxu0 0.0
        %1264 = vmatpush1.msra.mxu0 0.0
        %1265 = vmatprep.subr.mxu0 0.0
        %1266 = vmatpush1.msra.mxu0 0.0
        %1267 = vmatprep.subr.mxu0 0.0
        %1268 = vmatpush1.msra.mxu0 0.0
        %1269 = vmatprep.subr.mxu0 0.0
        %1270 = vmatpush1.msra.mxu0 0.0
        %1271 = vmatprep.subr.mxu0 0.0
        %1272 = vmatpush1.msra.mxu0 0.0
        %1273 = vmatprep.subr.mxu0 0.0
        %1274 = vmatpush1.msra.mxu0 0.0
        %1275 = vmatprep.mubr.f32.mxu0 0.0
        %1276 = vmatmul.mubr.f32.gmra.mrb[0].mxu0 %v1045
        %v1277 = vpop.f32.mrb[0].mxu0
        %v1278 = vadd.f32 0.0, %v1277
        %v1279 = vpop.f32.mrb[0].mxu0
        %1280 = vmatprep.mubr.f32.mxu0 0.0
        %1281 = vmatmul.mubr.f32.gmra.mrb[0].mxu0 %v1048
        %v1282 = vpop.f32.mrb[0].mxu0
        %v1283 = vadd.f32 0.0, %v1282
        %v1284 = vpop.f32.mrb[0].mxu0
        %1285 = vdwg.mxu0
        %1286 = vmatprep.subr.mxu0 0.0
        %1287 = vmatpush1.msra.mxu0 %v1032
        %1288 = vmatprep.subr.mxu0 0.0
        %1289 = vmatpush1.msra.mxu0 %v1033
        %1290 = vmatprep.subr.mxu0 0.0
        %1291 = vmatpush1.msra.mxu0 %v1034
        %1292 = vmatprep.subr.mxu0 0.0
        %1293 = vmatpush1.msra.mxu0 %v1035
        %1294 = vmatprep.subr.mxu0 0.0
        %1295 = vmatpush1.msra.mxu0 0.0
        %1296 = vmatprep.subr.mxu0 0.0
        %1297 = vmatpush1.msra.mxu0 0.0
        %1298 = vmatprep.subr.mxu0 0.0
        %1299 = vmatpush1.msra.mxu0 0.0
        %1300 = vmatprep.subr.mxu0 0.0
        %1301 = vmatpush1.msra.mxu0 0.0
        %1302 = vmatprep.subr.mxu0 0.0
        %1303 = vmatpush1.msra.mxu0 0.0
        %1304 = vmatprep.subr.mxu0 0.0
        %1305 = vmatpush1.msra.mxu0 0.0
        %1306 = vmatprep.subr.mxu0 0.0
        %1307 = vmatpush1.msra.mxu0 0.0
        %1308 = vmatprep.subr.mxu0 0.0
        %1309 = vmatpush1.msra.mxu0 0.0
        %1310 = vmatprep.subr.mxu0 0.0
        %1311 = vmatpush1.msra.mxu0 0.0
        %1312 = vmatprep.subr.mxu0 0.0
        %1313 = vmatpush1.msra.mxu0 0.0
        %1314 = vmatprep.subr.mxu0 0.0
        %1315 = vmatpush1.msra.mxu0 0.0
        %1316 = vmatprep.subr.mxu0 0.0
        %1317 = vmatpush1.msra.mxu0 0.0
        %1318 = vmatprep.subr.mxu0 0.0
        %1319 = vmatpush1.msra.mxu0 0.0
        %1320 = vmatprep.subr.mxu0 0.0
        %1321 = vmatpush1.msra.mxu0 0.0
        %1322 = vmatprep.subr.mxu0 0.0
        %1323 = vmatpush1.msra.mxu0 0.0
        %1324 = vmatprep.subr.mxu0 0.0
        %1325 = vmatpush1.msra.mxu0 0.0
        %1326 = vmatprep.subr.mxu0 0.0
        %1327 = vmatpush1.msra.mxu0 0.0
        %1328 = vmatprep.subr.mxu0 0.0
        %1329 = vmatpush1.msra.mxu0 0.0
        %1330 = vmatprep.subr.mxu0 0.0
        %1331 = vmatpush1.msra.mxu0 0.0
        %1332 = vmatprep.subr.mxu0 0.0
        %1333 = vmatpush1.msra.mxu0 0.0
        %1334 = vmatprep.subr.mxu0 0.0
        %1335 = vmatpush1.msra.mxu0 0.0
        %1336 = vmatprep.subr.mxu0 0.0
        %1337 = vmatpush1.msra.mxu0 0.0
        %1338 = vmatprep.subr.mxu0 0.0
        %1339 = vmatpush1.msra.mxu0 0.0
        %1340 = vmatprep.subr.mxu0 0.0
        %1341 = vmatpush1.msra.mxu0 0.0
        %1342 = vmatprep.subr.mxu0 0.0
        %1343 = vmatpush1.msra.mxu0 0.0
        %1344 = vmatprep.subr.mxu0 0.0
        %1345 = vmatpush1.msra.mxu0 0.0
        %1346 = vmatprep.subr.mxu0 0.0
        %1347 = vmatpush1.msra.mxu0 0.0
        %1348 = vmatprep.subr.mxu0 0.0
        %1349 = vmatpush1.msra.mxu0 0.0
        %1350 = vmatprep.mubr.f32.mxu0 0.0
        %1351 = vmatmul.mubr.f32.gmra.mrb[0].mxu0 %v1126
        %v1352 = vpop.f32.mrb[0].mxu0
        %v1353 = vadd.f32 %v1278, %v1352
        %v1354 = vpop.f32.mrb[0].mxu0
        %1355 = vmatprep.mubr.f32.mxu0 0.0
        %1356 = vmatmul.mubr.f32.gmra.mrb[0].mxu0 %v1129
        %v1357 = vpop.f32.mrb[0].mxu0
        %v1358 = vadd.f32 %v1283, %v1357
        %v1359 = vpop.f32.mrb[0].mxu0
        %1360 = vdwg.mxu0
        %s1361 = scalar_lea.vmem %s793, 64 [#allocation15]
        %v1362 = vld [vmem:[%s1361] sm:$0xff]
        %v1363 = vld [vmem:[%s1361 + $0x8] sm:$0xff]
        %v1364 = vld [vmem:[%s1361 + $0x10] sm:$0xff]
        %v1365 = vld [vmem:[%s1361 + $0x18] sm:$0xff]
        %v1367 = vsel %vm1043, %v1024, 0
        %v1370 = vsel %vm1043, %v1025, 0
        %1372 = vmatprep.subr.mxu0 0.0
        %1373 = vmatpush1.msra.mxu0 %v1362
        %1374 = vmatprep.subr.mxu0 0.0
        %1375 = vmatpush1.msra.mxu0 %v1363
        %1376 = vmatprep.subr.mxu0 0.0
        %1377 = vmatpush1.msra.mxu0 %v1364
        %1378 = vmatprep.subr.mxu0 0.0
        %1379 = vmatpush1.msra.mxu0 %v1365
        %1380 = vmatprep.subr.mxu0 0.0
        %1381 = vmatpush1.msra.mxu0 0.0
        %1382 = vmatprep.subr.mxu0 0.0
        %1383 = vmatpush1.msra.mxu0 0.0
        %1384 = vmatprep.subr.mxu0 0.0
        %1385 = vmatpush1.msra.mxu0 0.0
        %1386 = vmatprep.subr.mxu0 0.0
        %1387 = vmatpush1.msra.mxu0 0.0
        %1388 = vmatprep.subr.mxu0 0.0
        %1389 = vmatpush1.msra.mxu0 0.0
        %1390 = vmatprep.subr.mxu0 0.0
        %1391 = vmatpush1.msra.mxu0 0.0
        %1392 = vmatprep.subr.mxu0 0.0
        %1393 = vmatpush1.msra.mxu0 0.0
        %1394 = vmatprep.subr.mxu0 0.0
        %1395 = vmatpush1.msra.mxu0 0.0
        %1396 = vmatprep.subr.mxu0 0.0
        %1397 = vmatpush1.msra.mxu0 0.0
        %1398 = vmatprep.subr.mxu0 0.0
        %1399 = vmatpush1.msra.mxu0 0.0
        %1400 = vmatprep.subr.mxu0 0.0
        %1401 = vmatpush1.msra.mxu0 0.0
        %1402 = vmatprep.subr.mxu0 0.0
        %1403 = vmatpush1.msra.mxu0 0.0
        %1404 = vmatprep.subr.mxu0 0.0
        %1405 = vmatpush1.msra.mxu0 0.0
        %1406 = vmatprep.subr.mxu0 0.0
        %1407 = vmatpush1.msra.mxu0 0.0
        %1408 = vmatprep.subr.mxu0 0.0
        %1409 = vmatpush1.msra.mxu0 0.0
        %1410 = vmatprep.subr.mxu0 0.0
        %1411 = vmatpush1.msra.mxu0 0.0
        %1412 = vmatprep.subr.mxu0 0.0
        %1413 = vmatpush1.msra.mxu0 0.0
        %1414 = vmatprep.subr.mxu0 0.0
        %1415 = vmatpush1.msra.mxu0 0.0
        %1416 = vmatprep.subr.mxu0 0.0
        %1417 = vmatpush1.msra.mxu0 0.0
        %1418 = vmatprep.subr.mxu0 0.0
        %1419 = vmatpush1.msra.mxu0 0.0
        %1420 = vmatprep.subr.mxu0 0.0
        %1421 = vmatpush1.msra.mxu0 0.0
        %1422 = vmatprep.subr.mxu0 0.0
        %1423 = vmatpush1.msra.mxu0 0.0
        %1424 = vmatprep.subr.mxu0 0.0
        %1425 = vmatpush1.msra.mxu0 0.0
        %1426 = vmatprep.subr.mxu0 0.0
        %1427 = vmatpush1.msra.mxu0 0.0
        %1428 = vmatprep.subr.mxu0 0.0
        %1429 = vmatpush1.msra.mxu0 0.0
        %1430 = vmatprep.subr.mxu0 0.0
        %1431 = vmatpush1.msra.mxu0 0.0
        %1432 = vmatprep.subr.mxu0 0.0
        %1433 = vmatpush1.msra.mxu0 0.0
        %1434 = vmatprep.subr.mxu0 0.0
        %1435 = vmatpush1.msra.mxu0 0.0
        %1436 = vmatprep.mubr.f32.mxu0 0.0
        %1437 = vmatmul.mubr.f32.gmra.mrb[0].mxu0 %v1367
        %v1438 = vpop.f32.mrb[0].mxu0
        %v1439 = vadd.f32 0.0, %v1438
        %v1440 = vpop.f32.mrb[0].mxu0
        %1441 = vmatprep.mubr.f32.mxu0 0.0
        %1442 = vmatmul.mubr.f32.gmra.mrb[0].mxu0 %v1370
        %v1443 = vpop.f32.mrb[0].mxu0
        %v1444 = vadd.f32 0.0, %v1443
        %v1445 = vpop.f32.mrb[0].mxu0
        %1446 = vdwg.mxu0
        %v1447 = vadd.f32 %v1198, %v1439
        %v1448 = vadd.f32 %v1203, %v1444
        %s1449 = scalar_lea.vmem %s802, 64 [#allocation16]
        %v1450 = vld [vmem:[%s1449] sm:$0xff]
        %v1451 = vld [vmem:[%s1449 + $0x8] sm:$0xff]
        %v1452 = vld [vmem:[%s1449 + $0x10] sm:$0xff]
        %v1453 = vld [vmem:[%s1449 + $0x18] sm:$0xff]
        %1454 = vmatprep.subr.mxu0 0.0
        %1455 = vmatpush1.msra.mxu0 %v1450
        %1456 = vmatprep.subr.mxu0 0.0
        %1457 = vmatpush1.msra.mxu0 %v1451
        %1458 = vmatprep.subr.mxu0 0.0
        %1459 = vmatpush1.msra.mxu0 %v1452
        %1460 = vmatprep.subr.mxu0 0.0
        %1461 = vmatpush1.msra.mxu0 %v1453
        %1462 = vmatprep.subr.mxu0 0.0
        %1463 = vmatpush1.msra.mxu0 0.0
        %1464 = vmatprep.subr.mxu0 0.0
        %1465 = vmatpush1.msra.mxu0 0.0
        %1466 = vmatprep.subr.mxu0 0.0
        %1467 = vmatpush1.msra.mxu0 0.0
        %1468 = vmatprep.subr.mxu0 0.0
        %1469 = vmatpush1.msra.mxu0 0.0
        %1470 = vmatprep.subr.mxu0 0.0
        %1471 = vmatpush1.msra.mxu0 0.0
        %1472 = vmatprep.subr.mxu0 0.0
        %1473 = vmatpush1.msra.mxu0 0.0
        %1474 = vmatprep.subr.mxu0 0.0
        %1475 = vmatpush1.msra.mxu0 0.0
        %1476 = vmatprep.subr.mxu0 0.0
        %1477 = vmatpush1.msra.mxu0 0.0
        %1478 = vmatprep.subr.mxu0 0.0
        %1479 = vmatpush1.msra.mxu0 0.0
        %1480 = vmatprep.subr.mxu0 0.0
        %1481 = vmatpush1.msra.mxu0 0.0
        %1482 = vmatprep.subr.mxu0 0.0
        %1483 = vmatpush1.msra.mxu0 0.0
        %1484 = vmatprep.subr.mxu0 0.0
        %1485 = vmatpush1.msra.mxu0 0.0
        %1486 = vmatprep.subr.mxu0 0.0
        %1487 = vmatpush1.msra.mxu0 0.0
        %1488 = vmatprep.subr.mxu0 0.0
        %1489 = vmatpush1.msra.mxu0 0.0
        %1490 = vmatprep.subr.mxu0 0.0
        %1491 = vmatpush1.msra.mxu0 0.0
        %1492 = vmatprep.subr.mxu0 0.0
        %1493 = vmatpush1.msra.mxu0 0.0
        %1494 = vmatprep.subr.mxu0 0.0
        %1495 = vmatpush1.msra.mxu0 0.0
        %1496 = vmatprep.subr.mxu0 0.0
        %1497 = vmatpush1.msra.mxu0 0.0
        %1498 = vmatprep.subr.mxu0 0.0
        %1499 = vmatpush1.msra.mxu0 0.0
        %1500 = vmatprep.subr.mxu0 0.0
        %1501 = vmatpush1.msra.mxu0 0.0
        %1502 = vmatprep.subr.mxu0 0.0
        %1503 = vmatpush1.msra.mxu0 0.0
        %1504 = vmatprep.subr.mxu0 0.0
        %1505 = vmatpush1.msra.mxu0 0.0
        %1506 = vmatprep.subr.mxu0 0.0
        %1507 = vmatpush1.msra.mxu0 0.0
        %1508 = vmatprep.subr.mxu0 0.0
        %1509 = vmatpush1.msra.mxu0 0.0
        %1510 = vmatprep.subr.mxu0 0.0
        %1511 = vmatpush1.msra.mxu0 0.0
        %1512 = vmatprep.subr.mxu0 0.0
        %1513 = vmatpush1.msra.mxu0 0.0
        %1514 = vmatprep.subr.mxu0 0.0
        %1515 = vmatpush1.msra.mxu0 0.0
        %1516 = vmatprep.subr.mxu0 0.0
        %1517 = vmatpush1.msra.mxu0 0.0
        %1518 = vmatprep.mubr.f32.mxu0 0.0
        %1519 = vmatmul.mubr.f32.gmra.mrb[0].mxu0 %v1367
        %v1520 = vpop.f32.mrb[0].mxu0
        %v1521 = vadd.f32 0.0, %v1520
        %v1522 = vpop.f32.mrb[0].mxu0
        %1523 = vmatprep.mubr.f32.mxu0 0.0
        %1524 = vmatmul.mubr.f32.gmra.mrb[0].mxu0 %v1370
        %v1525 = vpop.f32.mrb[0].mxu0
        %v1526 = vadd.f32 0.0, %v1525
        %v1527 = vpop.f32.mrb[0].mxu0
        %1528 = vdwg.mxu0
        %v1529 = vadd.f32 %v1353, %v1521
        %v1530 = vadd.f32 %v1358, %v1526
        %v1531 = vld [vmem:[%s810] sm:$0x1]
        %v1533 = vlaneseq
        %v1534 = vshrl.u32 %v1533, 7
        %v1535 = vsub.s32 0, %v1534
        %v1536 = vrot.slane %v1531, %v1535
        %v1538 = vadd.f32 %v1447, %v1536
        %v1539 = vadd.f32 %v1448, %v1536
        %v1540 = vld [vmem:[%s818] sm:$0x1]
        %v1542 = vlaneseq
        %v1543 = vshrl.u32 %v1542, 7
        %v1544 = vsub.s32 0, %v1543
        %v1545 = vrot.slane %v1540, %v1544
        %v1547 = vadd.f32 %v1529, %v1545
        %v1548 = vadd.f32 %v1530, %v1545
        %v1549 = vxor.u32 %v1547, 2147483648
        %v1550 = vxor.u32 %v1548, 2147483648
        %v1551 = vmul.f32 %v1549, 1.442695
        %v1552 = vpow.pop %v1551
        %v1553 = vmul.f32 %v1550, 1.442695
        %v1554 = vpow.pop %v1553
        %v1555 = vadd.f32 %v1552, 1.0
        %v1556 = vadd.f32 %v1554, 1.0
        %v1557 = vrcp.pop %v1555
        %v1558 = vmul.f32 1.0, %v1557
        %v1559 = vrcp.pop %v1556
        %v1560 = vmul.f32 1.0, %v1559
        %v1561 = vmul.f32 %v1538, %v1558
        %v1562 = vmul.f32 %v1539, %v1560
        %v1563 = vld [vmem:[#allocation19] sm:$0xff]
        %v1564 = vld [vmem:[#allocation19 + $0x8] sm:$0xff]
        %v1565 = vld [vmem:[#allocation19 + $0x10] sm:$0xff]
        %v1566 = vld [vmem:[#allocation19 + $0x18] sm:$0xff]
        %v1567 = vld [vmem:[#allocation20] sm:$0x1]
        %v1569 = vlaneseq
        %v1570 = vshrl.u32 %v1569, 7
        %v1571 = vsub.s32 0, %v1570
        %v1572 = vrot.slane %v1567, %v1571
        %v1575 = vsel %vm1043, %v1561, 0
        %v1578 = vsel %vm1043, %v1562, 0
        %1580 = vmatprep.subr.mxu0 0.0
        %1581 = vmatpush1.msra.mxu0 %v1563
        %1582 = vmatprep.subr.mxu0 0.0
        %1583 = vmatpush1.msra.mxu0 %v1564
        %1584 = vmatprep.subr.mxu0 0.0
        %1585 = vmatpush1.msra.mxu0 %v1565
        %1586 = vmatprep.subr.mxu0 0.0
        %1587 = vmatpush1.msra.mxu0 %v1566
        %1588 = vmatprep.subr.mxu0 0.0
        %1589 = vmatpush1.msra.mxu0 0.0
        %1590 = vmatprep.subr.mxu0 0.0
        %1591 = vmatpush1.msra.mxu0 0.0
        %1592 = vmatprep.subr.mxu0 0.0
        %1593 = vmatpush1.msra.mxu0 0.0
        %1594 = vmatprep.subr.mxu0 0.0
        %1595 = vmatpush1.msra.mxu0 0.0
        %1596 = vmatprep.subr.mxu0 0.0
        %1597 = vmatpush1.msra.mxu0 0.0
        %1598 = vmatprep.subr.mxu0 0.0
        %1599 = vmatpush1.msra.mxu0 0.0
        %1600 = vmatprep.subr.mxu0 0.0
        %1601 = vmatpush1.msra.mxu0 0.0
        %1602 = vmatprep.subr.mxu0 0.0
        %1603 = vmatpush1.msra.mxu0 0.0
        %1604 = vmatprep.subr.mxu0 0.0
        %1605 = vmatpush1.msra.mxu0 0.0
        %1606 = vmatprep.subr.mxu0 0.0
        %1607 = vmatpush1.msra.mxu0 0.0
        %1608 = vmatprep.subr.mxu0 0.0
        %1609 = vmatpush1.msra.mxu0 0.0
        %1610 = vmatprep.subr.mxu0 0.0
        %1611 = vmatpush1.msra.mxu0 0.0
        %1612 = vmatprep.subr.mxu0 0.0
        %1613 = vmatpush1.msra.mxu0 0.0
        %1614 = vmatprep.subr.mxu0 0.0
        %1615 = vmatpush1.msra.mxu0 0.0
        %1616 = vmatprep.subr.mxu0 0.0
        %1617 = vmatpush1.msra.mxu0 0.0
        %1618 = vmatprep.subr.mxu0 0.0
        %1619 = vmatpush1.msra.mxu0 0.0
        %1620 = vmatprep.subr.mxu0 0.0
        %1621 = vmatpush1.msra.mxu0 0.0
        %1622 = vmatprep.subr.mxu0 0.0
        %1623 = vmatpush1.msra.mxu0 0.0
        %1624 = vmatprep.subr.mxu0 0.0
        %1625 = vmatpush1.msra.mxu0 0.0
        %1626 = vmatprep.subr.mxu0 0.0
        %1627 = vmatpush1.msra.mxu0 0.0
        %1628 = vmatprep.subr.mxu0 0.0
        %1629 = vmatpush1.msra.mxu0 0.0
        %1630 = vmatprep.subr.mxu0 0.0
        %1631 = vmatpush1.msra.mxu0 0.0
        %1632 = vmatprep.subr.mxu0 0.0
        %1633 = vmatpush1.msra.mxu0 0.0
        %1634 = vmatprep.subr.mxu0 0.0
        %1635 = vmatpush1.msra.mxu0 0.0
        %1636 = vmatprep.subr.mxu0 0.0
        %1637 = vmatpush1.msra.mxu0 0.0
        %1638 = vmatprep.subr.mxu0 0.0
        %1639 = vmatpush1.msra.mxu0 0.0
        %1640 = vmatprep.subr.mxu0 0.0
        %1641 = vmatpush1.msra.mxu0 0.0
        %1642 = vmatprep.subr.mxu0 0.0
        %1643 = vmatpush1.msra.mxu0 0.0
        %1644 = vmatprep.mubr.f32.mxu0 0.0
        %1645 = vmatmul.mubr.f32.gmra.mrb[0].mxu0 %v1575
        %v1646 = vpop.f32.mrb[0].mxu0
        %v1647 = vadd.f32 %v1572, %v1646
        %v1648 = vpop.f32.mrb[0].mxu0
        %1649 = vmatprep.mubr.f32.mxu0 0.0
        %1650 = vmatmul.mubr.f32.gmra.mrb[0].mxu0 %v1578
        %v1651 = vpop.f32.mrb[0].mxu0
        %v1652 = vadd.f32 %v1572, %v1651
        %v1653 = vpop.f32.mrb[0].mxu0
        %1654 = vdwg.mxu0
        %v1655 = vadd.f32 %v1647, %v1022
        %v1656 = vadd.f32 %v1652, %v1023
        %v1657 = vmul.f32 %v1655, 0.5
        %v1658 = vmul.f32 %v1656, 0.5
        %v1659 = vld [vmem:[#allocation7] sm:$0xff]
        %v1660 = vld [vmem:[#allocation7 + $0x8] sm:$0xff]
        %v1661 = vld [vmem:[#allocation7 + $0x10] sm:$0xff]
        %v1662 = vld [vmem:[#allocation7 + $0x18] sm:$0xff]
        %vm1663 = vcmask 130048
        %v1665 = vsel %vm1663, %v1657, 0
        %1667 = vmatprep.subr.mxu0 0.0
        %1668 = vmatpush1.msra.mxu0 %v1659
        %1669 = vmatprep.subr.mxu0 0.0
        %1670 = vmatpush1.msra.mxu0 %v1660
        %1671 = vmatprep.subr.mxu0 0.0
        %1672 = vmatpush1.msra.mxu0 0.0
        %1673 = vmatprep.subr.mxu0 0.0
        %1674 = vmatpush1.msra.mxu0 0.0
        %1675 = vmatprep.subr.mxu0 0.0
        %1676 = vmatpush1.msra.mxu0 0.0
        %1677 = vmatprep.subr.mxu0 0.0
        %1678 = vmatpush1.msra.mxu0 0.0
        %1679 = vmatprep.subr.mxu0 0.0
        %1680 = vmatpush1.msra.mxu0 0.0
        %1681 = vmatprep.subr.mxu0 0.0
        %1682 = vmatpush1.msra.mxu0 0.0
        %1683 = vmatprep.subr.mxu0 0.0
        %1684 = vmatpush1.msra.mxu0 0.0
        %1685 = vmatprep.subr.mxu0 0.0
        %1686 = vmatpush1.msra.mxu0 0.0
        %1687 = vmatprep.subr.mxu0 0.0
        %1688 = vmatpush1.msra.mxu0 0.0
        %1689 = vmatprep.subr.mxu0 0.0
        %1690 = vmatpush1.msra.mxu0 0.0
        %1691 = vmatprep.subr.mxu0 0.0
        %1692 = vmatpush1.msra.mxu0 0.0
        %1693 = vmatprep.subr.mxu0 0.0
        %1694 = vmatpush1.msra.mxu0 0.0
        %1695 = vmatprep.subr.mxu0 0.0
        %1696 = vmatpush1.msra.mxu0 0.0
        %1697 = vmatprep.subr.mxu0 0.0
        %1698 = vmatpush1.msra.mxu0 0.0
        %1699 = vmatprep.subr.mxu0 0.0
        %1700 = vmatpush1.msra.mxu0 0.0
        %1701 = vmatprep.subr.mxu0 0.0
        %1702 = vmatpush1.msra.mxu0 0.0
        %1703 = vmatprep.subr.mxu0 0.0
        %1704 = vmatpush1.msra.mxu0 0.0
        %1705 = vmatprep.subr.mxu0 0.0
        %1706 = vmatpush1.msra.mxu0 0.0
        %1707 = vmatprep.subr.mxu0 0.0
        %1708 = vmatpush1.msra.mxu0 0.0
        %1709 = vmatprep.subr.mxu0 0.0
        %1710 = vmatpush1.msra.mxu0 0.0
        %1711 = vmatprep.subr.mxu0 0.0
        %1712 = vmatpush1.msra.mxu0 0.0
        %1713 = vmatprep.subr.mxu0 0.0
        %1714 = vmatpush1.msra.mxu0 0.0
        %1715 = vmatprep.subr.mxu0 0.0
        %1716 = vmatpush1.msra.mxu0 0.0
        %1717 = vmatprep.subr.mxu0 0.0
        %1718 = vmatpush1.msra.mxu0 0.0
        %1719 = vmatprep.subr.mxu0 0.0
        %1720 = vmatpush1.msra.mxu0 0.0
        %1721 = vmatprep.subr.mxu0 0.0
        %1722 = vmatpush1.msra.mxu0 0.0
        %1723 = vmatprep.subr.mxu0 0.0
        %1724 = vmatpush1.msra.mxu0 0.0
        %1725 = vmatprep.subr.mxu0 0.0
        %1726 = vmatpush1.msra.mxu0 0.0
        %1727 = vmatprep.subr.mxu0 0.0
        %1728 = vmatpush1.msra.mxu0 0.0
        %1729 = vmatprep.subr.mxu0 0.0
        %1730 = vmatpush1.msra.mxu0 0.0
        %1731 = vmatprep.mubr.f32.mxu0 0.0
        %1732 = vmatmul.mubr.f32.gmra.mrb[0].mxu0 %v1665
        %v1733 = vpop.f32.mrb[0].mxu0
        %v1734 = vadd.f32 0.0, %v1733
        %v1735 = vpop.f32.mrb[0].mxu0
        %1736 = vdwg.mxu0
        %v1738 = vsel %vm1663, %v1658, 0
        %1740 = vmatprep.subr.mxu0 0.0
        %1741 = vmatpush1.msra.mxu0 %v1661
        %1742 = vmatprep.subr.mxu0 0.0
        %1743 = vmatpush1.msra.mxu0 %v1662
        %1744 = vmatprep.subr.mxu0 0.0
        %1745 = vmatpush1.msra.mxu0 0.0
        %1746 = vmatprep.subr.mxu0 0.0
        %1747 = vmatpush1.msra.mxu0 0.0
        %1748 = vmatprep.subr.mxu0 0.0
        %1749 = vmatpush1.msra.mxu0 0.0
        %1750 = vmatprep.subr.mxu0 0.0
        %1751 = vmatpush1.msra.mxu0 0.0
        %1752 = vmatprep.subr.mxu0 0.0
        %1753 = vmatpush1.msra.mxu0 0.0
        %1754 = vmatprep.subr.mxu0 0.0
        %1755 = vmatpush1.msra.mxu0 0.0
        %1756 = vmatprep.subr.mxu0 0.0
        %1757 = vmatpush1.msra.mxu0 0.0
        %1758 = vmatprep.subr.mxu0 0.0
        %1759 = vmatpush1.msra.mxu0 0.0
        %1760 = vmatprep.subr.mxu0 0.0
        %1761 = vmatpush1.msra.mxu0 0.0
        %1762 = vmatprep.subr.mxu0 0.0
        %1763 = vmatpush1.msra.mxu0 0.0
        %1764 = vmatprep.subr.mxu0 0.0
        %1765 = vmatpush1.msra.mxu0 0.0
        %1766 = vmatprep.subr.mxu0 0.0
        %1767 = vmatpush1.msra.mxu0 0.0
        %1768 = vmatprep.subr.mxu0 0.0
        %1769 = vmatpush1.msra.mxu0 0.0
        %1770 = vmatprep.subr.mxu0 0.0
        %1771 = vmatpush1.msra.mxu0 0.0
        %1772 = vmatprep.subr.mxu0 0.0
        %1773 = vmatpush1.msra.mxu0 0.0
        %1774 = vmatprep.subr.mxu0 0.0
        %1775 = vmatpush1.msra.mxu0 0.0
        %1776 = vmatprep.subr.mxu0 0.0
        %1777 = vmatpush1.msra.mxu0 0.0
        %1778 = vmatprep.subr.mxu0 0.0
        %1779 = vmatpush1.msra.mxu0 0.0
        %1780 = vmatprep.subr.mxu0 0.0
        %1781 = vmatpush1.msra.mxu0 0.0
        %1782 = vmatprep.subr.mxu0 0.0
        %1783 = vmatpush1.msra.mxu0 0.0
        %1784 = vmatprep.subr.mxu0 0.0
        %1785 = vmatpush1.msra.mxu0 0.0
        %1786 = vmatprep.subr.mxu0 0.0
        %1787 = vmatpush1.msra.mxu0 0.0
        %1788 = vmatprep.subr.mxu0 0.0
        %1789 = vmatpush1.msra.mxu0 0.0
        %1790 = vmatprep.subr.mxu0 0.0
        %1791 = vmatpush1.msra.mxu0 0.0
        %1792 = vmatprep.subr.mxu0 0.0
        %1793 = vmatpush1.msra.mxu0 0.0
        %1794 = vmatprep.subr.mxu0 0.0
        %1795 = vmatpush1.msra.mxu0 0.0
        %1796 = vmatprep.subr.mxu0 0.0
        %1797 = vmatpush1.msra.mxu0 0.0
        %1798 = vmatprep.subr.mxu0 0.0
        %1799 = vmatpush1.msra.mxu0 0.0
        %1800 = vmatprep.subr.mxu0 0.0
        %1801 = vmatpush1.msra.mxu0 0.0
        %1802 = vmatprep.subr.mxu0 0.0
        %1803 = vmatpush1.msra.mxu0 0.0
        %1804 = vmatprep.mubr.f32.mxu0 0.0
        %1805 = vmatmul.mubr.f32.gmra.mrb[0].mxu0 %v1738
        %v1806 = vpop.f32.mrb[0].mxu0
        %v1807 = vadd.f32 0.0, %v1806
        %v1808 = vpop.f32.mrb[0].mxu0
        %1809 = vdwg.mxu0
        %vm1810 = vcmask 64512
        %v1811 = vsel %vm1810, %v1734, -inf
        %1812 = vmax.xlane.f32.xlu0 %v1811
        %v1813 = vpop.xlane.xlu0 %1812
        %v1814 = vsel %vm1810, %v1807, -inf
        %1815 = vmax.xlane.f32.xlu0 %v1814
        %v1816 = vpop.xlane.xlu0 %1815
        %v1817 = vsub.f32 %v1734, %v1813
        %v1818 = vsub.f32 %v1807, %v1816
        %v1819 = vmul.f32 %v1817, 1.442695
        %v1820 = vpow.pop %v1819
        %v1821 = vmul.f32 %v1818, 1.442695
        %v1822 = vpow.pop %v1821
        %v1823 = vsel %vm1810, %v1820, 0.0
        %1824 = vadd.xlane.f32.xlu0 %v1823
        %v1825 = vpop.xlane.xlu0 %1824
        %v1826 = vsel %vm1810, %v1822, 0.0
        %1827 = vadd.xlane.f32.xlu0 %v1826
        %v1828 = vpop.xlane.xlu0 %1827
        %v1829 = vrcp.pop %v1825
        %v1830 = vrcp.pop %v1828
        %v1831 = vmul.f32 %v1825, %v1829
        %v1832 = vmul.f32 %v1828, %v1830
        %v1833 = vsub.f32 2.0, %v1831
        %v1834 = vsub.f32 2.0, %v1832
        %v1835 = vmul.f32 %v1829, %v1833
        %v1836 = vmul.f32 %v1830, %v1834
        %v1837 = vmul.f32 %v1820, %v1835
        %v1838 = vmul.f32 %v1822, %v1836
        %v1839 = vld [vmem:[#allocation9] sm:$0xff]
        %v1840 = vld [vmem:[#allocation9 + $0x8] sm:$0xff]
        %v1842 = vsel %vm1810, %v1837, 0
        %1844 = vmatprep.subr.mxu0 0.0
        %1845 = vmatpush1.msra.mxu0 %v1839
        %1846 = vmatprep.subr.mxu0 0.0
        %1847 = vmatpush1.msra.mxu0 0.0
        %1848 = vmatprep.subr.mxu0 0.0
        %1849 = vmatpush1.msra.mxu0 0.0
        %1850 = vmatprep.subr.mxu0 0.0
        %1851 = vmatpush1.msra.mxu0 0.0
        %1852 = vmatprep.subr.mxu0 0.0
        %1853 = vmatpush1.msra.mxu0 0.0
        %1854 = vmatprep.subr.mxu0 0.0
        %1855 = vmatpush1.msra.mxu0 0.0
        %1856 = vmatprep.subr.mxu0 0.0
        %1857 = vmatpush1.msra.mxu0 0.0
        %1858 = vmatprep.subr.mxu0 0.0
        %1859 = vmatpush1.msra.mxu0 0.0
        %1860 = vmatprep.subr.mxu0 0.0
        %1861 = vmatpush1.msra.mxu0 0.0
        %1862 = vmatprep.subr.mxu0 0.0
        %1863 = vmatpush1.msra.mxu0 0.0
        %1864 = vmatprep.subr.mxu0 0.0
        %1865 = vmatpush1.msra.mxu0 0.0
        %1866 = vmatprep.subr.mxu0 0.0
        %1867 = vmatpush1.msra.mxu0 0.0
        %1868 = vmatprep.subr.mxu0 0.0
        %1869 = vmatpush1.msra.mxu0 0.0
        %1870 = vmatprep.subr.mxu0 0.0
        %1871 = vmatpush1.msra.mxu0 0.0
        %1872 = vmatprep.subr.mxu0 0.0
        %1873 = vmatpush1.msra.mxu0 0.0
        %1874 = vmatprep.subr.mxu0 0.0
        %1875 = vmatpush1.msra.mxu0 0.0
        %1876 = vmatprep.subr.mxu0 0.0
        %1877 = vmatpush1.msra.mxu0 0.0
        %1878 = vmatprep.subr.mxu0 0.0
        %1879 = vmatpush1.msra.mxu0 0.0
        %1880 = vmatprep.subr.mxu0 0.0
        %1881 = vmatpush1.msra.mxu0 0.0
        %1882 = vmatprep.subr.mxu0 0.0
        %1883 = vmatpush1.msra.mxu0 0.0
        %1884 = vmatprep.subr.mxu0 0.0
        %1885 = vmatpush1.msra.mxu0 0.0
        %1886 = vmatprep.subr.mxu0 0.0
        %1887 = vmatpush1.msra.mxu0 0.0
        %1888 = vmatprep.subr.mxu0 0.0
        %1889 = vmatpush1.msra.mxu0 0.0
        %1890 = vmatprep.subr.mxu0 0.0
        %1891 = vmatpush1.msra.mxu0 0.0
        %1892 = vmatprep.subr.mxu0 0.0
        %1893 = vmatpush1.msra.mxu0 0.0
        %1894 = vmatprep.subr.mxu0 0.0
        %1895 = vmatpush1.msra.mxu0 0.0
        %1896 = vmatprep.subr.mxu0 0.0
        %1897 = vmatpush1.msra.mxu0 0.0
        %1898 = vmatprep.subr.mxu0 0.0
        %1899 = vmatpush1.msra.mxu0 0.0
        %1900 = vmatprep.subr.mxu0 0.0
        %1901 = vmatpush1.msra.mxu0 0.0
        %1902 = vmatprep.subr.mxu0 0.0
        %1903 = vmatpush1.msra.mxu0 0.0
        %1904 = vmatprep.subr.mxu0 0.0
        %1905 = vmatpush1.msra.mxu0 0.0
        %1906 = vmatprep.subr.mxu0 0.0
        %1907 = vmatpush1.msra.mxu0 0.0
        %1908 = vmatprep.mubr.f32.mxu0 0.0
        %1909 = vmatmul.mubr.f32.gmra.mrb[0].mxu0 %v1842
        %v1910 = vpop.f32.mrb[0].mxu0
        %v1911 = vadd.f32 0.0, %v1910
        %v1912 = vpop.f32.mrb[0].mxu0
        %1913 = vdwg.mxu0
        %v1915 = vsel %vm1810, %v1838, 0
        %1917 = vmatprep.subr.mxu0 0.0
        %1918 = vmatpush1.msra.mxu0 %v1840
        %1919 = vmatprep.subr.mxu0 0.0
        %1920 = vmatpush1.msra.mxu0 0.0
        %1921 = vmatprep.subr.mxu0 0.0
        %1922 = vmatpush1.msra.mxu0 0.0
        %1923 = vmatprep.subr.mxu0 0.0
        %1924 = vmatpush1.msra.mxu0 0.0
        %1925 = vmatprep.subr.mxu0 0.0
        %1926 = vmatpush1.msra.mxu0 0.0
        %1927 = vmatprep.subr.mxu0 0.0
        %1928 = vmatpush1.msra.mxu0 0.0
        %1929 = vmatprep.subr.mxu0 0.0
        %1930 = vmatpush1.msra.mxu0 0.0
        %1931 = vmatprep.subr.mxu0 0.0
        %1932 = vmatpush1.msra.mxu0 0.0
        %1933 = vmatprep.subr.mxu0 0.0
        %1934 = vmatpush1.msra.mxu0 0.0
        %1935 = vmatprep.subr.mxu0 0.0
        %1936 = vmatpush1.msra.mxu0 0.0
        %1937 = vmatprep.subr.mxu0 0.0
        %1938 = vmatpush1.msra.mxu0 0.0
        %1939 = vmatprep.subr.mxu0 0.0
        %1940 = vmatpush1.msra.mxu0 0.0
        %1941 = vmatprep.subr.mxu0 0.0
        %1942 = vmatpush1.msra.mxu0 0.0
        %1943 = vmatprep.subr.mxu0 0.0
        %1944 = vmatpush1.msra.mxu0 0.0
        %1945 = vmatprep.subr.mxu0 0.0
        %1946 = vmatpush1.msra.mxu0 0.0
        %1947 = vmatprep.subr.mxu0 0.0
        %1948 = vmatpush1.msra.mxu0 0.0
        %1949 = vmatprep.subr.mxu0 0.0
        %1950 = vmatpush1.msra.mxu0 0.0
        %1951 = vmatprep.subr.mxu0 0.0
        %1952 = vmatpush1.msra.mxu0 0.0
        %1953 = vmatprep.subr.mxu0 0.0
        %1954 = vmatpush1.msra.mxu0 0.0
        %1955 = vmatprep.subr.mxu0 0.0
        %1956 = vmatpush1.msra.mxu0 0.0
        %1957 = vmatprep.subr.mxu0 0.0
        %1958 = vmatpush1.msra.mxu0 0.0
        %1959 = vmatprep.subr.mxu0 0.0
        %1960 = vmatpush1.msra.mxu0 0.0
        %1961 = vmatprep.subr.mxu0 0.0
        %1962 = vmatpush1.msra.mxu0 0.0
        %1963 = vmatprep.subr.mxu0 0.0
        %1964 = vmatpush1.msra.mxu0 0.0
        %1965 = vmatprep.subr.mxu0 0.0
        %1966 = vmatpush1.msra.mxu0 0.0
        %1967 = vmatprep.subr.mxu0 0.0
        %1968 = vmatpush1.msra.mxu0 0.0
        %1969 = vmatprep.subr.mxu0 0.0
        %1970 = vmatpush1.msra.mxu0 0.0
        %1971 = vmatprep.subr.mxu0 0.0
        %1972 = vmatpush1.msra.mxu0 0.0
        %1973 = vmatprep.subr.mxu0 0.0
        %1974 = vmatpush1.msra.mxu0 0.0
        %1975 = vmatprep.subr.mxu0 0.0
        %1976 = vmatpush1.msra.mxu0 0.0
        %1977 = vmatprep.subr.mxu0 0.0
        %1978 = vmatpush1.msra.mxu0 0.0
        %1979 = vmatprep.subr.mxu0 0.0
        %1980 = vmatpush1.msra.mxu0 0.0
        %1981 = vmatprep.mubr.f32.mxu0 0.0
        %1982 = vmatmul.mubr.f32.gmra.mrb[0].mxu0 %v1915
        %v1983 = vpop.f32.mrb[0].mxu0
        %v1984 = vadd.f32 0.0, %v1983
        %v1985 = vpop.f32.mrb[0].mxu0
        %1986 = vdwg.mxu0
        %v1987 = vld [vmem:[#allocation21] sm:$0xff]
        %v1988 = vld [vmem:[#allocation21 + $0x8] sm:$0xff]
        %v1989 = vld [vmem:[#allocation22] sm:$0x1]
        %v1991 = vlaneseq
        %v1992 = vshrl.u32 %v1991, 7
        %v1993 = vsub.s32 0, %v1992
        %v1994 = vrot.slane %v1989, %v1993
        %v1997 = vsel %vm1663, %v1911, 0
        %v2000 = vsel %vm1663, %v1984, 0
        %2002 = vmatprep.subr.mxu0 0.0
        %2003 = vmatpush1.msra.mxu0 %v1987
        %2004 = vmatprep.subr.mxu0 0.0
        %2005 = vmatpush1.msra.mxu0 %v1988
        %2006 = vmatprep.subr.mxu0 0.0
        %2007 = vmatpush1.msra.mxu0 0.0
        %2008 = vmatprep.subr.mxu0 0.0
        %2009 = vmatpush1.msra.mxu0 0.0
        %2010 = vmatprep.subr.mxu0 0.0
        %2011 = vmatpush1.msra.mxu0 0.0
        %2012 = vmatprep.subr.mxu0 0.0
        %2013 = vmatpush1.msra.mxu0 0.0
        %2014 = vmatprep.subr.mxu0 0.0
        %2015 = vmatpush1.msra.mxu0 0.0
        %2016 = vmatprep.subr.mxu0 0.0
        %2017 = vmatpush1.msra.mxu0 0.0
        %2018 = vmatprep.subr.mxu0 0.0
        %2019 = vmatpush1.msra.mxu0 0.0
        %2020 = vmatprep.subr.mxu0 0.0
        %2021 = vmatpush1.msra.mxu0 0.0
        %2022 = vmatprep.subr.mxu0 0.0
        %2023 = vmatpush1.msra.mxu0 0.0
        %2024 = vmatprep.subr.mxu0 0.0
        %2025 = vmatpush1.msra.mxu0 0.0
        %2026 = vmatprep.subr.mxu0 0.0
        %2027 = vmatpush1.msra.mxu0 0.0
        %2028 = vmatprep.subr.mxu0 0.0
        %2029 = vmatpush1.msra.mxu0 0.0
        %2030 = vmatprep.subr.mxu0 0.0
        %2031 = vmatpush1.msra.mxu0 0.0
        %2032 = vmatprep.subr.mxu0 0.0
        %2033 = vmatpush1.msra.mxu0 0.0
        %2034 = vmatprep.subr.mxu0 0.0
        %2035 = vmatpush1.msra.mxu0 0.0
        %2036 = vmatprep.subr.mxu0 0.0
        %2037 = vmatpush1.msra.mxu0 0.0
        %2038 = vmatprep.subr.mxu0 0.0
        %2039 = vmatpush1.msra.mxu0 0.0
        %2040 = vmatprep.subr.mxu0 0.0
        %2041 = vmatpush1.msra.mxu0 0.0
        %2042 = vmatprep.subr.mxu0 0.0
        %2043 = vmatpush1.msra.mxu0 0.0
        %2044 = vmatprep.subr.mxu0 0.0
        %2045 = vmatpush1.msra.mxu0 0.0
        %2046 = vmatprep.subr.mxu0 0.0
        %2047 = vmatpush1.msra.mxu0 0.0
        %2048 = vmatprep.subr.mxu0 0.0
        %2049 = vmatpush1.msra.mxu0 0.0
        %2050 = vmatprep.subr.mxu0 0.0
        %2051 = vmatpush1.msra.mxu0 0.0
        %2052 = vmatprep.subr.mxu0 0.0
        %2053 = vmatpush1.msra.mxu0 0.0
        %2054 = vmatprep.subr.mxu0 0.0
        %2055 = vmatpush1.msra.mxu0 0.0
        %2056 = vmatprep.subr.mxu0 0.0
        %2057 = vmatpush1.msra.mxu0 0.0
        %2058 = vmatprep.subr.mxu0 0.0
        %2059 = vmatpush1.msra.mxu0 0.0
        %2060 = vmatprep.subr.mxu0 0.0
        %2061 = vmatpush1.msra.mxu0 0.0
        %2062 = vmatprep.subr.mxu0 0.0
        %2063 = vmatpush1.msra.mxu0 0.0
        %2064 = vmatprep.subr.mxu0 0.0
        %2065 = vmatpush1.msra.mxu0 0.0
        %2066 = vmatprep.mubr.f32.mxu0 0.0
        %2067 = vmatmul.mubr.f32.gmra.mrb[0].mxu0 %v1997
        %v2068 = vpop.f32.mrb[0].mxu0
        %v2069 = vadd.f32 %v1994, %v2068
        %v2070 = vpop.f32.mrb[0].mxu0
        %2071 = vmatprep.mubr.f32.mxu0 0.0
        %2072 = vmatmul.mubr.f32.gmra.mrb[0].mxu0 %v2000
        %v2073 = vpop.f32.mrb[0].mxu0
        %v2074 = vadd.f32 %v1994, %v2073
        %v2075 = vpop.f32.mrb[0].mxu0
        %2076 = vdwg.mxu0
        %v2077 = vadd.f32 %v1561, %v2069
        %v2078 = vadd.f32 %v1562, %v2074
        %v2079 = vmul.f32 %v2077, 0.5
        %v2080 = vmul.f32 %v2078, 0.5
        %v2081 = vadd.f32 %v2079, %v1024
        %v2082 = vadd.f32 %v2080, %v1025
        %v2083 = vmul.f32 %v2081, 0.5
        %v2084 = vmul.f32 %v2082, 0.5
        %2085 = vst.msk [vmem:[#allocation3 + $0x8] sm:$0xff] %vm1043, %v2083
        %2086 = vst.msk [vmem:[#allocation3 + $0x18] sm:$0xff] %vm1043, %v2084
        %p2087 = scmp.eq.s32.totalorder %s42, 1
        // Predicated region
        $region169: #{tpu_custom_call.1} parent=91 // pred_check
          %p2088 = pneg %p2087
        $region170: #{tpu_custom_call.1} parent=91 // pred_check_branch
          %2090 = sbr.rel (%p2088) target = $region172
        $region171: #{tpu_custom_call.1} parent=91 // pred_region
          %v2091 = vld [vmem:[#allocation24] sm:$0xff]
          %v2092 = vld [vmem:[#allocation24 + $0x8] sm:$0xff]
          %v2093 = vld [vmem:[#allocation24 + $0x10] sm:$0xff]
          %v2094 = vld [vmem:[#allocation24 + $0x18] sm:$0xff]
          %v2095 = vld [vmem:[#allocation25] sm:$0x1]
          %v2097 = vlaneseq
          %v2098 = vshrl.u32 %v2097, 7
          %v2099 = vsub.s32 0, %v2098
          %v2100 = vrot.slane %v2095, %v2099
          %v2103 = vsel %vm1043, %v2083, 0
          %v2106 = vsel %vm1043, %v2084, 0
          %2108 = vmatprep.subr.mxu0 0.0
          %2109 = vmatpush1.msra.mxu0 %v2091
          %2110 = vmatprep.subr.mxu0 0.0
          %2111 = vmatpush1.msra.mxu0 %v2092
          %2112 = vmatprep.subr.mxu0 0.0
          %2113 = vmatpush1.msra.mxu0 %v2093
          %2114 = vmatprep.subr.mxu0 0.0
          %2115 = vmatpush1.msra.mxu0 %v2094
          %2116 = vmatprep.subr.mxu0 0.0
          %2117 = vmatpush1.msra.mxu0 0.0
          %2118 = vmatprep.subr.mxu0 0.0
          %2119 = vmatpush1.msra.mxu0 0.0
          %2120 = vmatprep.subr.mxu0 0.0
          %2121 = vmatpush1.msra.mxu0 0.0
          %2122 = vmatprep.subr.mxu0 0.0
          %2123 = vmatpush1.msra.mxu0 0.0
          %2124 = vmatprep.subr.mxu0 0.0
          %2125 = vmatpush1.msra.mxu0 0.0
          %2126 = vmatprep.subr.mxu0 0.0
          %2127 = vmatpush1.msra.mxu0 0.0
          %2128 = vmatprep.subr.mxu0 0.0
          %2129 = vmatpush1.msra.mxu0 0.0
          %2130 = vmatprep.subr.mxu0 0.0
          %2131 = vmatpush1.msra.mxu0 0.0
          %2132 = vmatprep.subr.mxu0 0.0
          %2133 = vmatpush1.msra.mxu0 0.0
          %2134 = vmatprep.subr.mxu0 0.0
          %2135 = vmatpush1.msra.mxu0 0.0
          %2136 = vmatprep.subr.mxu0 0.0
          %2137 = vmatpush1.msra.mxu0 0.0
          %2138 = vmatprep.subr.mxu0 0.0
          %2139 = vmatpush1.msra.mxu0 0.0
          %2140 = vmatprep.subr.mxu0 0.0
          %2141 = vmatpush1.msra.mxu0 0.0
          %2142 = vmatprep.subr.mxu0 0.0
          %2143 = vmatpush1.msra.mxu0 0.0
          %2144 = vmatprep.subr.mxu0 0.0
          %2145 = vmatpush1.msra.mxu0 0.0
          %2146 = vmatprep.subr.mxu0 0.0
          %2147 = vmatpush1.msra.mxu0 0.0
          %2148 = vmatprep.subr.mxu0 0.0
          %2149 = vmatpush1.msra.mxu0 0.0
          %2150 = vmatprep.subr.mxu0 0.0
          %2151 = vmatpush1.msra.mxu0 0.0
          %2152 = vmatprep.subr.mxu0 0.0
          %2153 = vmatpush1.msra.mxu0 0.0
          %2154 = vmatprep.subr.mxu0 0.0
          %2155 = vmatpush1.msra.mxu0 0.0
          %2156 = vmatprep.subr.mxu0 0.0
          %2157 = vmatpush1.msra.mxu0 0.0
          %2158 = vmatprep.subr.mxu0 0.0
          %2159 = vmatpush1.msra.mxu0 0.0
          %2160 = vmatprep.subr.mxu0 0.0
          %2161 = vmatpush1.msra.mxu0 0.0
          %2162 = vmatprep.subr.mxu0 0.0
          %2163 = vmatpush1.msra.mxu0 0.0
          %2164 = vmatprep.subr.mxu0 0.0
          %2165 = vmatpush1.msra.mxu0 0.0
          %2166 = vmatprep.subr.mxu0 0.0
          %2167 = vmatpush1.msra.mxu0 0.0
          %2168 = vmatprep.subr.mxu0 0.0
          %2169 = vmatpush1.msra.mxu0 0.0
          %2170 = vmatprep.subr.mxu0 0.0
          %2171 = vmatpush1.msra.mxu0 0.0
          %2172 = vmatprep.mubr.f32.mxu0 0.0
          %2173 = vmatmul.mubr.f32.gmra.mrb[0].mxu0 %v2103
          %v2174 = vpop.f32.mrb[0].mxu0
          %v2175 = vadd.f32 %v2100, %v2174
          %v2176 = vpop.f32.mrb[0].mxu0
          %2177 = vmatprep.mubr.f32.mxu0 0.0
          %2178 = vmatmul.mubr.f32.gmra.mrb[0].mxu0 %v2106
          %v2179 = vpop.f32.mrb[0].mxu0
          %v2180 = vadd.f32 %v2100, %v2179
          %v2181 = vpop.f32.mrb[0].mxu0
          %2182 = vdwg.mxu0
          %v2183 = vld [vmem:[#allocation27] sm:$0xff]
          %v2184 = vld [vmem:[#allocation27 + $0x8] sm:$0xff]
          %v2185 = vld [vmem:[#allocation28] sm:$0x1]
          %v2187 = vlaneseq
          %v2188 = vshrl.u32 %v2187, 7
          %v2189 = vsub.s32 0, %v2188
          %v2190 = vrot.slane %v2185, %v2189
          %v2193 = vsel %vm1663, %v2175, 0
          %v2196 = vsel %vm1663, %v2180, 0
          %2198 = vmatprep.subr.mxu0 0.0
          %2199 = vmatpush1.msra.mxu0 %v2183
          %2200 = vmatprep.subr.mxu0 0.0
          %2201 = vmatpush1.msra.mxu0 %v2184
          %2202 = vmatprep.subr.mxu0 0.0
          %2203 = vmatpush1.msra.mxu0 0.0
          %2204 = vmatprep.subr.mxu0 0.0
          %2205 = vmatpush1.msra.mxu0 0.0
          %2206 = vmatprep.subr.mxu0 0.0
          %2207 = vmatpush1.msra.mxu0 0.0
          %2208 = vmatprep.subr.mxu0 0.0
          %2209 = vmatpush1.msra.mxu0 0.0
          %2210 = vmatprep.subr.mxu0 0.0
          %2211 = vmatpush1.msra.mxu0 0.0
          %2212 = vmatprep.subr.mxu0 0.0
          %2213 = vmatpush1.msra.mxu0 0.0
          %2214 = vmatprep.subr.mxu0 0.0
          %2215 = vmatpush1.msra.mxu0 0.0
          %2216 = vmatprep.subr.mxu0 0.0
          %2217 = vmatpush1.msra.mxu0 0.0
          %2218 = vmatprep.subr.mxu0 0.0
          %2219 = vmatpush1.msra.mxu0 0.0
          %2220 = vmatprep.subr.mxu0 0.0
          %2221 = vmatpush1.msra.mxu0 0.0
          %2222 = vmatprep.subr.mxu0 0.0
          %2223 = vmatpush1.msra.mxu0 0.0
          %2224 = vmatprep.subr.mxu0 0.0
          %2225 = vmatpush1.msra.mxu0 0.0
          %2226 = vmatprep.subr.mxu0 0.0
          %2227 = vmatpush1.msra.mxu0 0.0
          %2228 = vmatprep.subr.mxu0 0.0
          %2229 = vmatpush1.msra.mxu0 0.0
          %2230 = vmatprep.subr.mxu0 0.0
          %2231 = vmatpush1.msra.mxu0 0.0
          %2232 = vmatprep.subr.mxu0 0.0
          %2233 = vmatpush1.msra.mxu0 0.0
          %2234 = vmatprep.subr.mxu0 0.0
          %2235 = vmatpush1.msra.mxu0 0.0
          %2236 = vmatprep.subr.mxu0 0.0
          %2237 = vmatpush1.msra.mxu0 0.0
          %2238 = vmatprep.subr.mxu0 0.0
          %2239 = vmatpush1.msra.mxu0 0.0
          %2240 = vmatprep.subr.mxu0 0.0
          %2241 = vmatpush1.msra.mxu0 0.0
          %2242 = vmatprep.subr.mxu0 0.0
          %2243 = vmatpush1.msra.mxu0 0.0
          %2244 = vmatprep.subr.mxu0 0.0
          %2245 = vmatpush1.msra.mxu0 0.0
          %2246 = vmatprep.subr.mxu0 0.0
          %2247 = vmatpush1.msra.mxu0 0.0
          %2248 = vmatprep.subr.mxu0 0.0
          %2249 = vmatpush1.msra.mxu0 0.0
          %2250 = vmatprep.subr.mxu0 0.0
          %2251 = vmatpush1.msra.mxu0 0.0
          %2252 = vmatprep.subr.mxu0 0.0
          %2253 = vmatpush1.msra.mxu0 0.0
          %2254 = vmatprep.subr.mxu0 0.0
          %2255 = vmatpush1.msra.mxu0 0.0
          %2256 = vmatprep.subr.mxu0 0.0
          %2257 = vmatpush1.msra.mxu0 0.0
          %2258 = vmatprep.subr.mxu0 0.0
          %2259 = vmatpush1.msra.mxu0 0.0
          %2260 = vmatprep.subr.mxu0 0.0
          %2261 = vmatpush1.msra.mxu0 0.0
          %2262 = vmatprep.mubr.f32.mxu0 0.0
          %2263 = vmatmul.mubr.f32.gmra.mrb[0].mxu0 %v2193
          %v2264 = vpop.f32.mrb[0].mxu0
          %v2265 = vadd.f32 %v2190, %v2264
          %v2266 = vpop.f32.mrb[0].mxu0
          %2267 = vmatprep.mubr.f32.mxu0 0.0
          %2268 = vmatmul.mubr.f32.gmra.mrb[0].mxu0 %v2196
          %v2269 = vpop.f32.mrb[0].mxu0
          %v2270 = vadd.f32 %v2190, %v2269
          %v2271 = vpop.f32.mrb[0].mxu0
          %2272 = vdwg.mxu0
          %2273 = vrot.lane.b32.xlu0 %v1837, 16
          %v2274 = vpop.permute.xlu0 %2273
          %2275 = vrot.lane.b32.xlu0 %v1838, 16
          %v2276 = vpop.permute.xlu0 %2275
          %v2279 = vsel %vm1663, %v2265, %v2274
          %v2280 = vsel %vm1663, %v2270, %v2276
          %vm2281 = vcmask 195584
          %v2282 = vsel %vm2281, %v2279, 0.0
          %v2283 = vsel %vm2281, %v2280, 0.0
          %2284 = vst [vmem:[#allocation30] sm:$0xff] %v2282
          %2285 = vst [vmem:[#allocation30 + $0x8] sm:$0xff] %v2283
        $region172: #{tpu_custom_call.1} parent=91 // pred_fallthru
          _
        // Predicated region
        $region173: #{tpu_custom_call.1} parent=91 // pred_check
          %p2286 = pneg %p480
        $region174: #{tpu_custom_call.1} parent=91 // pred_check_branch
          %2288 = sbr.rel (%p2286) target = $region176
        $region175: #{tpu_custom_call.1} parent=91 // pred_region
          %s2289 = smul.u32 2, %s41
          %s2291 = ssub.s32 256, 256
          %2292 = vsyncadd [#allocation6], %s2291
          %s2293 = smul.addr %s2289, 128
          %s2294 = scalar_lea.hbm %s18, %s2293
          %s2295 = sshll.u32 [#allocation30], 4
          %s2296 = int_to_ptr.vmem [resolvable:$true] %s2295
          %2301 = dma.vmem_to_hbm [thread:$0]  %s2296, 256, %s2294, [#allocation6], 128, 128, 8
        $region176: #{tpu_custom_call.1} parent=91 // pred_fallthru
          _
        // Predicated region
        $region177: #{tpu_custom_call.1} parent=91 // pred_check
          %p2302 = pneg %p480
        $region178: #{tpu_custom_call.1} parent=91 // pred_check_branch
          %2304 = sbr.rel (%p2302) target = $region180
        $region179: #{tpu_custom_call.1} parent=91 // pred_region
          %2305 = dma.done [#allocation6], 256
        $region180: #{tpu_custom_call.1} parent=91 // pred_fallthru
          _
      $region92: #{tpu_custom_call.1} parent=5 // pred_fallthru
        _
      %p2306 = scmp.le.s32.totalorder 2, %s32
      // Predicated region
      $region181: #{tpu_custom_call.1} parent=5 // pred_check
        %p2307 = pneg %p2306
      $region182: #{tpu_custom_call.1} parent=5 // pred_check_branch
        %2309 = sbr.rel (%p2307) target = $region184
      $region183: #{tpu_custom_call.1} parent=5 // pred_region
        %s2310 = ssub.s32 %s32, 2
      $region184: #{tpu_custom_call.1} parent=5 // pred_fallthru
        _
    $region6: #{tpu_custom_call.1} parent=1 // loop_footer
      %s36 = sadd.s32 1, %s32
    $region7: #{tpu_custom_call.1} parent=1 // loop_footer_branch
      %31 = sbr.rel target = $region3
    $region8: #{tpu_custom_call.1} parent=1 // loop_exit
      _
    %2311 = vsyncpa [#allocation5], 1
    %s2312 = scalar_lea.sflag [#allocation5], 1
    %2313 = vsyncpa %s2312, 1
    %2314 = vsyncpa [#allocation8], 1
    %2315 = vsyncpa [#allocation11], 1
    %2316 = vsyncpa [#allocation14], 1
    %2317 = vsyncpa [#allocation23], 1
    %2318 = vsyncpa [#allocation26], 1
    %2319 = vsyncpa [#allocation29], 1
    %2320 = vsyncpa [#allocation6], 1
    %s2321 = scalar_lea.sflag [#allocation6], 1
    %2322 = vsyncpa %s2321, 1

</llo_original>
